<compile_context>
chip_gen: v7x
topology: tpu7x:2x2x1
jax: 0.10.0
libtpu: 0.0.40
codegen_flags: <defaults>
</compile_context>

<pallas_src>
import jax
import jax.numpy as jnp
from jax.experimental import pallas as pl
from jax.experimental.pallas import tpu as pltpu

# ----------------------------- hyper-params (opt.*) -------------------------
CHANNELS = 1      # opt.channels (MNIST)
IMG_SIZE = 32     # opt.img_size
N_CLASSES = 10    # opt.n_classes
CODE_DIM = 2      # opt.code_dim
BN_EPS = 0.8      # nn.BatchNorm2d(out_filters, 0.8) -> second positional arg is eps
HEAD_PAD = 128    # lane-dense padded width of the fused head output (1+10+2 -> 128)

_BLOCK_CFG = [(CHANNELS, 16, False), (16, 32, True), (32, 64, True), (64, 128, True)]


# ----------------------------- Pallas kernels -------------------------------
def _conv_block_kernel(p_ref, w_ref, epi_ref, o_ref):
    """Fused: patches @ W (bf16 MXU, f32 acc) + bias + LeakyReLU(0.2) + BN affine."""
    y = jnp.dot(p_ref[...], w_ref[...], preferred_element_type=jnp.float32)
    y = y + epi_ref[0:1, :]                      # conv bias
    y = jnp.where(y > 0.0, y, 0.2 * y)           # LeakyReLU(0.2); Dropout2d = eval identity
    y = y * epi_ref[1:2, :] + epi_ref[2:3, :]    # folded eval-mode BatchNorm (or identity)
    o_ref[...] = y.astype(o_ref.dtype)


def _block3_heads_kernel(p_ref, w3_ref, epi3_ref, wh_ref, bh_ref, o_ref):
    """Fused: last conv block (2x2 spatial) + all three Linear heads (lane-dense)."""
    w3 = w3_ref[...]
    b3 = epi3_ref[0:1, :]
    s3 = epi3_ref[1:2, :]
    t3 = epi3_ref[2:3, :]
    acc = jnp.zeros(o_ref.shape, jnp.float32)
    for p in range(p_ref.shape[0]):              # 4 spatial positions (p = h*2 + w)
        y = jnp.dot(p_ref[p], w3, preferred_element_type=jnp.float32)
        y = y + b3
        y = jnp.where(y > 0.0, y, 0.2 * y)       # LeakyReLU(0.2); Dropout2d = eval identity
        y = y * s3 + t3                          # folded eval-mode BatchNorm
        acc = acc + jnp.dot(y.astype(jnp.bfloat16), wh_ref[p],
                            preferred_element_type=jnp.float32)
    o_ref[...] = acc + bh_ref[...]


# ----------------------------- glue (plain JAX) ------------------------------
def _pick_tile(m, cap, mult):
    """Largest tile <= cap that divides m and is a multiple of `mult`; else full m."""
    if m <= cap:
        return m
    t = (cap // mult) * mult
    while t >= mult:
        if m % t == 0:
            return t
        t -= mult
    return m


def _im2col_nhwc(x, k=3, stride=2, pad=1):
    """NHWC patch tensor [N, OH, OW, k*k*C] with K ordered (kh, kw, cin)."""
    n, h, w, c = x.shape
    xp = jnp.pad(x, ((0, 0), (pad, pad), (pad, pad), (0, 0)))
    oh = (h + 2 * pad - k) // stride + 1
    ow = (w + 2 * pad - k) // stride + 1
    cols = []
    for kh in range(k):
        for kw in range(k):
            cols.append(xp[:, kh:kh + stride * oh:stride, kw:kw + stride * ow:stride, :])
    patches = jnp.stack(cols, axis=3)                      # [N, OH, OW, 9, C]
    return patches.reshape(n, oh, ow, k * k * c), oh, ow


def _conv_block(x_nhwc, w_mat, epi, *, out_ch):
    """One fused discriminator block on NHWC activations; returns NHWC bf16."""
    n = x_nhwc.shape[0]
    patches, oh, ow = _im2col_nhwc(x_nhwc)
    m, kdim = n * oh * ow, patches.shape[-1]
    patches = patches.reshape(m, kdim)
    tile_m = _pick_tile(m, cap=1024, mult=128)
    cost = pl.CostEstimate(flops=2 * m * kdim * out_ch, transcendentals=0,
                           bytes_accessed=m * kdim * 2 + kdim * out_ch * 2 + m * out_ch * 2)
    out = pl.pallas_call(
        _conv_block_kernel,
        out_shape=jax.ShapeDtypeStruct((m, out_ch), jnp.bfloat16),
        grid=(m // tile_m,),
        in_specs=[
            pl.BlockSpec((tile_m, kdim), lambda i: (i, 0)),
            pl.BlockSpec((kdim, out_ch), lambda i: (0, 0)),
            pl.BlockSpec((3, out_ch), lambda i: (0, 0)),
        ],
        out_specs=pl.BlockSpec((tile_m, out_ch), lambda i: (i, 0)),
        compiler_params=pltpu.CompilerParams(dimension_semantics=("parallel",)),
        cost_estimate=cost,
    )(patches, w_mat, epi)
    return out.reshape(n, oh, ow, out_ch)


def _block3_and_heads(x_nhwc, w3, epi3, wh, bh):
    """Fused last conv block + all three heads; returns lane-dense [N, 128] f32."""
    n = x_nhwc.shape[0]
    patches, oh, ow = _im2col_nhwc(x_nhwc)                 # [N, 2, 2, 576]
    kdim = patches.shape[-1]
    spatial = oh * ow                                      # 4
    patches = patches.reshape(n, spatial, kdim).transpose(1, 0, 2)   # [4, N, 576]
    tile_n = _pick_tile(n, cap=256, mult=16)
    cost = pl.CostEstimate(
        flops=2 * n * spatial * kdim * 128 + 2 * n * spatial * 128 * HEAD_PAD,
        transcendentals=0,
        bytes_accessed=(n * spatial * kdim * 2 + kdim * 128 * 2
                        + spatial * 128 * HEAD_PAD * 2 + n * HEAD_PAD * 4))
    return pl.pallas_call(
        _block3_heads_kernel,
        out_shape=jax.ShapeDtypeStruct((n, HEAD_PAD), jnp.float32),
        grid=(n // tile_n,),
        in_specs=[
            pl.BlockSpec((spatial, tile_n, kdim), lambda i: (0, i, 0)),
            pl.BlockSpec((kdim, 128), lambda i: (0, 0)),
            pl.BlockSpec((3, 128), lambda i: (0, 0)),
            pl.BlockSpec((spatial, 128, HEAD_PAD), lambda i: (0, 0, 0)),
            pl.BlockSpec((1, HEAD_PAD), lambda i: (0, 0)),
        ],
        out_specs=pl.BlockSpec((tile_n, HEAD_PAD), lambda i: (i, 0)),
        compiler_params=pltpu.CompilerParams(dimension_semantics=("parallel",)),
        cost_estimate=cost,
    )(patches, w3, epi3, wh, bh)


# ----------------------------- parameters ------------------------------------
def init_params(key):
    """Deterministic synthetic weights matching the PyTorch module's shapes."""
    ks = jax.random.split(key, 16)
    p = {}
    for idx, (cin, cout, bn) in enumerate(_BLOCK_CFG):
        p[f"conv{idx}_w"] = 0.05 * jax.random.normal(ks[2 * idx], (cout, cin, 3, 3), jnp.float32)
        p[f"conv{idx}_b"] = 0.01 * jax.random.normal(ks[2 * idx + 1], (cout,), jnp.float32)
        if bn:
            # PyTorch fresh-module defaults: gamma=1, beta=0, running_mean=0, running_var=1
            p[f"bn{idx}_gamma"] = jnp.ones((cout,), jnp.float32)
            p[f"bn{idx}_beta"] = jnp.zeros((cout,), jnp.float32)
            p[f"bn{idx}_mean"] = jnp.zeros((cout,), jnp.float32)
            p[f"bn{idx}_var"] = jnp.ones((cout,), jnp.float32)
    ds_size = IMG_SIZE // 2 ** 4
    feat_dim = 128 * ds_size ** 2
    # Head weights stored as [in_features, out_features] with rows in the
    # PyTorch NCHW .view(N, -1) order (i.e. the transpose of nn.Linear.weight).
    p["adv_w"] = 0.05 * jax.random.normal(ks[8], (feat_dim, 1), jnp.float32)
    p["adv_b"] = jnp.zeros((1,), jnp.float32)
    p["aux_w"] = 0.05 * jax.random.normal(ks[9], (feat_dim, N_CLASSES), jnp.float32)
    p["aux_b"] = jnp.zeros((N_CLASSES,), jnp.float32)
    p["lat_w"] = 0.05 * jax.random.normal(ks[10], (feat_dim, CODE_DIM), jnp.float32)
    p["lat_b"] = jnp.zeros((CODE_DIM,), jnp.float32)
    return p


def _prepare_kernel_params(p):
    """One-time re-layout of the PyTorch-shaped params into kernel-ready form."""
    kp = {}
    for idx, (cin, cout, bn) in enumerate(_BLOCK_CFG):
        w = p[f"conv{idx}_w"]                                    # [cout, cin, 3, 3]
        # rows ordered ((kh*3 + kw)*cin + cin_idx) to match NHWC im2col K order
        kp[f"w{idx}"] = w.transpose(2, 3, 1, 0).reshape(9 * cin, cout).astype(jnp.bfloat16)
        bias = p[f"conv{idx}_b"].astype(jnp.float32)
        if bn:
            scale = p[f"bn{idx}_gamma"] / jnp.sqrt(p[f"bn{idx}_var"] + BN_EPS)
            shift = p[f"bn{idx}_beta"] - p[f"bn{idx}_mean"] * scale
        else:
            scale = jnp.ones((cout,), jnp.float32)
            shift = jnp.zeros((cout,), jnp.float32)
        kp[f"epi{idx}"] = jnp.stack([bias, scale, shift], axis=0)   # [3, cout] f32

    # Fused heads: concat (adv | aux | lat) -> [512, 13], pad lanes to 128,
    # then permute rows from NCHW flatten order (c*4 + p) to (p, c) so the
    # kernel can consume the NHWC-ordered block-3 activation directly.
    ds_size = IMG_SIZE // 2 ** 4
    spatial = ds_size * ds_size                                  # 4
    head_dim = 1 + N_CLASSES + CODE_DIM
    w_all = jnp.concatenate([p["adv_w"], p["aux_w"], p["lat_w"]], axis=1)   # [512, 13]
    w_all = jnp.pad(w_all, ((0, 0), (0, HEAD_PAD - head_dim)))              # [512, 128]
    wh = w_all.reshape(128, spatial, HEAD_PAD).transpose(1, 0, 2)           # [4, 128, 128]
    kp["wh"] = wh.astype(jnp.bfloat16)
    b_all = jnp.concatenate([p["adv_b"], p["aux_b"], p["lat_b"]], axis=0)
    kp["bh"] = jnp.pad(b_all, (0, HEAD_PAD - head_dim)).reshape(1, HEAD_PAD).astype(jnp.float32)
    return kp


# ----------------------------- forward ----------------------------------------
@jax.jit
def discriminator_forward(img, params):
    """img: [N, channels, img_size, img_size] float32 (NCHW, like PyTorch)."""
    kp = _prepare_kernel_params(params)
    x = jnp.transpose(img, (0, 2, 3, 1)).astype(jnp.bfloat16)    # NCHW -> NHWC, bf16 MXU operand
    x = _conv_block(x, kp["w0"], kp["epi0"], out_ch=16)
    x = _conv_block(x, kp["w1"], kp["epi1"], out_ch=32)
    x = _conv_block(x, kp["w2"], kp["epi2"], out_ch=64)
    heads = _block3_and_heads(x, kp["w3"], kp["epi3"], kp["wh"], kp["bh"])   # [N, 128] f32
    validity = heads[:, 0:1]
    label = heads[:, 1:1 + N_CLASSES]
    latent_code = heads[:, 1 + N_CLASSES:1 + N_CLASSES + CODE_DIM]
    return validity, label, latent_code


# TODO(synk): training-mode Dropout2d(0.25) masking and BatchNorm batch statistics
# are not modeled (eval-mode forward semantics only).

if __name__ == "__main__":
    key = jax.random.PRNGKey(0)
    k_img, k_params = jax.random.split(key)
    img = jax.random.normal(k_img, (2, CHANNELS, IMG_SIZE, IMG_SIZE), jnp.float32)
    params = init_params(k_params)

    validity, label, latent_code = discriminator_forward(img, params)
    jax.block_until_ready((validity, label, latent_code))

    assert validity.shape == (2, 1)
    assert label.shape == (2, N_CLASSES)
    assert latent_code.shape == (2, CODE_DIM)
    print("KERNEL_OK")
</pallas_src>

<mosaic_0001>
module attributes {stable_mosaic.version = 11 : i64} {
  func.func @_conv_block_kernel(%arg0: i32, %arg1: memref<512x9xbf16, #tpu.memory_space<vmem>>, %arg2: memref<9x16xbf16, #tpu.memory_space<vmem>>, %arg3: memref<3x16xf32, #tpu.memory_space<vmem>>, %arg4: memref<512x16xbf16, #tpu.memory_space<vmem>>) attributes {dimension_semantics = [#tpu.dimension_semantics<parallel>], iteration_bounds = array<i64: 1>, scalar_prefetch = 0 : i64, scratch_operands = 0 : i64, tpu.core_type = #tpu.core_type<tc>, window_params = [{transform_indices = @transform_0, window_bounds = array<i64: 512, 9>}, {pipeline_mode = #tpu.pipeline_mode<synchronous>, transform_indices = @transform_1, window_bounds = array<i64: 9, 16>}, {pipeline_mode = #tpu.pipeline_mode<synchronous>, transform_indices = @transform_2, window_bounds = array<i64: 3, 16>}, {transform_indices = @transform_3, window_bounds = array<i64: 512, 16>}]} {
    %c0 = arith.constant 0 : index
    %c0_0 = arith.constant 0 : index
    %0 = vector.load %arg1[%c0, %c0_0] : memref<512x9xbf16, #tpu.memory_space<vmem>>, vector<512x9xbf16>
    %c0_1 = arith.constant 0 : index
    %c0_2 = arith.constant 0 : index
    %1 = vector.load %arg2[%c0_1, %c0_2] : memref<9x16xbf16, #tpu.memory_space<vmem>>, vector<9x16xbf16>
    %cst = arith.constant dense<0.000000e+00> : vector<512x16xf32>
    %2 = tpu.matmul %0, %1, %cst {dimension_numbers = #tpu.dot_dimension_numbers<[1], [0], [0], [1], [0, 0, 1, 1], [], []>} : vector<512x9xbf16>, vector<9x16xbf16>, vector<512x16xf32> -> vector<512x16xf32>
    %c0_3 = arith.constant 0 : index
    %c0_4 = arith.constant 0 : index
    %3 = vector.load %arg3[%c0_3, %c0_4] : memref<3x16xf32, #tpu.memory_space<vmem>>, vector<1x16xf32>
    %4 = vector.broadcast %3 : vector<1x16xf32> to vector<512x16xf32>
    %5 = arith.addf %2, %4 : vector<512x16xf32>
    %cst_5 = arith.constant 0.000000e+00 : f32
    %6 = vector.broadcast %cst_5 : f32 to vector<512x16xf32>
    %7 = arith.cmpf ogt, %5, %6 : vector<512x16xf32>
    %cst_6 = arith.constant 2.000000e-01 : f32
    %8 = vector.broadcast %cst_6 : f32 to vector<512x16xf32>
    %9 = arith.mulf %8, %5 : vector<512x16xf32>
    %10 = arith.select %7, %5, %9 : vector<512x16xi1>, vector<512x16xf32>
    %c1 = arith.constant 1 : index
    %c0_7 = arith.constant 0 : index
    %11 = vector.load %arg3[%c1, %c0_7] : memref<3x16xf32, #tpu.memory_space<vmem>>, vector<1x16xf32>
    %12 = vector.broadcast %11 : vector<1x16xf32> to vector<512x16xf32>
    %13 = arith.mulf %10, %12 : vector<512x16xf32>
    %c2 = arith.constant 2 : index
    %c0_8 = arith.constant 0 : index
    %14 = vector.load %arg3[%c2, %c0_8] : memref<3x16xf32, #tpu.memory_space<vmem>>, vector<1x16xf32>
    %15 = vector.broadcast %14 : vector<1x16xf32> to vector<512x16xf32>
    %16 = arith.addf %13, %15 : vector<512x16xf32>
    %17 = arith.truncf %16 : vector<512x16xf32> to vector<512x16xbf16>
    %c0_9 = arith.constant 0 : index
    %c0_10 = arith.constant 0 : index
    %18 = vector.load %arg4[%c0_9, %c0_10] : memref<512x16xbf16, #tpu.memory_space<vmem>>, vector<512x16xbf16>
    tpu.vector_store %arg4[%c0_9, %c0_10], %17 {strides = array<i32>} : memref<512x16xbf16, #tpu.memory_space<vmem>>, vector<512x16xbf16>,
    return
  }
  func.func @transform_0(%arg0: i32) -> (i32, i32) {
    %c0_i32 = arith.constant 0 : i32
    %c0_i32_0 = arith.constant 0 : i32
    return %arg0, %c0_i32 : i32, i32
  }
  func.func @transform_1(%arg0: i32) -> (i32, i32) {
    %c0_i32 = arith.constant 0 : i32
    %c0_i32_0 = arith.constant 0 : i32
    %c0_i32_1 = arith.constant 0 : i32
    return %c0_i32, %c0_i32_0 : i32, i32
  }
  func.func @transform_2(%arg0: i32) -> (i32, i32) {
    %c0_i32 = arith.constant 0 : i32
    %c0_i32_0 = arith.constant 0 : i32
    %c0_i32_1 = arith.constant 0 : i32
    return %c0_i32, %c0_i32_0 : i32, i32
  }
  func.func @transform_3(%arg0: i32) -> (i32, i32) {
    %c0_i32 = arith.constant 0 : i32
    %c0_i32_0 = arith.constant 0 : i32
    return %arg0, %c0_i32 : i32, i32
  }
}

module attributes {stable_mosaic.version = 11 : i64} {
  func.func @_conv_block_kernel(%arg0: i32, %arg1: memref<128x144xbf16, #tpu.memory_space<vmem>>, %arg2: memref<144x32xbf16, #tpu.memory_space<vmem>>, %arg3: memref<3x32xf32, #tpu.memory_space<vmem>>, %arg4: memref<128x32xbf16, #tpu.memory_space<vmem>>) attributes {dimension_semantics = [#tpu.dimension_semantics<parallel>], iteration_bounds = array<i64: 1>, scalar_prefetch = 0 : i64, scratch_operands = 0 : i64, tpu.core_type = #tpu.core_type<tc>, window_params = [{transform_indices = @transform_0, window_bounds = array<i64: 128, 144>}, {pipeline_mode = #tpu.pipeline_mode<synchronous>, transform_indices = @transform_1, window_bounds = array<i64: 144, 32>}, {pipeline_mode = #tpu.pipeline_mode<synchronous>, transform_indices = @transform_2, window_bounds = array<i64: 3, 32>}, {transform_indices = @transform_3, window_bounds = array<i64: 128, 32>}]} {
    %c0 = arith.constant 0 : index
    %c0_0 = arith.constant 0 : index
    %0 = vector.load %arg1[%c0, %c0_0] : memref<128x144xbf16, #tpu.memory_space<vmem>>, vector<128x144xbf16>
    %c0_1 = arith.constant 0 : index
    %c0_2 = arith.constant 0 : index
    %1 = vector.load %arg2[%c0_1, %c0_2] : memref<144x32xbf16, #tpu.memory_space<vmem>>, vector<144x32xbf16>
    %cst = arith.constant dense<0.000000e+00> : vector<128x32xf32>
    %2 = tpu.matmul %0, %1, %cst {dimension_numbers = #tpu.dot_dimension_numbers<[1], [0], [0], [1], [0, 0, 1, 1], [], []>} : vector<128x144xbf16>, vector<144x32xbf16>, vector<128x32xf32> -> vector<128x32xf32>
    %c0_3 = arith.constant 0 : index
    %c0_4 = arith.constant 0 : index
    %3 = vector.load %arg3[%c0_3, %c0_4] : memref<3x32xf32, #tpu.memory_space<vmem>>, vector<1x32xf32>
    %4 = vector.broadcast %3 : vector<1x32xf32> to vector<128x32xf32>
    %5 = arith.addf %2, %4 : vector<128x32xf32>
    %cst_5 = arith.constant 0.000000e+00 : f32
    %6 = vector.broadcast %cst_5 : f32 to vector<128x32xf32>
    %7 = arith.cmpf ogt, %5, %6 : vector<128x32xf32>
    %cst_6 = arith.constant 2.000000e-01 : f32
    %8 = vector.broadcast %cst_6 : f32 to vector<128x32xf32>
    %9 = arith.mulf %8, %5 : vector<128x32xf32>
    %10 = arith.select %7, %5, %9 : vector<128x32xi1>, vector<128x32xf32>
    %c1 = arith.constant 1 : index
    %c0_7 = arith.constant 0 : index
    %11 = vector.load %arg3[%c1, %c0_7] : memref<3x32xf32, #tpu.memory_space<vmem>>, vector<1x32xf32>
    %12 = vector.broadcast %11 : vector<1x32xf32> to vector<128x32xf32>
    %13 = arith.mulf %10, %12 : vector<128x32xf32>
    %c2 = arith.constant 2 : index
    %c0_8 = arith.constant 0 : index
    %14 = vector.load %arg3[%c2, %c0_8] : memref<3x32xf32, #tpu.memory_space<vmem>>, vector<1x32xf32>
    %15 = vector.broadcast %14 : vector<1x32xf32> to vector<128x32xf32>
    %16 = arith.addf %13, %15 : vector<128x32xf32>
    %17 = arith.truncf %16 : vector<128x32xf32> to vector<128x32xbf16>
    %c0_9 = arith.constant 0 : index
    %c0_10 = arith.constant 0 : index
    %18 = vector.load %arg4[%c0_9, %c0_10] : memref<128x32xbf16, #tpu.memory_space<vmem>>, vector<128x32xbf16>
    tpu.vector_store %arg4[%c0_9, %c0_10], %17 {strides = array<i32>} : memref<128x32xbf16, #tpu.memory_space<vmem>>, vector<128x32xbf16>,
    return
  }
  func.func @transform_0(%arg0: i32) -> (i32, i32) {
    %c0_i32 = arith.constant 0 : i32
    %c0_i32_0 = arith.constant 0 : i32
    return %arg0, %c0_i32 : i32, i32
  }
  func.func @transform_1(%arg0: i32) -> (i32, i32) {
    %c0_i32 = arith.constant 0 : i32
    %c0_i32_0 = arith.constant 0 : i32
    %c0_i32_1 = arith.constant 0 : i32
    return %c0_i32, %c0_i32_0 : i32, i32
  }
  func.func @transform_2(%arg0: i32) -> (i32, i32) {
    %c0_i32 = arith.constant 0 : i32
    %c0_i32_0 = arith.constant 0 : i32
    %c0_i32_1 = arith.constant 0 : i32
    return %c0_i32, %c0_i32_0 : i32, i32
  }
  func.func @transform_3(%arg0: i32) -> (i32, i32) {
    %c0_i32 = arith.constant 0 : i32
    %c0_i32_0 = arith.constant 0 : i32
    return %arg0, %c0_i32 : i32, i32
  }
}

module attributes {stable_mosaic.version = 11 : i64} {
  func.func @_conv_block_kernel(%arg0: i32, %arg1: memref<32x288xbf16, #tpu.memory_space<vmem>>, %arg2: memref<288x64xbf16, #tpu.memory_space<vmem>>, %arg3: memref<3x64xf32, #tpu.memory_space<vmem>>, %arg4: memref<32x64xbf16, #tpu.memory_space<vmem>>) attributes {dimension_semantics = [#tpu.dimension_semantics<parallel>], iteration_bounds = array<i64: 1>, scalar_prefetch = 0 : i64, scratch_operands = 0 : i64, tpu.core_type = #tpu.core_type<tc>, window_params = [{transform_indices = @transform_0, window_bounds = array<i64: 32, 288>}, {pipeline_mode = #tpu.pipeline_mode<synchronous>, transform_indices = @transform_1, window_bounds = array<i64: 288, 64>}, {pipeline_mode = #tpu.pipeline_mode<synchronous>, transform_indices = @transform_2, window_bounds = array<i64: 3, 64>}, {transform_indices = @transform_3, window_bounds = array<i64: 32, 64>}]} {
    %c0 = arith.constant 0 : index
    %c0_0 = arith.constant 0 : index
    %0 = vector.load %arg1[%c0, %c0_0] : memref<32x288xbf16, #tpu.memory_space<vmem>>, vector<32x288xbf16>
    %c0_1 = arith.constant 0 : index
    %c0_2 = arith.constant 0 : index
    %1 = vector.load %arg2[%c0_1, %c0_2] : memref<288x64xbf16, #tpu.memory_space<vmem>>, vector<288x64xbf16>
    %cst = arith.constant dense<0.000000e+00> : vector<32x64xf32>
    %2 = tpu.matmul %0, %1, %cst {dimension_numbers = #tpu.dot_dimension_numbers<[1], [0], [0], [1], [0, 0, 1, 1], [], []>} : vector<32x288xbf16>, vector<288x64xbf16>, vector<32x64xf32> -> vector<32x64xf32>
    %c0_3 = arith.constant 0 : index
    %c0_4 = arith.constant 0 : index
    %3 = vector.load %arg3[%c0_3, %c0_4] : memref<3x64xf32, #tpu.memory_space<vmem>>, vector<1x64xf32>
    %4 = vector.broadcast %3 : vector<1x64xf32> to vector<32x64xf32>
    %5 = arith.addf %2, %4 : vector<32x64xf32>
    %cst_5 = arith.constant 0.000000e+00 : f32
    %6 = vector.broadcast %cst_5 : f32 to vector<32x64xf32>
    %7 = arith.cmpf ogt, %5, %6 : vector<32x64xf32>
    %cst_6 = arith.constant 2.000000e-01 : f32
    %8 = vector.broadcast %cst_6 : f32 to vector<32x64xf32>
    %9 = arith.mulf %8, %5 : vector<32x64xf32>
    %10 = arith.select %7, %5, %9 : vector<32x64xi1>, vector<32x64xf32>
    %c1 = arith.constant 1 : index
    %c0_7 = arith.constant 0 : index
    %11 = vector.load %arg3[%c1, %c0_7] : memref<3x64xf32, #tpu.memory_space<vmem>>, vector<1x64xf32>
    %12 = vector.broadcast %11 : vector<1x64xf32> to vector<32x64xf32>
    %13 = arith.mulf %10, %12 : vector<32x64xf32>
    %c2 = arith.constant 2 : index
    %c0_8 = arith.constant 0 : index
    %14 = vector.load %arg3[%c2, %c0_8] : memref<3x64xf32, #tpu.memory_space<vmem>>, vector<1x64xf32>
    %15 = vector.broadcast %14 : vector<1x64xf32> to vector<32x64xf32>
    %16 = arith.addf %13, %15 : vector<32x64xf32>
    %17 = arith.truncf %16 : vector<32x64xf32> to vector<32x64xbf16>
    %c0_9 = arith.constant 0 : index
    %c0_10 = arith.constant 0 : index
    %18 = vector.load %arg4[%c0_9, %c0_10] : memref<32x64xbf16, #tpu.memory_space<vmem>>, vector<32x64xbf16>
    tpu.vector_store %arg4[%c0_9, %c0_10], %17 {strides = array<i32>} : memref<32x64xbf16, #tpu.memory_space<vmem>>, vector<32x64xbf16>,
    return
  }
  func.func @transform_0(%arg0: i32) -> (i32, i32) {
    %c0_i32 = arith.constant 0 : i32
    %c0_i32_0 = arith.constant 0 : i32
    return %arg0, %c0_i32 : i32, i32
  }
  func.func @transform_1(%arg0: i32) -> (i32, i32) {
    %c0_i32 = arith.constant 0 : i32
    %c0_i32_0 = arith.constant 0 : i32
    %c0_i32_1 = arith.constant 0 : i32
    return %c0_i32, %c0_i32_0 : i32, i32
  }
  func.func @transform_2(%arg0: i32) -> (i32, i32) {
    %c0_i32 = arith.constant 0 : i32
    %c0_i32_0 = arith.constant 0 : i32
    %c0_i32_1 = arith.constant 0 : i32
    return %c0_i32, %c0_i32_0 : i32, i32
  }
  func.func @transform_3(%arg0: i32) -> (i32, i32) {
    %c0_i32 = arith.constant 0 : i32
    %c0_i32_0 = arith.constant 0 : i32
    return %arg0, %c0_i32 : i32, i32
  }
}

module attributes {stable_mosaic.version = 11 : i64} {
  func.func @_block3_heads_kernel(%arg0: i32, %arg1: memref<4x2x576xbf16, #tpu.memory_space<vmem>>, %arg2: memref<576x128xbf16, #tpu.memory_space<vmem>>, %arg3: memref<3x128xf32, #tpu.memory_space<vmem>>, %arg4: memref<4x128x128xbf16, #tpu.memory_space<vmem>>, %arg5: memref<1x128xf32, #tpu.memory_space<vmem>>, %arg6: memref<2x128xf32, #tpu.memory_space<vmem>>) attributes {dimension_semantics = [#tpu.dimension_semantics<parallel>], iteration_bounds = array<i64: 1>, scalar_prefetch = 0 : i64, scratch_operands = 0 : i64, tpu.core_type = #tpu.core_type<tc>, window_params = [{transform_indices = @transform_0, window_bounds = array<i64: 4, 2, 576>}, {pipeline_mode = #tpu.pipeline_mode<synchronous>, transform_indices = @transform_1, window_bounds = array<i64: 576, 128>}, {pipeline_mode = #tpu.pipeline_mode<synchronous>, transform_indices = @transform_2, window_bounds = array<i64: 3, 128>}, {pipeline_mode = #tpu.pipeline_mode<synchronous>, transform_indices = @transform_3, window_bounds = array<i64: 4, 128, 128>}, {pipeline_mode = #tpu.pipeline_mode<synchronous>, transform_indices = @transform_4, window_bounds = array<i64: 1, 128>}, {transform_indices = @transform_5, window_bounds = array<i64: 2, 128>}]} {
    %c0 = arith.constant 0 : index
    %c0_0 = arith.constant 0 : index
    %0 = vector.load %arg2[%c0, %c0_0] : memref<576x128xbf16, #tpu.memory_space<vmem>>, vector<576x128xbf16>
    %c0_1 = arith.constant 0 : index
    %c0_2 = arith.constant 0 : index
    %1 = vector.load %arg3[%c0_1, %c0_2] : memref<3x128xf32, #tpu.memory_space<vmem>>, vector<1x128xf32>
    %c1 = arith.constant 1 : index
    %c0_3 = arith.constant 0 : index
    %2 = vector.load %arg3[%c1, %c0_3] : memref<3x128xf32, #tpu.memory_space<vmem>>, vector<1x128xf32>
    %c2 = arith.constant 2 : index
    %c0_4 = arith.constant 0 : index
    %3 = vector.load %arg3[%c2, %c0_4] : memref<3x128xf32, #tpu.memory_space<vmem>>, vector<1x128xf32>
    %cst = arith.constant 0.000000e+00 : f32
    %4 = vector.broadcast %cst : f32 to vector<2x128xf32>
    %c0_5 = arith.constant 0 : index
    %c0_6 = arith.constant 0 : index
    %c0_7 = arith.constant 0 : index
    %5 = vector.load %arg1[%c0_5, %c0_6, %c0_7] : memref<4x2x576xbf16, #tpu.memory_space<vmem>>, vector<1x2x576xbf16>
    %6 = vector.shape_cast %5 : vector<1x2x576xbf16> to vector<2x576xbf16>
    %cst_8 = arith.constant dense<0.000000e+00> : vector<2x128xf32>
    %7 = tpu.matmul %6, %0, %cst_8 {dimension_numbers = #tpu.dot_dimension_numbers<[1], [0], [0], [1], [0, 0, 1, 1], [], []>} : vector<2x576xbf16>, vector<576x128xbf16>, vector<2x128xf32> -> vector<2x128xf32>
    %8 = vector.broadcast %1 : vector<1x128xf32> to vector<2x128xf32>
    %9 = arith.addf %7, %8 : vector<2x128xf32>
    %cst_9 = arith.constant 0.000000e+00 : f32
    %10 = vector.broadcast %cst_9 : f32 to vector<2x128xf32>
    %11 = arith.cmpf ogt, %9, %10 : vector<2x128xf32>
    %cst_10 = arith.constant 2.000000e-01 : f32
    %12 = vector.broadcast %cst_10 : f32 to vector<2x128xf32>
    %13 = arith.mulf %12, %9 : vector<2x128xf32>
    %14 = arith.select %11, %9, %13 : vector<2x128xi1>, vector<2x128xf32>
    %15 = vector.broadcast %2 : vector<1x128xf32> to vector<2x128xf32>
    %16 = arith.mulf %14, %15 : vector<2x128xf32>
    %17 = vector.broadcast %3 : vector<1x128xf32> to vector<2x128xf32>
    %18 = arith.addf %16, %17 : vector<2x128xf32>
    %19 = arith.truncf %18 : vector<2x128xf32> to vector<2x128xbf16>
    %c0_11 = arith.constant 0 : index
    %c0_12 = arith.constant 0 : index
    %c0_13 = arith.constant 0 : index
    %20 = vector.load %arg4[%c0_11, %c0_12, %c0_13] : memref<4x128x128xbf16, #tpu.memory_space<vmem>>, vector<1x128x128xbf16>
    %21 = vector.shape_cast %20 : vector<1x128x128xbf16> to vector<128x128xbf16>
    %cst_14 = arith.constant dense<0.000000e+00> : vector<2x128xf32>
    %22 = tpu.matmul %19, %21, %cst_14 {dimension_numbers = #tpu.dot_dimension_numbers<[1], [0], [0], [1], [0, 0, 1, 1], [], []>} : vector<2x128xbf16>, vector<128x128xbf16>, vector<2x128xf32> -> vector<2x128xf32>
    %23 = arith.addf %4, %22 : vector<2x128xf32>
    %c1_15 = arith.constant 1 : index
    %c0_16 = arith.constant 0 : index
    %c0_17 = arith.constant 0 : index
    %24 = vector.load %arg1[%c1_15, %c0_16, %c0_17] : memref<4x2x576xbf16, #tpu.memory_space<vmem>>, vector<1x2x576xbf16>
    %25 = vector.shape_cast %24 : vector<1x2x576xbf16> to vector<2x576xbf16>
    %cst_18 = arith.constant dense<0.000000e+00> : vector<2x128xf32>
    %26 = tpu.matmul %25, %0, %cst_18 {dimension_numbers = #tpu.dot_dimension_numbers<[1], [0], [0], [1], [0, 0, 1, 1], [], []>} : vector<2x576xbf16>, vector<576x128xbf16>, vector<2x128xf32> -> vector<2x128xf32>
    %27 = vector.broadcast %1 : vector<1x128xf32> to vector<2x128xf32>
    %28 = arith.addf %26, %27 : vector<2x128xf32>
    %cst_19 = arith.constant 0.000000e+00 : f32
    %29 = vector.broadcast %cst_19 : f32 to vector<2x128xf32>
    %30 = arith.cmpf ogt, %28, %29 : vector<2x128xf32>
    %cst_20 = arith.constant 2.000000e-01 : f32
    %31 = vector.broadcast %cst_20 : f32 to vector<2x128xf32>
    %32 = arith.mulf %31, %28 : vector<2x128xf32>
    %33 = arith.select %30, %28, %32 : vector<2x128xi1>, vector<2x128xf32>
    %34 = vector.broadcast %2 : vector<1x128xf32> to vector<2x128xf32>
    %35 = arith.mulf %33, %34 : vector<2x128xf32>
    %36 = vector.broadcast %3 : vector<1x128xf32> to vector<2x128xf32>
    %37 = arith.addf %35, %36 : vector<2x128xf32>
    %38 = arith.truncf %37 : vector<2x128xf32> to vector<2x128xbf16>
    %c1_21 = arith.constant 1 : index
    %c0_22 = arith.constant 0 : index
    %c0_23 = arith.constant 0 : index
    %39 = vector.load %arg4[%c1_21, %c0_22, %c0_23] : memref<4x128x128xbf16, #tpu.memory_space<vmem>>, vector<1x128x128xbf16>
    %40 = vector.shape_cast %39 : vector<1x128x128xbf16> to vector<128x128xbf16>
    %cst_24 = arith.constant dense<0.000000e+00> : vector<2x128xf32>
    %41 = tpu.matmul %38, %40, %cst_24 {dimension_numbers = #tpu.dot_dimension_numbers<[1], [0], [0], [1], [0, 0, 1, 1], [], []>} : vector<2x128xbf16>, vector<128x128xbf16>, vector<2x128xf32> -> vector<2x128xf32>
    %42 = arith.addf %23, %41 : vector<2x128xf32>
    %c2_25 = arith.constant 2 : index
    %c0_26 = arith.constant 0 : index
    %c0_27 = arith.constant 0 : index
    %43 = vector.load %arg1[%c2_25, %c0_26, %c0_27] : memref<4x2x576xbf16, #tpu.memory_space<vmem>>, vector<1x2x576xbf16>
    %44 = vector.shape_cast %43 : vector<1x2x576xbf16> to vector<2x576xbf16>
    %cst_28 = arith.constant dense<0.000000e+00> : vector<2x128xf32>
    %45 = tpu.matmul %44, %0, %cst_28 {dimension_numbers = #tpu.dot_dimension_numbers<[1], [0], [0], [1], [0, 0, 1, 1], [], []>} : vector<2x576xbf16>, vector<576x128xbf16>, vector<2x128xf32> -> vector<2x128xf32>
    %46 = vector.broadcast %1 : vector<1x128xf32> to vector<2x128xf32>
    %47 = arith.addf %45, %46 : vector<2x128xf32>
    %cst_29 = arith.constant 0.000000e+00 : f32
    %48 = vector.broadcast %cst_29 : f32 to vector<2x128xf32>
    %49 = arith.cmpf ogt, %47, %48 : vector<2x128xf32>
    %cst_30 = arith.constant 2.000000e-01 : f32
    %50 = vector.broadcast %cst_30 : f32 to vector<2x128xf32>
    %51 = arith.mulf %50, %47 : vector<2x128xf32>
    %52 = arith.select %49, %47, %51 : vector<2x128xi1>, vector<2x128xf32>
    %53 = vector.broadcast %2 : vector<1x128xf32> to vector<2x128xf32>
    %54 = arith.mulf %52, %53 : vector<2x128xf32>
    %55 = vector.broadcast %3 : vector<1x128xf32> to vector<2x128xf32>
    %56 = arith.addf %54, %55 : vector<2x128xf32>
    %57 = arith.truncf %56 : vector<2x128xf32> to vector<2x128xbf16>
    %c2_31 = arith.constant 2 : index
    %c0_32 = arith.constant 0 : index
    %c0_33 = arith.constant 0 : index
    %58 = vector.load %arg4[%c2_31, %c0_32, %c0_33] : memref<4x128x128xbf16, #tpu.memory_space<vmem>>, vector<1x128x128xbf16>
    %59 = vector.shape_cast %58 : vector<1x128x128xbf16> to vector<128x128xbf16>
    %cst_34 = arith.constant dense<0.000000e+00> : vector<2x128xf32>
    %60 = tpu.matmul %57, %59, %cst_34 {dimension_numbers = #tpu.dot_dimension_numbers<[1], [0], [0], [1], [0, 0, 1, 1], [], []>} : vector<2x128xbf16>, vector<128x128xbf16>, vector<2x128xf32> -> vector<2x128xf32>
    %61 = arith.addf %42, %60 : vector<2x128xf32>
    %c3 = arith.constant 3 : index
    %c0_35 = arith.constant 0 : index
    %c0_36 = arith.constant 0 : index
    %62 = vector.load %arg1[%c3, %c0_35, %c0_36] : memref<4x2x576xbf16, #tpu.memory_space<vmem>>, vector<1x2x576xbf16>
    %63 = vector.shape_cast %62 : vector<1x2x576xbf16> to vector<2x576xbf16>
    %cst_37 = arith.constant dense<0.000000e+00> : vector<2x128xf32>
    %64 = tpu.matmul %63, %0, %cst_37 {dimension_numbers = #tpu.dot_dimension_numbers<[1], [0], [0], [1], [0, 0, 1, 1], [], []>} : vector<2x576xbf16>, vector<576x128xbf16>, vector<2x128xf32> -> vector<2x128xf32>
    %65 = vector.broadcast %1 : vector<1x128xf32> to vector<2x128xf32>
    %66 = arith.addf %64, %65 : vector<2x128xf32>
    %cst_38 = arith.constant 0.000000e+00 : f32
    %67 = vector.broadcast %cst_38 : f32 to vector<2x128xf32>
    %68 = arith.cmpf ogt, %66, %67 : vector<2x128xf32>
    %cst_39 = arith.constant 2.000000e-01 : f32
    %69 = vector.broadcast %cst_39 : f32 to vector<2x128xf32>
    %70 = arith.mulf %69, %66 : vector<2x128xf32>
    %71 = arith.select %68, %66, %70 : vector<2x128xi1>, vector<2x128xf32>
    %72 = vector.broadcast %2 : vector<1x128xf32> to vector<2x128xf32>
    %73 = arith.mulf %71, %72 : vector<2x128xf32>
    %74 = vector.broadcast %3 : vector<1x128xf32> to vector<2x128xf32>
    %75 = arith.addf %73, %74 : vector<2x128xf32>
    %76 = arith.truncf %75 : vector<2x128xf32> to vector<2x128xbf16>
    %c3_40 = arith.constant 3 : index
    %c0_41 = arith.constant 0 : index
    %c0_42 = arith.constant 0 : index
    %77 = vector.load %arg4[%c3_40, %c0_41, %c0_42] : memref<4x128x128xbf16, #tpu.memory_space<vmem>>, vector<1x128x128xbf16>
    %78 = vector.shape_cast %77 : vector<1x128x128xbf16> to vector<128x128xbf16>
    %cst_43 = arith.constant dense<0.000000e+00> : vector<2x128xf32>
    %79 = tpu.matmul %76, %78, %cst_43 {dimension_numbers = #tpu.dot_dimension_numbers<[1], [0], [0], [1], [0, 0, 1, 1], [], []>} : vector<2x128xbf16>, vector<128x128xbf16>, vector<2x128xf32> -> vector<2x128xf32>
    %80 = arith.addf %61, %79 : vector<2x128xf32>
    %c0_44 = arith.constant 0 : index
    %c0_45 = arith.constant 0 : index
    %81 = vector.load %arg5[%c0_44, %c0_45] : memref<1x128xf32, #tpu.memory_space<vmem>>, vector<1x128xf32>
    %82 = vector.broadcast %81 : vector<1x128xf32> to vector<2x128xf32>
    %83 = arith.addf %80, %82 : vector<2x128xf32>
    %c0_46 = arith.constant 0 : index
    %c0_47 = arith.constant 0 : index
    %84 = vector.load %arg6[%c0_46, %c0_47] : memref<2x128xf32, #tpu.memory_space<vmem>>, vector<2x128xf32>
    tpu.vector_store %arg6[%c0_46, %c0_47], %83 {strides = array<i32>} : memref<2x128xf32, #tpu.memory_space<vmem>>, vector<2x128xf32>,
    return
  }
  func.func @transform_0(%arg0: i32) -> (i32, i32, i32) {
    %c0_i32 = arith.constant 0 : i32
    %c0_i32_0 = arith.constant 0 : i32
    %c0_i32_1 = arith.constant 0 : i32
    return %c0_i32, %arg0, %c0_i32_0 : i32, i32, i32
  }
  func.func @transform_1(%arg0: i32) -> (i32, i32) {
    %c0_i32 = arith.constant 0 : i32
    %c0_i32_0 = arith.constant 0 : i32
    %c0_i32_1 = arith.constant 0 : i32
    return %c0_i32, %c0_i32_0 : i32, i32
  }
  func.func @transform_2(%arg0: i32) -> (i32, i32) {
    %c0_i32 = arith.constant 0 : i32
    %c0_i32_0 = arith.constant 0 : i32
    %c0_i32_1 = arith.constant 0 : i32
    return %c0_i32, %c0_i32_0 : i32, i32
  }
  func.func @transform_3(%arg0: i32) -> (i32, i32, i32) {
    %c0_i32 = arith.constant 0 : i32
    %c0_i32_0 = arith.constant 0 : i32
    %c0_i32_1 = arith.constant 0 : i32
    %c0_i32_2 = arith.constant 0 : i32
    return %c0_i32, %c0_i32_0, %c0_i32_1 : i32, i32, i32
  }
  func.func @transform_4(%arg0: i32) -> (i32, i32) {
    %c0_i32 = arith.constant 0 : i32
    %c0_i32_0 = arith.constant 0 : i32
    %c0_i32_1 = arith.constant 0 : i32
    return %c0_i32, %c0_i32_0 : i32, i32
  }
  func.func @transform_5(%arg0: i32) -> (i32, i32) {
    %c0_i32 = arith.constant 0 : i32
    %c0_i32_0 = arith.constant 0 : i32
    return %arg0, %c0_i32 : i32, i32
  }
}

</mosaic_0001>

<llo_original>
// kernel: discriminator_forward.4
$region0: #{discriminator_forward.4}
  #allocation0 [shape = 'u32[]', space=smem, size = 0x4, offset = 0x4, fixed_abs, tag = 'smem constant byte address 0x4 - core index']
  #allocation1 [shape = 'u32[144,128]{1,0:T(1,128)}', space=vmem, size = 0x12000, scoped, tag = 'internal scratch']
  %s0 = inlined_call_operand.vmem [shape: bf16[512,9], index: 0, kind: input, shape index: {}]
  %s1 = inlined_call_operand.vmem [shape: bf16[9,16], index: 1, kind: input, shape index: {}]
  %s2 = inlined_call_operand.vmem [shape: f32[3,16], index: 2, kind: input, shape index: {}]
  %s3 = inlined_call_operand.vmem [shape: bf16[512,16], index: 3, kind: output, shape index: {}]
  %s4 = sld [smem:[#allocation0]]
  $region22: #{discriminator_forward.4} parent=0
    _
  %s6 = ssub.s32 1, %s4
  %s7 = scalar_select 0, %s6, %s4
  // Predicated region
  $region2: #{discriminator_forward.4} parent=0 // pred_check
    _
  $region3: #{discriminator_forward.4} parent=0 // pred_check_branch
    %9 = sbr.rel (0) target = $region5
  $region4: #{discriminator_forward.4} parent=0 // pred_region
    _
  $region5: #{discriminator_forward.4} parent=0 // pred_fallthru
    _
  // Predicated region
  $region6: #{discriminator_forward.4} parent=0 // pred_check
    _
  $region7: #{discriminator_forward.4} parent=0 // pred_check_branch
    %11 = sbr.rel (0) target = $region9
  $region8: #{discriminator_forward.4} parent=0 // pred_region
    _
  $region9: #{discriminator_forward.4} parent=0 // pred_fallthru
    _
  // Predicated region
  $region10: #{discriminator_forward.4} parent=0 // pred_check
    _
  $region11: #{discriminator_forward.4} parent=0 // pred_check_branch
    %13 = sbr.rel (0) target = $region13
  $region12: #{discriminator_forward.4} parent=0 // pred_region
    _
  $region13: #{discriminator_forward.4} parent=0 // pred_fallthru
    _
  %v15 = vld [vmem:[%s0] sm:$0xf]
  %v16 = vld [vmem:[%s0 + $0x4] sm:$0xf]
  %v17 = vld [vmem:[%s0 + $0x8] sm:$0xf]
  %v18 = vld [vmem:[%s0 + $0xc] sm:$0xf]
  %v19 = vld [vmem:[%s0 + $0x10] sm:$0xf]
  %v20 = vld [vmem:[%s0 + $0x14] sm:$0xf]
  %v21 = vld [vmem:[%s0 + $0x18] sm:$0xf]
  %v22 = vld [vmem:[%s0 + $0x1c] sm:$0xf]
  %v23 = vld [vmem:[%s0 + $0x20] sm:$0xf]
  %v24 = vld [vmem:[%s0 + $0x24] sm:$0xf]
  %v25 = vld [vmem:[%s0 + $0x28] sm:$0xf]
  %v26 = vld [vmem:[%s0 + $0x2c] sm:$0xf]
  %v27 = vld [vmem:[%s0 + $0x30] sm:$0xf]
  %v28 = vld [vmem:[%s0 + $0x34] sm:$0xf]
  %v29 = vld [vmem:[%s0 + $0x38] sm:$0xf]
  %v30 = vld [vmem:[%s0 + $0x3c] sm:$0xf]
  %v31 = vld [vmem:[%s0 + $0x40] sm:$0xf]
  %v32 = vld [vmem:[%s0 + $0x44] sm:$0xf]
  %v33 = vld [vmem:[%s0 + $0x48] sm:$0xf]
  %v34 = vld [vmem:[%s0 + $0x4c] sm:$0xf]
  %v35 = vld [vmem:[%s0 + $0x50] sm:$0xf]
  %v36 = vld [vmem:[%s0 + $0x54] sm:$0xf]
  %v37 = vld [vmem:[%s0 + $0x58] sm:$0xf]
  %v38 = vld [vmem:[%s0 + $0x5c] sm:$0xf]
  %v39 = vld [vmem:[%s0 + $0x60] sm:$0xf]
  %v40 = vld [vmem:[%s0 + $0x64] sm:$0xf]
  %v41 = vld [vmem:[%s0 + $0x68] sm:$0xf]
  %v42 = vld [vmem:[%s0 + $0x6c] sm:$0xf]
  %v43 = vld [vmem:[%s0 + $0x70] sm:$0xf]
  %v44 = vld [vmem:[%s0 + $0x74] sm:$0xf]
  %v45 = vld [vmem:[%s0 + $0x78] sm:$0xf]
  %v46 = vld [vmem:[%s0 + $0x7c] sm:$0xf]
  %v47 = vld [vmem:[%s0 + $0x80] sm:$0xf]
  %v48 = vld [vmem:[%s0 + $0x84] sm:$0xf]
  %v49 = vld [vmem:[%s0 + $0x88] sm:$0xf]
  %v50 = vld [vmem:[%s0 + $0x8c] sm:$0xf]
  %v51 = vld [vmem:[%s0 + $0x90] sm:$0xf]
  %v52 = vld [vmem:[%s0 + $0x94] sm:$0xf]
  %v53 = vld [vmem:[%s0 + $0x98] sm:$0xf]
  %v54 = vld [vmem:[%s0 + $0x9c] sm:$0xf]
  %v55 = vld [vmem:[%s0 + $0xa0] sm:$0xf]
  %v56 = vld [vmem:[%s0 + $0xa4] sm:$0xf]
  %v57 = vld [vmem:[%s0 + $0xa8] sm:$0xf]
  %v58 = vld [vmem:[%s0 + $0xac] sm:$0xf]
  %v59 = vld [vmem:[%s0 + $0xb0] sm:$0xf]
  %v60 = vld [vmem:[%s0 + $0xb4] sm:$0xf]
  %v61 = vld [vmem:[%s0 + $0xb8] sm:$0xf]
  %v62 = vld [vmem:[%s0 + $0xbc] sm:$0xf]
  %v63 = vld [vmem:[%s0 + $0xc0] sm:$0xf]
  %v64 = vld [vmem:[%s0 + $0xc4] sm:$0xf]
  %v65 = vld [vmem:[%s0 + $0xc8] sm:$0xf]
  %v66 = vld [vmem:[%s0 + $0xcc] sm:$0xf]
  %v67 = vld [vmem:[%s0 + $0xd0] sm:$0xf]
  %v68 = vld [vmem:[%s0 + $0xd4] sm:$0xf]
  %v69 = vld [vmem:[%s0 + $0xd8] sm:$0xf]
  %v70 = vld [vmem:[%s0 + $0xdc] sm:$0xf]
  %v71 = vld [vmem:[%s0 + $0xe0] sm:$0xf]
  %v72 = vld [vmem:[%s0 + $0xe4] sm:$0xf]
  %v73 = vld [vmem:[%s0 + $0xe8] sm:$0xf]
  %v74 = vld [vmem:[%s0 + $0xec] sm:$0xf]
  %v75 = vld [vmem:[%s0 + $0xf0] sm:$0xf]
  %v76 = vld [vmem:[%s0 + $0xf4] sm:$0xf]
  %v77 = vld [vmem:[%s0 + $0xf8] sm:$0xf]
  %v78 = vld [vmem:[%s0 + $0xfc] sm:$0xf]
  %v79 = vld [vmem:[%s1] sm:$0xf]
  %v80 = vld [vmem:[%s1 + $0x4] sm:$0x1]
  %v81 = vld [vmem:[%s2] sm:$0x1]
  %v82 = vlaneseq
  %v83 = vshrl.u32 %v82, 7
  %v84 = vsub.s32 0, %v83
  %v85 = vrot.slane %v81, %v84
  %v150 = vunpack.c.l.b16 %v15
  %v151 = vunpack.c.l.b16 %v16
  %v152 = vunpack.c.l.b16 %v17
  %v153 = vunpack.c.l.b16 %v18
  %v154 = vunpack.c.l.b16 %v19
  %v155 = vunpack.c.l.b16 %v20
  %v156 = vunpack.c.l.b16 %v21
  %v157 = vunpack.c.l.b16 %v22
  %v158 = vunpack.c.l.b16 %v23
  %v159 = vunpack.c.l.b16 %v24
  %v160 = vunpack.c.l.b16 %v25
  %v161 = vunpack.c.l.b16 %v26
  %v162 = vunpack.c.l.b16 %v27
  %v163 = vunpack.c.l.b16 %v28
  %v164 = vunpack.c.l.b16 %v29
  %v165 = vunpack.c.l.b16 %v30
  %v166 = vunpack.c.l.b16 %v31
  %v167 = vunpack.c.l.b16 %v32
  %v168 = vunpack.c.l.b16 %v33
  %v169 = vunpack.c.l.b16 %v34
  %v170 = vunpack.c.l.b16 %v35
  %v171 = vunpack.c.l.b16 %v36
  %v172 = vunpack.c.l.b16 %v37
  %v173 = vunpack.c.l.b16 %v38
  %v174 = vunpack.c.l.b16 %v39
  %v175 = vunpack.c.l.b16 %v40
  %v176 = vunpack.c.l.b16 %v41
  %v177 = vunpack.c.l.b16 %v42
  %v178 = vunpack.c.l.b16 %v43
  %v179 = vunpack.c.l.b16 %v44
  %v180 = vunpack.c.l.b16 %v45
  %v181 = vunpack.c.l.b16 %v46
  %v182 = vunpack.c.l.b16 %v47
  %v183 = vunpack.c.l.b16 %v48
  %v184 = vunpack.c.l.b16 %v49
  %v185 = vunpack.c.l.b16 %v50
  %v186 = vunpack.c.l.b16 %v51
  %v187 = vunpack.c.l.b16 %v52
  %v188 = vunpack.c.l.b16 %v53
  %v189 = vunpack.c.l.b16 %v54
  %v190 = vunpack.c.l.b16 %v55
  %v191 = vunpack.c.l.b16 %v56
  %v192 = vunpack.c.l.b16 %v57
  %v193 = vunpack.c.l.b16 %v58
  %v194 = vunpack.c.l.b16 %v59
  %v195 = vunpack.c.l.b16 %v60
  %v196 = vunpack.c.l.b16 %v61
  %v197 = vunpack.c.l.b16 %v62
  %v198 = vunpack.c.l.b16 %v63
  %v199 = vunpack.c.l.b16 %v64
  %v200 = vunpack.c.l.b16 %v65
  %v201 = vunpack.c.l.b16 %v66
  %v202 = vunpack.c.l.b16 %v67
  %v203 = vunpack.c.l.b16 %v68
  %v204 = vunpack.c.l.b16 %v69
  %v205 = vunpack.c.l.b16 %v70
  %v206 = vunpack.c.l.b16 %v71
  %v207 = vunpack.c.l.b16 %v72
  %v208 = vunpack.c.l.b16 %v73
  %v209 = vunpack.c.l.b16 %v74
  %v210 = vunpack.c.l.b16 %v75
  %v211 = vunpack.c.l.b16 %v76
  %v212 = vunpack.c.l.b16 %v77
  %v213 = vunpack.c.l.b16 %v78
  %v214 = vpack.c.b16 %v151, %v150
  %v215 = vpack.c.b16 %v153, %v152
  %v216 = vpack.c.b16 %v155, %v154
  %v217 = vpack.c.b16 %v157, %v156
  %v218 = vpack.c.b16 %v159, %v158
  %v219 = vpack.c.b16 %v161, %v160
  %v220 = vpack.c.b16 %v163, %v162
  %v221 = vpack.c.b16 %v165, %v164
  %v222 = vpack.c.b16 %v167, %v166
  %v223 = vpack.c.b16 %v169, %v168
  %v224 = vpack.c.b16 %v171, %v170
  %v225 = vpack.c.b16 %v173, %v172
  %v226 = vpack.c.b16 %v175, %v174
  %v227 = vpack.c.b16 %v177, %v176
  %v228 = vpack.c.b16 %v179, %v178
  %v229 = vpack.c.b16 %v181, %v180
  %v230 = vpack.c.b16 %v183, %v182
  %v231 = vpack.c.b16 %v185, %v184
  %v232 = vpack.c.b16 %v187, %v186
  %v233 = vpack.c.b16 %v189, %v188
  %v234 = vpack.c.b16 %v191, %v190
  %v235 = vpack.c.b16 %v193, %v192
  %v236 = vpack.c.b16 %v195, %v194
  %v237 = vpack.c.b16 %v197, %v196
  %v238 = vpack.c.b16 %v199, %v198
  %v239 = vpack.c.b16 %v201, %v200
  %v240 = vpack.c.b16 %v203, %v202
  %v241 = vpack.c.b16 %v205, %v204
  %v242 = vpack.c.b16 %v207, %v206
  %v243 = vpack.c.b16 %v209, %v208
  %v244 = vpack.c.b16 %v211, %v210
  %v245 = vpack.c.b16 %v213, %v212
  %v248 = vunpack.c.l.b16 %v79
  %v249 = vunpack.c.l.b16 %v80
  %v250 = vpack.c.b16 %v249, %v248
  %vm251 = vcmask 72704
  %v253 = vsel %vm251, %v214, 0
  %v256 = vsel %vm251, %v215, 0
  %v259 = vsel %vm251, %v216, 0
  %v262 = vsel %vm251, %v217, 0
  %v265 = vsel %vm251, %v218, 0
  %v268 = vsel %vm251, %v219, 0
  %v271 = vsel %vm251, %v220, 0
  %v274 = vsel %vm251, %v221, 0
  %v277 = vsel %vm251, %v222, 0
  %v280 = vsel %vm251, %v223, 0
  %v283 = vsel %vm251, %v224, 0
  %v286 = vsel %vm251, %v225, 0
  %v289 = vsel %vm251, %v226, 0
  %v292 = vsel %vm251, %v227, 0
  %v295 = vsel %vm251, %v228, 0
  %v298 = vsel %vm251, %v229, 0
  %v301 = vsel %vm251, %v230, 0
  %v304 = vsel %vm251, %v231, 0
  %v307 = vsel %vm251, %v232, 0
  %v310 = vsel %vm251, %v233, 0
  %v313 = vsel %vm251, %v234, 0
  %v316 = vsel %vm251, %v235, 0
  %v319 = vsel %vm251, %v236, 0
  %v322 = vsel %vm251, %v237, 0
  %v325 = vsel %vm251, %v238, 0
  %v328 = vsel %vm251, %v239, 0
  %v331 = vsel %vm251, %v240, 0
  %v334 = vsel %vm251, %v241, 0
  %v337 = vsel %vm251, %v242, 0
  %v340 = vsel %vm251, %v243, 0
  %v343 = vsel %vm251, %v244, 0
  %v346 = vsel %vm251, %v245, 0
  %vm348 = vcmask 1043456
  %vm349 = vcmask 1044480
  %v350 = vsel %vm348, 4294967295, 65535
  %v351 = vsel %vm349, %v350, 0
  %v353 = vand.u32 %v250, %v351
  %355 = vmatprep.subr.bf16.mxu0 0
  %356 = vmatpush1.bf16.msra.mxu0 %v353
  %357 = vmatprep.subr.bf16.mxu0 0
  %358 = vmatpush1.bf16.msra.mxu0 0
  %359 = vmatprep.subr.bf16.mxu0 0
  %360 = vmatpush1.bf16.msra.mxu0 0
  %361 = vmatprep.subr.bf16.mxu0 0
  %362 = vmatpush1.bf16.msra.mxu0 0
  %363 = vmatprep.subr.bf16.mxu0 0
  %364 = vmatpush1.bf16.msra.mxu0 0
  %365 = vmatprep.subr.bf16.mxu0 0
  %366 = vmatpush1.bf16.msra.mxu0 0
  %367 = vmatprep.subr.bf16.mxu0 0
  %368 = vmatpush1.bf16.msra.mxu0 0
  %369 = vmatprep.subr.bf16.mxu0 0
  %370 = vmatpush1.bf16.msra.mxu0 0
  %371 = vmatprep.subr.bf16.mxu0 0
  %372 = vmatpush1.bf16.msra.mxu0 0
  %373 = vmatprep.subr.bf16.mxu0 0
  %374 = vmatpush1.bf16.msra.mxu0 0
  %375 = vmatprep.subr.bf16.mxu0 0
  %376 = vmatpush1.bf16.msra.mxu0 0
  %377 = vmatprep.subr.bf16.mxu0 0
  %378 = vmatpush1.bf16.msra.mxu0 0
  %379 = vmatprep.subr.bf16.mxu0 0
  %380 = vmatpush1.bf16.msra.mxu0 0
  %381 = vmatprep.subr.bf16.mxu0 0
  %382 = vmatpush1.bf16.msra.mxu0 0
  %383 = vmatprep.subr.bf16.mxu0 0
  %384 = vmatpush1.bf16.msra.mxu0 0
  %385 = vmatprep.subr.bf16.mxu0 0
  %386 = vmatpush1.bf16.msra.mxu0 0
  %387 = vmatprep.mubr.bf16.mxu0 0
  %388 = vmatmul.mubr.bf16.gmra.mrb[0].mxu0 %v253
  %v389 = vpop.f32.mrb[0].mxu0
  %v390 = vadd.f32 %v85, %v389
  %v391 = vpop.f32.mrb[0].mxu0
  %v392 = vpop.f32.mrb[0].mxu0
  %v393 = vadd.f32 %v85, %v392
  %v394 = vpop.f32.mrb[0].mxu0
  %395 = vmatprep.mubr.bf16.mxu0 0
  %396 = vmatmul.mubr.bf16.gmra.mrb[0].mxu0 %v256
  %v397 = vpop.f32.mrb[0].mxu0
  %v398 = vadd.f32 %v85, %v397
  %v399 = vpop.f32.mrb[0].mxu0
  %v400 = vpop.f32.mrb[0].mxu0
  %v401 = vadd.f32 %v85, %v400
  %v402 = vpop.f32.mrb[0].mxu0
  %403 = vmatprep.mubr.bf16.mxu0 0
  %404 = vmatmul.mubr.bf16.gmra.mrb[0].mxu0 %v259
  %v405 = vpop.f32.mrb[0].mxu0
  %v406 = vadd.f32 %v85, %v405
  %v407 = vpop.f32.mrb[0].mxu0
  %v408 = vpop.f32.mrb[0].mxu0
  %v409 = vadd.f32 %v85, %v408
  %v410 = vpop.f32.mrb[0].mxu0
  %411 = vmatprep.mubr.bf16.mxu0 0
  %412 = vmatmul.mubr.bf16.gmra.mrb[0].mxu0 %v262
  %v413 = vpop.f32.mrb[0].mxu0
  %v414 = vadd.f32 %v85, %v413
  %v415 = vpop.f32.mrb[0].mxu0
  %v416 = vpop.f32.mrb[0].mxu0
  %v417 = vadd.f32 %v85, %v416
  %v418 = vpop.f32.mrb[0].mxu0
  %419 = vmatprep.mubr.bf16.mxu0 0
  %420 = vmatmul.mubr.bf16.gmra.mrb[0].mxu0 %v265
  %v421 = vpop.f32.mrb[0].mxu0
  %v422 = vadd.f32 %v85, %v421
  %v423 = vpop.f32.mrb[0].mxu0
  %v424 = vpop.f32.mrb[0].mxu0
  %v425 = vadd.f32 %v85, %v424
  %v426 = vpop.f32.mrb[0].mxu0
  %427 = vmatprep.mubr.bf16.mxu0 0
  %428 = vmatmul.mubr.bf16.gmra.mrb[0].mxu0 %v268
  %v429 = vpop.f32.mrb[0].mxu0
  %v430 = vadd.f32 %v85, %v429
  %v431 = vpop.f32.mrb[0].mxu0
  %v432 = vpop.f32.mrb[0].mxu0
  %v433 = vadd.f32 %v85, %v432
  %v434 = vpop.f32.mrb[0].mxu0
  %435 = vmatprep.mubr.bf16.mxu0 0
  %436 = vmatmul.mubr.bf16.gmra.mrb[0].mxu0 %v271
  %v437 = vpop.f32.mrb[0].mxu0
  %v438 = vadd.f32 %v85, %v437
  %v439 = vpop.f32.mrb[0].mxu0
  %v440 = vpop.f32.mrb[0].mxu0
  %v441 = vadd.f32 %v85, %v440
  %v442 = vpop.f32.mrb[0].mxu0
  %443 = vmatprep.mubr.bf16.mxu0 0
  %444 = vmatmul.mubr.bf16.gmra.mrb[0].mxu0 %v274
  %v445 = vpop.f32.mrb[0].mxu0
  %v446 = vadd.f32 %v85, %v445
  %v447 = vpop.f32.mrb[0].mxu0
  %v448 = vpop.f32.mrb[0].mxu0
  %v449 = vadd.f32 %v85, %v448
  %v450 = vpop.f32.mrb[0].mxu0
  %451 = vmatprep.mubr.bf16.mxu0 0
  %452 = vmatmul.mubr.bf16.gmra.mrb[0].mxu0 %v277
  %v453 = vpop.f32.mrb[0].mxu0
  %v454 = vadd.f32 %v85, %v453
  %v455 = vpop.f32.mrb[0].mxu0
  %v456 = vpop.f32.mrb[0].mxu0
  %v457 = vadd.f32 %v85, %v456
  %v458 = vpop.f32.mrb[0].mxu0
  %459 = vmatprep.mubr.bf16.mxu0 0
  %460 = vmatmul.mubr.bf16.gmra.mrb[0].mxu0 %v280
  %v461 = vpop.f32.mrb[0].mxu0
  %v462 = vadd.f32 %v85, %v461
  %v463 = vpop.f32.mrb[0].mxu0
  %v464 = vpop.f32.mrb[0].mxu0
  %v465 = vadd.f32 %v85, %v464
  %v466 = vpop.f32.mrb[0].mxu0
  %467 = vmatprep.mubr.bf16.mxu0 0
  %468 = vmatmul.mubr.bf16.gmra.mrb[0].mxu0 %v283
  %v469 = vpop.f32.mrb[0].mxu0
  %v470 = vadd.f32 %v85, %v469
  %v471 = vpop.f32.mrb[0].mxu0
  %v472 = vpop.f32.mrb[0].mxu0
  %v473 = vadd.f32 %v85, %v472
  %v474 = vpop.f32.mrb[0].mxu0
  %475 = vmatprep.mubr.bf16.mxu0 0
  %476 = vmatmul.mubr.bf16.gmra.mrb[0].mxu0 %v286
  %v477 = vpop.f32.mrb[0].mxu0
  %v478 = vadd.f32 %v85, %v477
  %v479 = vpop.f32.mrb[0].mxu0
  %v480 = vpop.f32.mrb[0].mxu0
  %v481 = vadd.f32 %v85, %v480
  %v482 = vpop.f32.mrb[0].mxu0
  %483 = vmatprep.mubr.bf16.mxu0 0
  %484 = vmatmul.mubr.bf16.gmra.mrb[0].mxu0 %v289
  %v485 = vpop.f32.mrb[0].mxu0
  %v486 = vadd.f32 %v85, %v485
  %v487 = vpop.f32.mrb[0].mxu0
  %v488 = vpop.f32.mrb[0].mxu0
  %v489 = vadd.f32 %v85, %v488
  %v490 = vpop.f32.mrb[0].mxu0
  %491 = vmatprep.mubr.bf16.mxu0 0
  %492 = vmatmul.mubr.bf16.gmra.mrb[0].mxu0 %v292
  %v493 = vpop.f32.mrb[0].mxu0
  %v494 = vadd.f32 %v85, %v493
  %v495 = vpop.f32.mrb[0].mxu0
  %v496 = vpop.f32.mrb[0].mxu0
  %v497 = vadd.f32 %v85, %v496
  %v498 = vpop.f32.mrb[0].mxu0
  %499 = vmatprep.mubr.bf16.mxu0 0
  %500 = vmatmul.mubr.bf16.gmra.mrb[0].mxu0 %v295
  %v501 = vpop.f32.mrb[0].mxu0
  %v502 = vadd.f32 %v85, %v501
  %v503 = vpop.f32.mrb[0].mxu0
  %v504 = vpop.f32.mrb[0].mxu0
  %v505 = vadd.f32 %v85, %v504
  %v506 = vpop.f32.mrb[0].mxu0
  %507 = vmatprep.mubr.bf16.mxu0 0
  %508 = vmatmul.mubr.bf16.gmra.mrb[0].mxu0 %v298
  %v509 = vpop.f32.mrb[0].mxu0
  %v510 = vadd.f32 %v85, %v509
  %v511 = vpop.f32.mrb[0].mxu0
  %v512 = vpop.f32.mrb[0].mxu0
  %v513 = vadd.f32 %v85, %v512
  %v514 = vpop.f32.mrb[0].mxu0
  %515 = vmatprep.mubr.bf16.mxu0 0
  %516 = vmatmul.mubr.bf16.gmra.mrb[0].mxu0 %v301
  %v517 = vpop.f32.mrb[0].mxu0
  %v518 = vadd.f32 %v85, %v517
  %v519 = vpop.f32.mrb[0].mxu0
  %v520 = vpop.f32.mrb[0].mxu0
  %v521 = vadd.f32 %v85, %v520
  %v522 = vpop.f32.mrb[0].mxu0
  %523 = vmatprep.mubr.bf16.mxu0 0
  %524 = vmatmul.mubr.bf16.gmra.mrb[0].mxu0 %v304
  %v525 = vpop.f32.mrb[0].mxu0
  %v526 = vadd.f32 %v85, %v525
  %v527 = vpop.f32.mrb[0].mxu0
  %v528 = vpop.f32.mrb[0].mxu0
  %v529 = vadd.f32 %v85, %v528
  %v530 = vpop.f32.mrb[0].mxu0
  %531 = vmatprep.mubr.bf16.mxu0 0
  %532 = vmatmul.mubr.bf16.gmra.mrb[0].mxu0 %v307
  %v533 = vpop.f32.mrb[0].mxu0
  %v534 = vadd.f32 %v85, %v533
  %v535 = vpop.f32.mrb[0].mxu0
  %v536 = vpop.f32.mrb[0].mxu0
  %v537 = vadd.f32 %v85, %v536
  %v538 = vpop.f32.mrb[0].mxu0
  %539 = vmatprep.mubr.bf16.mxu0 0
  %540 = vmatmul.mubr.bf16.gmra.mrb[0].mxu0 %v310
  %v541 = vpop.f32.mrb[0].mxu0
  %v542 = vadd.f32 %v85, %v541
  %v543 = vpop.f32.mrb[0].mxu0
  %v544 = vpop.f32.mrb[0].mxu0
  %v545 = vadd.f32 %v85, %v544
  %v546 = vpop.f32.mrb[0].mxu0
  %547 = vmatprep.mubr.bf16.mxu0 0
  %548 = vmatmul.mubr.bf16.gmra.mrb[0].mxu0 %v313
  %v549 = vpop.f32.mrb[0].mxu0
  %v550 = vadd.f32 %v85, %v549
  %v551 = vpop.f32.mrb[0].mxu0
  %v552 = vpop.f32.mrb[0].mxu0
  %v553 = vadd.f32 %v85, %v552
  %v554 = vpop.f32.mrb[0].mxu0
  %555 = vmatprep.mubr.bf16.mxu0 0
  %556 = vmatmul.mubr.bf16.gmra.mrb[0].mxu0 %v316
  %v557 = vpop.f32.mrb[0].mxu0
  %v558 = vadd.f32 %v85, %v557
  %v559 = vpop.f32.mrb[0].mxu0
  %v560 = vpop.f32.mrb[0].mxu0
  %v561 = vadd.f32 %v85, %v560
  %v562 = vpop.f32.mrb[0].mxu0
  %563 = vmatprep.mubr.bf16.mxu0 0
  %564 = vmatmul.mubr.bf16.gmra.mrb[0].mxu0 %v319
  %v565 = vpop.f32.mrb[0].mxu0
  %v566 = vadd.f32 %v85, %v565
  %v567 = vpop.f32.mrb[0].mxu0
  %v568 = vpop.f32.mrb[0].mxu0
  %v569 = vadd.f32 %v85, %v568
  %v570 = vpop.f32.mrb[0].mxu0
  %571 = vmatprep.mubr.bf16.mxu0 0
  %572 = vmatmul.mubr.bf16.gmra.mrb[0].mxu0 %v322
  %v573 = vpop.f32.mrb[0].mxu0
  %v574 = vadd.f32 %v85, %v573
  %v575 = vpop.f32.mrb[0].mxu0
  %v576 = vpop.f32.mrb[0].mxu0
  %v577 = vadd.f32 %v85, %v576
  %v578 = vpop.f32.mrb[0].mxu0
  %579 = vmatprep.mubr.bf16.mxu0 0
  %580 = vmatmul.mubr.bf16.gmra.mrb[0].mxu0 %v325
  %v581 = vpop.f32.mrb[0].mxu0
  %v582 = vadd.f32 %v85, %v581
  %v583 = vpop.f32.mrb[0].mxu0
  %v584 = vpop.f32.mrb[0].mxu0
  %v585 = vadd.f32 %v85, %v584
  %v586 = vpop.f32.mrb[0].mxu0
  %587 = vmatprep.mubr.bf16.mxu0 0
  %588 = vmatmul.mubr.bf16.gmra.mrb[0].mxu0 %v328
  %v589 = vpop.f32.mrb[0].mxu0
  %v590 = vadd.f32 %v85, %v589
  %v591 = vpop.f32.mrb[0].mxu0
  %v592 = vpop.f32.mrb[0].mxu0
  %v593 = vadd.f32 %v85, %v592
  %v594 = vpop.f32.mrb[0].mxu0
  %595 = vmatprep.mubr.bf16.mxu0 0
  %596 = vmatmul.mubr.bf16.gmra.mrb[0].mxu0 %v331
  %v597 = vpop.f32.mrb[0].mxu0
  %v598 = vadd.f32 %v85, %v597
  %v599 = vpop.f32.mrb[0].mxu0
  %v600 = vpop.f32.mrb[0].mxu0
  %v601 = vadd.f32 %v85, %v600
  %v602 = vpop.f32.mrb[0].mxu0
  %603 = vmatprep.mubr.bf16.mxu0 0
  %604 = vmatmul.mubr.bf16.gmra.mrb[0].mxu0 %v334
  %v605 = vpop.f32.mrb[0].mxu0
  %v606 = vadd.f32 %v85, %v605
  %v607 = vpop.f32.mrb[0].mxu0
  %v608 = vpop.f32.mrb[0].mxu0
  %v609 = vadd.f32 %v85, %v608
  %v610 = vpop.f32.mrb[0].mxu0
  %611 = vmatprep.mubr.bf16.mxu0 0
  %612 = vmatmul.mubr.bf16.gmra.mrb[0].mxu0 %v337
  %v613 = vpop.f32.mrb[0].mxu0
  %v614 = vadd.f32 %v85, %v613
  %v615 = vpop.f32.mrb[0].mxu0
  %v616 = vpop.f32.mrb[0].mxu0
  %v617 = vadd.f32 %v85, %v616
  %v618 = vpop.f32.mrb[0].mxu0
  %619 = vmatprep.mubr.bf16.mxu0 0
  %620 = vmatmul.mubr.bf16.gmra.mrb[0].mxu0 %v340
  %v621 = vpop.f32.mrb[0].mxu0
  %v622 = vadd.f32 %v85, %v621
  %v623 = vpop.f32.mrb[0].mxu0
  %v624 = vpop.f32.mrb[0].mxu0
  %v625 = vadd.f32 %v85, %v624
  %v626 = vpop.f32.mrb[0].mxu0
  %627 = vmatprep.mubr.bf16.mxu0 0
  %628 = vmatmul.mubr.bf16.gmra.mrb[0].mxu0 %v343
  %v629 = vpop.f32.mrb[0].mxu0
  %v630 = vadd.f32 %v85, %v629
  %v631 = vpop.f32.mrb[0].mxu0
  %v632 = vpop.f32.mrb[0].mxu0
  %v633 = vadd.f32 %v85, %v632
  %v634 = vpop.f32.mrb[0].mxu0
  %635 = vmatprep.mubr.bf16.mxu0 0
  %636 = vmatmul.mubr.bf16.gmra.mrb[0].mxu0 %v346
  %v637 = vpop.f32.mrb[0].mxu0
  %v638 = vadd.f32 %v85, %v637
  %v639 = vpop.f32.mrb[0].mxu0
  %v640 = vpop.f32.mrb[0].mxu0
  %v641 = vadd.f32 %v85, %v640
  %v642 = vpop.f32.mrb[0].mxu0
  %643 = vdwg.mxu0
  %vm644 = vcmp.gt.f32.partialorder %v390, 0.0
  %vm645 = vcmp.gt.f32.partialorder %v393, 0.0
  %vm646 = vcmp.gt.f32.partialorder %v398, 0.0
  %vm647 = vcmp.gt.f32.partialorder %v401, 0.0
  %vm648 = vcmp.gt.f32.partialorder %v406, 0.0
  %vm649 = vcmp.gt.f32.partialorder %v409, 0.0
  %vm650 = vcmp.gt.f32.partialorder %v414, 0.0
  %vm651 = vcmp.gt.f32.partialorder %v417, 0.0
  %vm652 = vcmp.gt.f32.partialorder %v422, 0.0
  %vm653 = vcmp.gt.f32.partialorder %v425, 0.0
  %vm654 = vcmp.gt.f32.partialorder %v430, 0.0
  %vm655 = vcmp.gt.f32.partialorder %v433, 0.0
  %vm656 = vcmp.gt.f32.partialorder %v438, 0.0
  %vm657 = vcmp.gt.f32.partialorder %v441, 0.0
  %vm658 = vcmp.gt.f32.partialorder %v446, 0.0
  %vm659 = vcmp.gt.f32.partialorder %v449, 0.0
  %vm660 = vcmp.gt.f32.partialorder %v454, 0.0
  %vm661 = vcmp.gt.f32.partialorder %v457, 0.0
  %vm662 = vcmp.gt.f32.partialorder %v462, 0.0
  %vm663 = vcmp.gt.f32.partialorder %v465, 0.0
  %vm664 = vcmp.gt.f32.partialorder %v470, 0.0
  %vm665 = vcmp.gt.f32.partialorder %v473, 0.0
  %vm666 = vcmp.gt.f32.partialorder %v478, 0.0
  %vm667 = vcmp.gt.f32.partialorder %v481, 0.0
  %vm668 = vcmp.gt.f32.partialorder %v486, 0.0
  %vm669 = vcmp.gt.f32.partialorder %v489, 0.0
  %vm670 = vcmp.gt.f32.partialorder %v494, 0.0
  %vm671 = vcmp.gt.f32.partialorder %v497, 0.0
  %vm672 = vcmp.gt.f32.partialorder %v502, 0.0
  %vm673 = vcmp.gt.f32.partialorder %v505, 0.0
  %vm674 = vcmp.gt.f32.partialorder %v510, 0.0
  %vm675 = vcmp.gt.f32.partialorder %v513, 0.0
  %vm676 = vcmp.gt.f32.partialorder %v518, 0.0
  %vm677 = vcmp.gt.f32.partialorder %v521, 0.0
  %vm678 = vcmp.gt.f32.partialorder %v526, 0.0
  %vm679 = vcmp.gt.f32.partialorder %v529, 0.0
  %vm680 = vcmp.gt.f32.partialorder %v534, 0.0
  %vm681 = vcmp.gt.f32.partialorder %v537, 0.0
  %vm682 = vcmp.gt.f32.partialorder %v542, 0.0
  %vm683 = vcmp.gt.f32.partialorder %v545, 0.0
  %vm684 = vcmp.gt.f32.partialorder %v550, 0.0
  %vm685 = vcmp.gt.f32.partialorder %v553, 0.0
  %vm686 = vcmp.gt.f32.partialorder %v558, 0.0
  %vm687 = vcmp.gt.f32.partialorder %v561, 0.0
  %vm688 = vcmp.gt.f32.partialorder %v566, 0.0
  %vm689 = vcmp.gt.f32.partialorder %v569, 0.0
  %vm690 = vcmp.gt.f32.partialorder %v574, 0.0
  %vm691 = vcmp.gt.f32.partialorder %v577, 0.0
  %vm692 = vcmp.gt.f32.partialorder %v582, 0.0
  %vm693 = vcmp.gt.f32.partialorder %v585, 0.0
  %vm694 = vcmp.gt.f32.partialorder %v590, 0.0
  %vm695 = vcmp.gt.f32.partialorder %v593, 0.0
  %vm696 = vcmp.gt.f32.partialorder %v598, 0.0
  %vm697 = vcmp.gt.f32.partialorder %v601, 0.0
  %vm698 = vcmp.gt.f32.partialorder %v606, 0.0
  %vm699 = vcmp.gt.f32.partialorder %v609, 0.0
  %vm700 = vcmp.gt.f32.partialorder %v614, 0.0
  %vm701 = vcmp.gt.f32.partialorder %v617, 0.0
  %vm702 = vcmp.gt.f32.partialorder %v622, 0.0
  %vm703 = vcmp.gt.f32.partialorder %v625, 0.0
  %vm704 = vcmp.gt.f32.partialorder %v630, 0.0
  %vm705 = vcmp.gt.f32.partialorder %v633, 0.0
  %vm706 = vcmp.gt.f32.partialorder %v638, 0.0
  %vm707 = vcmp.gt.f32.partialorder %v641, 0.0
  %v708 = vmul.f32 %v390, 0.2
  %v709 = vmul.f32 %v393, 0.2
  %v710 = vmul.f32 %v398, 0.2
  %v711 = vmul.f32 %v401, 0.2
  %v712 = vmul.f32 %v406, 0.2
  %v713 = vmul.f32 %v409, 0.2
  %v714 = vmul.f32 %v414, 0.2
  %v715 = vmul.f32 %v417, 0.2
  %v716 = vmul.f32 %v422, 0.2
  %v717 = vmul.f32 %v425, 0.2
  %v718 = vmul.f32 %v430, 0.2
  %v719 = vmul.f32 %v433, 0.2
  %v720 = vmul.f32 %v438, 0.2
  %v721 = vmul.f32 %v441, 0.2
  %v722 = vmul.f32 %v446, 0.2
  %v723 = vmul.f32 %v449, 0.2
  %v724 = vmul.f32 %v454, 0.2
  %v725 = vmul.f32 %v457, 0.2
  %v726 = vmul.f32 %v462, 0.2
  %v727 = vmul.f32 %v465, 0.2
  %v728 = vmul.f32 %v470, 0.2
  %v729 = vmul.f32 %v473, 0.2
  %v730 = vmul.f32 %v478, 0.2
  %v731 = vmul.f32 %v481, 0.2
  %v732 = vmul.f32 %v486, 0.2
  %v733 = vmul.f32 %v489, 0.2
  %v734 = vmul.f32 %v494, 0.2
  %v735 = vmul.f32 %v497, 0.2
  %v736 = vmul.f32 %v502, 0.2
  %v737 = vmul.f32 %v505, 0.2
  %v738 = vmul.f32 %v510, 0.2
  %v739 = vmul.f32 %v513, 0.2
  %v740 = vmul.f32 %v518, 0.2
  %v741 = vmul.f32 %v521, 0.2
  %v742 = vmul.f32 %v526, 0.2
  %v743 = vmul.f32 %v529, 0.2
  %v744 = vmul.f32 %v534, 0.2
  %v745 = vmul.f32 %v537, 0.2
  %v746 = vmul.f32 %v542, 0.2
  %v747 = vmul.f32 %v545, 0.2
  %v748 = vmul.f32 %v550, 0.2
  %v749 = vmul.f32 %v553, 0.2
  %v750 = vmul.f32 %v558, 0.2
  %v751 = vmul.f32 %v561, 0.2
  %v752 = vmul.f32 %v566, 0.2
  %v753 = vmul.f32 %v569, 0.2
  %v754 = vmul.f32 %v574, 0.2
  %v755 = vmul.f32 %v577, 0.2
  %v756 = vmul.f32 %v582, 0.2
  %v757 = vmul.f32 %v585, 0.2
  %v758 = vmul.f32 %v590, 0.2
  %v759 = vmul.f32 %v593, 0.2
  %v760 = vmul.f32 %v598, 0.2
  %v761 = vmul.f32 %v601, 0.2
  %v762 = vmul.f32 %v606, 0.2
  %v763 = vmul.f32 %v609, 0.2
  %v764 = vmul.f32 %v614, 0.2
  %v765 = vmul.f32 %v617, 0.2
  %v766 = vmul.f32 %v622, 0.2
  %v767 = vmul.f32 %v625, 0.2
  %v768 = vmul.f32 %v630, 0.2
  %v769 = vmul.f32 %v633, 0.2
  %v770 = vmul.f32 %v638, 0.2
  %v771 = vmul.f32 %v641, 0.2
  %v772 = vsel %vm644, %v390, %v708
  %v773 = vsel %vm645, %v393, %v709
  %v774 = vsel %vm646, %v398, %v710
  %v775 = vsel %vm647, %v401, %v711
  %v776 = vsel %vm648, %v406, %v712
  %v777 = vsel %vm649, %v409, %v713
  %v778 = vsel %vm650, %v414, %v714
  %v779 = vsel %vm651, %v417, %v715
  %v780 = vsel %vm652, %v422, %v716
  %v781 = vsel %vm653, %v425, %v717
  %v782 = vsel %vm654, %v430, %v718
  %v783 = vsel %vm655, %v433, %v719
  %v784 = vsel %vm656, %v438, %v720
  %v785 = vsel %vm657, %v441, %v721
  %v786 = vsel %vm658, %v446, %v722
  %v787 = vsel %vm659, %v449, %v723
  %v788 = vsel %vm660, %v454, %v724
  %v789 = vsel %vm661, %v457, %v725
  %v790 = vsel %vm662, %v462, %v726
  %v791 = vsel %vm663, %v465, %v727
  %v792 = vsel %vm664, %v470, %v728
  %v793 = vsel %vm665, %v473, %v729
  %v794 = vsel %vm666, %v478, %v730
  %v795 = vsel %vm667, %v481, %v731
  %v796 = vsel %vm668, %v486, %v732
  %v797 = vsel %vm669, %v489, %v733
  %v798 = vsel %vm670, %v494, %v734
  %v799 = vsel %vm671, %v497, %v735
  %v800 = vsel %vm672, %v502, %v736
  %v801 = vsel %vm673, %v505, %v737
  %v802 = vsel %vm674, %v510, %v738
  %v803 = vsel %vm675, %v513, %v739
  %v804 = vsel %vm676, %v518, %v740
  %v805 = vsel %vm677, %v521, %v741
  %v806 = vsel %vm678, %v526, %v742
  %v807 = vsel %vm679, %v529, %v743
  %v808 = vsel %vm680, %v534, %v744
  %v809 = vsel %vm681, %v537, %v745
  %v810 = vsel %vm682, %v542, %v746
  %v811 = vsel %vm683, %v545, %v747
  %v812 = vsel %vm684, %v550, %v748
  %v813 = vsel %vm685, %v553, %v749
  %v814 = vsel %vm686, %v558, %v750
  %v815 = vsel %vm687, %v561, %v751
  %v816 = vsel %vm688, %v566, %v752
  %v817 = vsel %vm689, %v569, %v753
  %v818 = vsel %vm690, %v574, %v754
  %v819 = vsel %vm691, %v577, %v755
  %v820 = vsel %vm692, %v582, %v756
  %v821 = vsel %vm693, %v585, %v757
  %v822 = vsel %vm694, %v590, %v758
  %v823 = vsel %vm695, %v593, %v759
  %v824 = vsel %vm696, %v598, %v760
  %v825 = vsel %vm697, %v601, %v761
  %v826 = vsel %vm698, %v606, %v762
  %v827 = vsel %vm699, %v609, %v763
  %v828 = vsel %vm700, %v614, %v764
  %v829 = vsel %vm701, %v617, %v765
  %v830 = vsel %vm702, %v622, %v766
  %v831 = vsel %vm703, %v625, %v767
  %v832 = vsel %vm704, %v630, %v768
  %v833 = vsel %vm705, %v633, %v769
  %v834 = vsel %vm706, %v638, %v770
  %v835 = vsel %vm707, %v641, %v771
  %v836 = vld [vmem:[%s2 + $0x1] sm:$0x1]
  %v837 = vlaneseq
  %v838 = vshrl.u32 %v837, 7
  %v839 = vsub.s32 0, %v838
  %v840 = vrot.slane %v836, %v839
  %v841 = vmul.f32 %v772, %v840
  %v842 = vmul.f32 %v773, %v840
  %v843 = vmul.f32 %v774, %v840
  %v844 = vmul.f32 %v775, %v840
  %v845 = vmul.f32 %v776, %v840
  %v846 = vmul.f32 %v777, %v840
  %v847 = vmul.f32 %v778, %v840
  %v848 = vmul.f32 %v779, %v840
  %v849 = vmul.f32 %v780, %v840
  %v850 = vmul.f32 %v781, %v840
  %v851 = vmul.f32 %v782, %v840
  %v852 = vmul.f32 %v783, %v840
  %v853 = vmul.f32 %v784, %v840
  %v854 = vmul.f32 %v785, %v840
  %v855 = vmul.f32 %v786, %v840
  %v856 = vmul.f32 %v787, %v840
  %v857 = vmul.f32 %v788, %v840
  %v858 = vmul.f32 %v789, %v840
  %v859 = vmul.f32 %v790, %v840
  %v860 = vmul.f32 %v791, %v840
  %v861 = vmul.f32 %v792, %v840
  %v862 = vmul.f32 %v793, %v840
  %v863 = vmul.f32 %v794, %v840
  %v864 = vmul.f32 %v795, %v840
  %v865 = vmul.f32 %v796, %v840
  %v866 = vmul.f32 %v797, %v840
  %v867 = vmul.f32 %v798, %v840
  %v868 = vmul.f32 %v799, %v840
  %v869 = vmul.f32 %v800, %v840
  %v870 = vmul.f32 %v801, %v840
  %v871 = vmul.f32 %v802, %v840
  %v872 = vmul.f32 %v803, %v840
  %v873 = vmul.f32 %v804, %v840
  %v874 = vmul.f32 %v805, %v840
  %v875 = vmul.f32 %v806, %v840
  %v876 = vmul.f32 %v807, %v840
  %v877 = vmul.f32 %v808, %v840
  %v878 = vmul.f32 %v809, %v840
  %v879 = vmul.f32 %v810, %v840
  %v880 = vmul.f32 %v811, %v840
  %v881 = vmul.f32 %v812, %v840
  %v882 = vmul.f32 %v813, %v840
  %v883 = vmul.f32 %v814, %v840
  %v884 = vmul.f32 %v815, %v840
  %v885 = vmul.f32 %v816, %v840
  %v886 = vmul.f32 %v817, %v840
  %v887 = vmul.f32 %v818, %v840
  %v888 = vmul.f32 %v819, %v840
  %v889 = vmul.f32 %v820, %v840
  %v890 = vmul.f32 %v821, %v840
  %v891 = vmul.f32 %v822, %v840
  %v892 = vmul.f32 %v823, %v840
  %v893 = vmul.f32 %v824, %v840
  %v894 = vmul.f32 %v825, %v840
  %v895 = vmul.f32 %v826, %v840
  %v896 = vmul.f32 %v827, %v840
  %v897 = vmul.f32 %v828, %v840
  %v898 = vmul.f32 %v829, %v840
  %v899 = vmul.f32 %v830, %v840
  %v900 = vmul.f32 %v831, %v840
  %v901 = vmul.f32 %v832, %v840
  %v902 = vmul.f32 %v833, %v840
  %v903 = vmul.f32 %v834, %v840
  %v904 = vmul.f32 %v835, %v840
  %v905 = vld [vmem:[%s2 + $0x2] sm:$0x1]
  %v906 = vlaneseq
  %v907 = vshrl.u32 %v906, 7
  %v908 = vsub.s32 0, %v907
  %v909 = vrot.slane %v905, %v908
  %v910 = vadd.f32 %v841, %v909
  %v911 = vadd.f32 %v842, %v909
  %v912 = vadd.f32 %v843, %v909
  %v913 = vadd.f32 %v844, %v909
  %v914 = vadd.f32 %v845, %v909
  %v915 = vadd.f32 %v846, %v909
  %v916 = vadd.f32 %v847, %v909
  %v917 = vadd.f32 %v848, %v909
  %v918 = vadd.f32 %v849, %v909
  %v919 = vadd.f32 %v850, %v909
  %v920 = vadd.f32 %v851, %v909
  %v921 = vadd.f32 %v852, %v909
  %v922 = vadd.f32 %v853, %v909
  %v923 = vadd.f32 %v854, %v909
  %v924 = vadd.f32 %v855, %v909
  %v925 = vadd.f32 %v856, %v909
  %v926 = vadd.f32 %v857, %v909
  %v927 = vadd.f32 %v858, %v909
  %v928 = vadd.f32 %v859, %v909
  %v929 = vadd.f32 %v860, %v909
  %v930 = vadd.f32 %v861, %v909
  %v931 = vadd.f32 %v862, %v909
  %v932 = vadd.f32 %v863, %v909
  %v933 = vadd.f32 %v864, %v909
  %v934 = vadd.f32 %v865, %v909
  %v935 = vadd.f32 %v866, %v909
  %v936 = vadd.f32 %v867, %v909
  %v937 = vadd.f32 %v868, %v909
  %v938 = vadd.f32 %v869, %v909
  %v939 = vadd.f32 %v870, %v909
  %v940 = vadd.f32 %v871, %v909
  %v941 = vadd.f32 %v872, %v909
  %v942 = vadd.f32 %v873, %v909
  %v943 = vadd.f32 %v874, %v909
  %v944 = vadd.f32 %v875, %v909
  %v945 = vadd.f32 %v876, %v909
  %v946 = vadd.f32 %v877, %v909
  %v947 = vadd.f32 %v878, %v909
  %v948 = vadd.f32 %v879, %v909
  %v949 = vadd.f32 %v880, %v909
  %v950 = vadd.f32 %v881, %v909
  %v951 = vadd.f32 %v882, %v909
  %v952 = vadd.f32 %v883, %v909
  %v953 = vadd.f32 %v884, %v909
  %v954 = vadd.f32 %v885, %v909
  %v955 = vadd.f32 %v886, %v909
  %v956 = vadd.f32 %v887, %v909
  %v957 = vadd.f32 %v888, %v909
  %v958 = vadd.f32 %v889, %v909
  %v959 = vadd.f32 %v890, %v909
  %v960 = vadd.f32 %v891, %v909
  %v961 = vadd.f32 %v892, %v909
  %v962 = vadd.f32 %v893, %v909
  %v963 = vadd.f32 %v894, %v909
  %v964 = vadd.f32 %v895, %v909
  %v965 = vadd.f32 %v896, %v909
  %v966 = vadd.f32 %v897, %v909
  %v967 = vadd.f32 %v898, %v909
  %v968 = vadd.f32 %v899, %v909
  %v969 = vadd.f32 %v900, %v909
  %v970 = vadd.f32 %v901, %v909
  %v971 = vadd.f32 %v902, %v909
  %v972 = vadd.f32 %v903, %v909
  %v973 = vadd.f32 %v904, %v909
  %v974 = vpack.c.bf16 %v911, %v910
  %v975 = vpack.c.bf16 %v913, %v912
  %v976 = vpack.c.bf16 %v915, %v914
  %v977 = vpack.c.bf16 %v917, %v916
  %v978 = vpack.c.bf16 %v919, %v918
  %v979 = vpack.c.bf16 %v921, %v920
  %v980 = vpack.c.bf16 %v923, %v922
  %v981 = vpack.c.bf16 %v925, %v924
  %v982 = vpack.c.bf16 %v927, %v926
  %v983 = vpack.c.bf16 %v929, %v928
  %v984 = vpack.c.bf16 %v931, %v930
  %v985 = vpack.c.bf16 %v933, %v932
  %v986 = vpack.c.bf16 %v935, %v934
  %v987 = vpack.c.bf16 %v937, %v936
  %v988 = vpack.c.bf16 %v939, %v938
  %v989 = vpack.c.bf16 %v941, %v940
  %v990 = vpack.c.bf16 %v943, %v942
  %v991 = vpack.c.bf16 %v945, %v944
  %v992 = vpack.c.bf16 %v947, %v946
  %v993 = vpack.c.bf16 %v949, %v948
  %v994 = vpack.c.bf16 %v951, %v950
  %v995 = vpack.c.bf16 %v953, %v952
  %v996 = vpack.c.bf16 %v955, %v954
  %v997 = vpack.c.bf16 %v957, %v956
  %v998 = vpack.c.bf16 %v959, %v958
  %v999 = vpack.c.bf16 %v961, %v960
  %v1000 = vpack.c.bf16 %v963, %v962
  %v1001 = vpack.c.bf16 %v965, %v964
  %v1002 = vpack.c.bf16 %v967, %v966
  %v1003 = vpack.c.bf16 %v969, %v968
  %v1004 = vpack.c.bf16 %v971, %v970
  %v1005 = vpack.c.bf16 %v973, %v972
  %v1038 = vunpack.c.l.b16 %v974
  %v1039 = vunpack.c.h.b16 %v974
  %v1040 = vunpack.c.l.b16 %v975
  %v1041 = vunpack.c.h.b16 %v975
  %v1042 = vunpack.c.l.b16 %v976
  %v1043 = vunpack.c.h.b16 %v976
  %v1044 = vunpack.c.l.b16 %v977
  %v1045 = vunpack.c.h.b16 %v977
  %v1046 = vunpack.c.l.b16 %v978
  %v1047 = vunpack.c.h.b16 %v978
  %v1048 = vunpack.c.l.b16 %v979
  %v1049 = vunpack.c.h.b16 %v979
  %v1050 = vunpack.c.l.b16 %v980
  %v1051 = vunpack.c.h.b16 %v980
  %v1052 = vunpack.c.l.b16 %v981
  %v1053 = vunpack.c.h.b16 %v981
  %v1054 = vunpack.c.l.b16 %v982
  %v1055 = vunpack.c.h.b16 %v982
  %v1056 = vunpack.c.l.b16 %v983
  %v1057 = vunpack.c.h.b16 %v983
  %v1058 = vunpack.c.l.b16 %v984
  %v1059 = vunpack.c.h.b16 %v984
  %v1060 = vunpack.c.l.b16 %v985
  %v1061 = vunpack.c.h.b16 %v985
  %v1062 = vunpack.c.l.b16 %v986
  %v1063 = vunpack.c.h.b16 %v986
  %v1064 = vunpack.c.l.b16 %v987
  %v1065 = vunpack.c.h.b16 %v987
  %v1066 = vunpack.c.l.b16 %v988
  %v1067 = vunpack.c.h.b16 %v988
  %v1068 = vunpack.c.l.b16 %v989
  %v1069 = vunpack.c.h.b16 %v989
  %v1070 = vunpack.c.l.b16 %v990
  %v1071 = vunpack.c.h.b16 %v990
  %v1072 = vunpack.c.l.b16 %v991
  %v1073 = vunpack.c.h.b16 %v991
  %v1074 = vunpack.c.l.b16 %v992
  %v1075 = vunpack.c.h.b16 %v992
  %v1076 = vunpack.c.l.b16 %v993
  %v1077 = vunpack.c.h.b16 %v993
  %v1078 = vunpack.c.l.b16 %v994
  %v1079 = vunpack.c.h.b16 %v994
  %v1080 = vunpack.c.l.b16 %v995
  %v1081 = vunpack.c.h.b16 %v995
  %v1082 = vunpack.c.l.b16 %v996
  %v1083 = vunpack.c.h.b16 %v996
  %v1084 = vunpack.c.l.b16 %v997
  %v1085 = vunpack.c.h.b16 %v997
  %v1086 = vunpack.c.l.b16 %v998
  %v1087 = vunpack.c.h.b16 %v998
  %v1088 = vunpack.c.l.b16 %v999
  %v1089 = vunpack.c.h.b16 %v999
  %v1090 = vunpack.c.l.b16 %v1000
  %v1091 = vunpack.c.h.b16 %v1000
  %v1092 = vunpack.c.l.b16 %v1001
  %v1093 = vunpack.c.h.b16 %v1001
  %v1094 = vunpack.c.l.b16 %v1002
  %v1095 = vunpack.c.h.b16 %v1002
  %v1096 = vunpack.c.l.b16 %v1003
  %v1097 = vunpack.c.h.b16 %v1003
  %v1098 = vunpack.c.l.b16 %v1004
  %v1099 = vunpack.c.h.b16 %v1004
  %v1100 = vunpack.c.l.b16 %v1005
  %v1101 = vunpack.c.h.b16 %v1005
  %v1102 = vpack.c.b16 %v1038, %v1038
  %v1103 = vpack.c.b16 %v1039, %v1039
  %v1104 = vpack.c.b16 %v1040, %v1040
  %v1105 = vpack.c.b16 %v1041, %v1041
  %v1106 = vpack.c.b16 %v1042, %v1042
  %v1107 = vpack.c.b16 %v1043, %v1043
  %v1108 = vpack.c.b16 %v1044, %v1044
  %v1109 = vpack.c.b16 %v1045, %v1045
  %v1110 = vpack.c.b16 %v1046, %v1046
  %v1111 = vpack.c.b16 %v1047, %v1047
  %v1112 = vpack.c.b16 %v1048, %v1048
  %v1113 = vpack.c.b16 %v1049, %v1049
  %v1114 = vpack.c.b16 %v1050, %v1050
  %v1115 = vpack.c.b16 %v1051, %v1051
  %v1116 = vpack.c.b16 %v1052, %v1052
  %v1117 = vpack.c.b16 %v1053, %v1053
  %v1118 = vpack.c.b16 %v1054, %v1054
  %v1119 = vpack.c.b16 %v1055, %v1055
  %v1120 = vpack.c.b16 %v1056, %v1056
  %v1121 = vpack.c.b16 %v1057, %v1057
  %v1122 = vpack.c.b16 %v1058, %v1058
  %v1123 = vpack.c.b16 %v1059, %v1059
  %v1124 = vpack.c.b16 %v1060, %v1060
  %v1125 = vpack.c.b16 %v1061, %v1061
  %v1126 = vpack.c.b16 %v1062, %v1062
  %v1127 = vpack.c.b16 %v1063, %v1063
  %v1128 = vpack.c.b16 %v1064, %v1064
  %v1129 = vpack.c.b16 %v1065, %v1065
  %v1130 = vpack.c.b16 %v1066, %v1066
  %v1131 = vpack.c.b16 %v1067, %v1067
  %v1132 = vpack.c.b16 %v1068, %v1068
  %v1133 = vpack.c.b16 %v1069, %v1069
  %v1134 = vpack.c.b16 %v1070, %v1070
  %v1135 = vpack.c.b16 %v1071, %v1071
  %v1136 = vpack.c.b16 %v1072, %v1072
  %v1137 = vpack.c.b16 %v1073, %v1073
  %v1138 = vpack.c.b16 %v1074, %v1074
  %v1139 = vpack.c.b16 %v1075, %v1075
  %v1140 = vpack.c.b16 %v1076, %v1076
  %v1141 = vpack.c.b16 %v1077, %v1077
  %v1142 = vpack.c.b16 %v1078, %v1078
  %v1143 = vpack.c.b16 %v1079, %v1079
  %v1144 = vpack.c.b16 %v1080, %v1080
  %v1145 = vpack.c.b16 %v1081, %v1081
  %v1146 = vpack.c.b16 %v1082, %v1082
  %v1147 = vpack.c.b16 %v1083, %v1083
  %v1148 = vpack.c.b16 %v1084, %v1084
  %v1149 = vpack.c.b16 %v1085, %v1085
  %v1150 = vpack.c.b16 %v1086, %v1086
  %v1151 = vpack.c.b16 %v1087, %v1087
  %v1152 = vpack.c.b16 %v1088, %v1088
  %v1153 = vpack.c.b16 %v1089, %v1089
  %v1154 = vpack.c.b16 %v1090, %v1090
  %v1155 = vpack.c.b16 %v1091, %v1091
  %v1156 = vpack.c.b16 %v1092, %v1092
  %v1157 = vpack.c.b16 %v1093, %v1093
  %v1158 = vpack.c.b16 %v1094, %v1094
  %v1159 = vpack.c.b16 %v1095, %v1095
  %v1160 = vpack.c.b16 %v1096, %v1096
  %v1161 = vpack.c.b16 %v1097, %v1097
  %v1162 = vpack.c.b16 %v1098, %v1098
  %v1163 = vpack.c.b16 %v1099, %v1099
  %v1164 = vpack.c.b16 %v1100, %v1100
  %v1165 = vpack.c.b16 %v1101, %v1101
  %vm1230 = vcmask 125952
  %1231 = vst.msk [vmem:[%s3] sm:$0xf] %vm1230, %v1102
  %1232 = vst.msk [vmem:[%s3 + $0x4] sm:$0xf] %vm1230, %v1103
  %1233 = vst.msk [vmem:[%s3 + $0x8] sm:$0xf] %vm1230, %v1104
  %1234 = vst.msk [vmem:[%s3 + $0xc] sm:$0xf] %vm1230, %v1105
  %1235 = vst.msk [vmem:[%s3 + $0x10] sm:$0xf] %vm1230, %v1106
  %1236 = vst.msk [vmem:[%s3 + $0x14] sm:$0xf] %vm1230, %v1107
  %1237 = vst.msk [vmem:[%s3 + $0x18] sm:$0xf] %vm1230, %v1108
  %1238 = vst.msk [vmem:[%s3 + $0x1c] sm:$0xf] %vm1230, %v1109
  %1239 = vst.msk [vmem:[%s3 + $0x20] sm:$0xf] %vm1230, %v1110
  %1240 = vst.msk [vmem:[%s3 + $0x24] sm:$0xf] %vm1230, %v1111
  %1241 = vst.msk [vmem:[%s3 + $0x28] sm:$0xf] %vm1230, %v1112
  %1242 = vst.msk [vmem:[%s3 + $0x2c] sm:$0xf] %vm1230, %v1113
  %1243 = vst.msk [vmem:[%s3 + $0x30] sm:$0xf] %vm1230, %v1114
  %1244 = vst.msk [vmem:[%s3 + $0x34] sm:$0xf] %vm1230, %v1115
  %1245 = vst.msk [vmem:[%s3 + $0x38] sm:$0xf] %vm1230, %v1116
  %1246 = vst.msk [vmem:[%s3 + $0x3c] sm:$0xf] %vm1230, %v1117
  %1247 = vst.msk [vmem:[%s3 + $0x40] sm:$0xf] %vm1230, %v1118
  %1248 = vst.msk [vmem:[%s3 + $0x44] sm:$0xf] %vm1230, %v1119
  %1249 = vst.msk [vmem:[%s3 + $0x48] sm:$0xf] %vm1230, %v1120
  %1250 = vst.msk [vmem:[%s3 + $0x4c] sm:$0xf] %vm1230, %v1121
  %1251 = vst.msk [vmem:[%s3 + $0x50] sm:$0xf] %vm1230, %v1122
  %1252 = vst.msk [vmem:[%s3 + $0x54] sm:$0xf] %vm1230, %v1123
  %1253 = vst.msk [vmem:[%s3 + $0x58] sm:$0xf] %vm1230, %v1124
  %1254 = vst.msk [vmem:[%s3 + $0x5c] sm:$0xf] %vm1230, %v1125
  %1255 = vst.msk [vmem:[%s3 + $0x60] sm:$0xf] %vm1230, %v1126
  %1256 = vst.msk [vmem:[%s3 + $0x64] sm:$0xf] %vm1230, %v1127
  %1257 = vst.msk [vmem:[%s3 + $0x68] sm:$0xf] %vm1230, %v1128
  %1258 = vst.msk [vmem:[%s3 + $0x6c] sm:$0xf] %vm1230, %v1129
  %1259 = vst.msk [vmem:[%s3 + $0x70] sm:$0xf] %vm1230, %v1130
  %1260 = vst.msk [vmem:[%s3 + $0x74] sm:$0xf] %vm1230, %v1131
  %1261 = vst.msk [vmem:[%s3 + $0x78] sm:$0xf] %vm1230, %v1132
  %1262 = vst.msk [vmem:[%s3 + $0x7c] sm:$0xf] %vm1230, %v1133
  %1263 = vst.msk [vmem:[%s3 + $0x80] sm:$0xf] %vm1230, %v1134
  %1264 = vst.msk [vmem:[%s3 + $0x84] sm:$0xf] %vm1230, %v1135
  %1265 = vst.msk [vmem:[%s3 + $0x88] sm:$0xf] %vm1230, %v1136
  %1266 = vst.msk [vmem:[%s3 + $0x8c] sm:$0xf] %vm1230, %v1137
  %1267 = vst.msk [vmem:[%s3 + $0x90] sm:$0xf] %vm1230, %v1138
  %1268 = vst.msk [vmem:[%s3 + $0x94] sm:$0xf] %vm1230, %v1139
  %1269 = vst.msk [vmem:[%s3 + $0x98] sm:$0xf] %vm1230, %v1140
  %1270 = vst.msk [vmem:[%s3 + $0x9c] sm:$0xf] %vm1230, %v1141
  %1271 = vst.msk [vmem:[%s3 + $0xa0] sm:$0xf] %vm1230, %v1142
  %1272 = vst.msk [vmem:[%s3 + $0xa4] sm:$0xf] %vm1230, %v1143
  %1273 = vst.msk [vmem:[%s3 + $0xa8] sm:$0xf] %vm1230, %v1144
  %1274 = vst.msk [vmem:[%s3 + $0xac] sm:$0xf] %vm1230, %v1145
  %1275 = vst.msk [vmem:[%s3 + $0xb0] sm:$0xf] %vm1230, %v1146
  %1276 = vst.msk [vmem:[%s3 + $0xb4] sm:$0xf] %vm1230, %v1147
  %1277 = vst.msk [vmem:[%s3 + $0xb8] sm:$0xf] %vm1230, %v1148
  %1278 = vst.msk [vmem:[%s3 + $0xbc] sm:$0xf] %vm1230, %v1149
  %1279 = vst.msk [vmem:[%s3 + $0xc0] sm:$0xf] %vm1230, %v1150
  %1280 = vst.msk [vmem:[%s3 + $0xc4] sm:$0xf] %vm1230, %v1151
  %1281 = vst.msk [vmem:[%s3 + $0xc8] sm:$0xf] %vm1230, %v1152
  %1282 = vst.msk [vmem:[%s3 + $0xcc] sm:$0xf] %vm1230, %v1153
  %1283 = vst.msk [vmem:[%s3 + $0xd0] sm:$0xf] %vm1230, %v1154
  %1284 = vst.msk [vmem:[%s3 + $0xd4] sm:$0xf] %vm1230, %v1155
  %1285 = vst.msk [vmem:[%s3 + $0xd8] sm:$0xf] %vm1230, %v1156
  %1286 = vst.msk [vmem:[%s3 + $0xdc] sm:$0xf] %vm1230, %v1157
  %1287 = vst.msk [vmem:[%s3 + $0xe0] sm:$0xf] %vm1230, %v1158
  %1288 = vst.msk [vmem:[%s3 + $0xe4] sm:$0xf] %vm1230, %v1159
  %1289 = vst.msk [vmem:[%s3 + $0xe8] sm:$0xf] %vm1230, %v1160
  %1290 = vst.msk [vmem:[%s3 + $0xec] sm:$0xf] %vm1230, %v1161
  %1291 = vst.msk [vmem:[%s3 + $0xf0] sm:$0xf] %vm1230, %v1162
  %1292 = vst.msk [vmem:[%s3 + $0xf4] sm:$0xf] %vm1230, %v1163
  %1293 = vst.msk [vmem:[%s3 + $0xf8] sm:$0xf] %vm1230, %v1164
  %1294 = vst.msk [vmem:[%s3 + $0xfc] sm:$0xf] %vm1230, %v1165
  // Predicated region
  $region14: #{discriminator_forward.4} parent=0 // pred_check
    _
  $region15: #{discriminator_forward.4} parent=0 // pred_check_branch
    %1296 = sbr.rel (0) target = $region17
  $region16: #{discriminator_forward.4} parent=0 // pred_region
    _
  $region17: #{discriminator_forward.4} parent=0 // pred_fallthru
    _
  // Predicated region
  $region18: #{discriminator_forward.4} parent=0 // pred_check
    _
  $region19: #{discriminator_forward.4} parent=0 // pred_check_branch
    %1298 = sbr.rel (0) target = $region21
  $region20: #{discriminator_forward.4} parent=0 // pred_region
    _
  $region21: #{discriminator_forward.4} parent=0 // pred_fallthru
    _

// kernel: discriminator_forward.5
$region0: #{discriminator_forward.5}
  #allocation0 [shape = 'u32[]', space=smem, size = 0x4, offset = 0x4, fixed_abs, tag = 'smem constant byte address 0x4 - core index']
  #allocation1 [shape = 'u32[144,128]{1,0:T(1,128)}', space=vmem, size = 0x12000, scoped, tag = 'internal scratch']
  %s0 = inlined_call_operand.vmem [shape: bf16[128,144], index: 0, kind: input, shape index: {}]
  %s1 = inlined_call_operand.vmem [shape: bf16[144,32], index: 1, kind: input, shape index: {}]
  %s2 = inlined_call_operand.vmem [shape: f32[3,32], index: 2, kind: input, shape index: {}]
  %s3 = inlined_call_operand.vmem [shape: bf16[128,32], index: 3, kind: output, shape index: {}]
  %s4 = sld [smem:[#allocation0]]
  $region22: #{discriminator_forward.5} parent=0
    _
  %s6 = ssub.s32 1, %s4
  %s7 = scalar_select 0, %s6, %s4
  // Predicated region
  $region2: #{discriminator_forward.5} parent=0 // pred_check
    _
  $region3: #{discriminator_forward.5} parent=0 // pred_check_branch
    %9 = sbr.rel (0) target = $region5
  $region4: #{discriminator_forward.5} parent=0 // pred_region
    _
  $region5: #{discriminator_forward.5} parent=0 // pred_fallthru
    _
  // Predicated region
  $region6: #{discriminator_forward.5} parent=0 // pred_check
    _
  $region7: #{discriminator_forward.5} parent=0 // pred_check_branch
    %11 = sbr.rel (0) target = $region9
  $region8: #{discriminator_forward.5} parent=0 // pred_region
    _
  $region9: #{discriminator_forward.5} parent=0 // pred_fallthru
    _
  // Predicated region
  $region10: #{discriminator_forward.5} parent=0 // pred_check
    _
  $region11: #{discriminator_forward.5} parent=0 // pred_check_branch
    %13 = sbr.rel (0) target = $region13
  $region12: #{discriminator_forward.5} parent=0 // pred_region
    _
  $region13: #{discriminator_forward.5} parent=0 // pred_fallthru
    _
  %v15 = vld [vmem:[%s0] sm:$0xff]
  %v16 = vld [vmem:[%s0 + $0x8] sm:$0xff]
  %v17 = vld [vmem:[%s0 + $0x10] sm:$0xff]
  %v18 = vld [vmem:[%s0 + $0x18] sm:$0xff]
  %v19 = vld [vmem:[%s0 + $0x20] sm:$0xff]
  %v20 = vld [vmem:[%s0 + $0x28] sm:$0xff]
  %v21 = vld [vmem:[%s0 + $0x30] sm:$0xff]
  %v22 = vld [vmem:[%s0 + $0x38] sm:$0xff]
  %v23 = vld [vmem:[%s0 + $0x40] sm:$0xff]
  %v24 = vld [vmem:[%s0 + $0x48] sm:$0xff]
  %v25 = vld [vmem:[%s0 + $0x50] sm:$0xff]
  %v26 = vld [vmem:[%s0 + $0x58] sm:$0xff]
  %v27 = vld [vmem:[%s0 + $0x60] sm:$0xff]
  %v28 = vld [vmem:[%s0 + $0x68] sm:$0xff]
  %v29 = vld [vmem:[%s0 + $0x70] sm:$0xff]
  %v30 = vld [vmem:[%s0 + $0x78] sm:$0xff]
  %v31 = vld [vmem:[%s1] sm:$0xf]
  %v32 = vld [vmem:[%s1 + $0x4] sm:$0xf]
  %v33 = vld [vmem:[%s1 + $0x8] sm:$0xf]
  %v34 = vld [vmem:[%s1 + $0xc] sm:$0xf]
  %v35 = vld [vmem:[%s1 + $0x10] sm:$0xf]
  %v36 = vld [vmem:[%s1 + $0x14] sm:$0xf]
  %v37 = vld [vmem:[%s1 + $0x18] sm:$0xf]
  %v38 = vld [vmem:[%s1 + $0x1c] sm:$0xf]
  %v39 = vld [vmem:[%s1 + $0x20] sm:$0xf]
  %v40 = vld [vmem:[%s1 + $0x24] sm:$0xf]
  %v41 = vld [vmem:[%s1 + $0x28] sm:$0xf]
  %v42 = vld [vmem:[%s1 + $0x2c] sm:$0xf]
  %v43 = vld [vmem:[%s1 + $0x30] sm:$0xf]
  %v44 = vld [vmem:[%s1 + $0x34] sm:$0xf]
  %v45 = vld [vmem:[%s1 + $0x38] sm:$0xf]
  %v46 = vld [vmem:[%s1 + $0x3c] sm:$0xf]
  %v47 = vld [vmem:[%s1 + $0x40] sm:$0xf]
  %v48 = vld [vmem:[%s1 + $0x44] sm:$0xf]
  %v49 = vld [vmem:[%s2] sm:$0x1]
  %v50 = vlaneseq
  %v51 = vshrl.u32 %v50, 7
  %v52 = vsub.s32 0, %v51
  %v53 = vrot.slane %v49, %v52
  %v70 = vunpack.c.l.b16 %v15
  %v71 = vunpack.c.h.b16 %v15
  %v72 = vunpack.c.l.b16 %v16
  %v73 = vunpack.c.h.b16 %v16
  %v74 = vunpack.c.l.b16 %v17
  %v75 = vunpack.c.h.b16 %v17
  %v76 = vunpack.c.l.b16 %v18
  %v77 = vunpack.c.h.b16 %v18
  %v78 = vunpack.c.l.b16 %v19
  %v79 = vunpack.c.h.b16 %v19
  %v80 = vunpack.c.l.b16 %v20
  %v81 = vunpack.c.h.b16 %v20
  %v82 = vunpack.c.l.b16 %v21
  %v83 = vunpack.c.h.b16 %v21
  %v84 = vunpack.c.l.b16 %v22
  %v85 = vunpack.c.h.b16 %v22
  %v86 = vunpack.c.l.b16 %v23
  %v87 = vunpack.c.h.b16 %v23
  %v88 = vunpack.c.l.b16 %v24
  %v89 = vunpack.c.h.b16 %v24
  %v90 = vunpack.c.l.b16 %v25
  %v91 = vunpack.c.h.b16 %v25
  %v92 = vunpack.c.l.b16 %v26
  %v93 = vunpack.c.h.b16 %v26
  %v94 = vunpack.c.l.b16 %v27
  %v95 = vunpack.c.h.b16 %v27
  %v96 = vunpack.c.l.b16 %v28
  %v97 = vunpack.c.h.b16 %v28
  %v98 = vunpack.c.l.b16 %v29
  %v99 = vunpack.c.h.b16 %v29
  %v100 = vunpack.c.l.b16 %v30
  %v101 = vunpack.c.h.b16 %v30
  %v102 = vpack.c.b16 %v72, %v70
  %v103 = vpack.c.b16 %v73, %v71
  %v104 = vpack.c.b16 %v76, %v74
  %v105 = vpack.c.b16 %v77, %v75
  %v106 = vpack.c.b16 %v80, %v78
  %v107 = vpack.c.b16 %v81, %v79
  %v108 = vpack.c.b16 %v84, %v82
  %v109 = vpack.c.b16 %v85, %v83
  %v110 = vpack.c.b16 %v88, %v86
  %v111 = vpack.c.b16 %v89, %v87
  %v112 = vpack.c.b16 %v92, %v90
  %v113 = vpack.c.b16 %v93, %v91
  %v114 = vpack.c.b16 %v96, %v94
  %v115 = vpack.c.b16 %v97, %v95
  %v116 = vpack.c.b16 %v100, %v98
  %v117 = vpack.c.b16 %v101, %v99
  %v144 = vunpack.c.l.b16 %v31
  %v145 = vunpack.c.l.b16 %v32
  %v146 = vunpack.c.l.b16 %v33
  %v147 = vunpack.c.l.b16 %v34
  %v148 = vunpack.c.l.b16 %v35
  %v149 = vunpack.c.l.b16 %v36
  %v150 = vunpack.c.l.b16 %v37
  %v151 = vunpack.c.l.b16 %v38
  %v152 = vunpack.c.l.b16 %v39
  %v153 = vunpack.c.l.b16 %v40
  %v154 = vunpack.c.l.b16 %v41
  %v155 = vunpack.c.l.b16 %v42
  %v156 = vunpack.c.l.b16 %v43
  %v157 = vunpack.c.l.b16 %v44
  %v158 = vunpack.c.l.b16 %v45
  %v159 = vunpack.c.l.b16 %v46
  %v160 = vunpack.c.l.b16 %v47
  %v161 = vunpack.c.l.b16 %v48
  %v162 = vpack.c.b16 %v145, %v144
  %v163 = vpack.c.b16 %v147, %v146
  %v164 = vpack.c.b16 %v149, %v148
  %v165 = vpack.c.b16 %v151, %v150
  %v166 = vpack.c.b16 %v153, %v152
  %v167 = vpack.c.b16 %v155, %v154
  %v168 = vpack.c.b16 %v157, %v156
  %v169 = vpack.c.b16 %v159, %v158
  %v170 = vpack.c.b16 %v161, %v160
  %vm180 = vcmask 130048
  %v182 = vsel %vm180, %v103, 0
  %v185 = vsel %vm180, %v105, 0
  %v188 = vsel %vm180, %v107, 0
  %v191 = vsel %vm180, %v109, 0
  %v194 = vsel %vm180, %v111, 0
  %v197 = vsel %vm180, %v113, 0
  %v200 = vsel %vm180, %v115, 0
  %v203 = vsel %vm180, %v117, 0
  %205 = vmatprep.subr.bf16.mxu0 0
  %206 = vmatpush1.bf16.msra.mxu0 %v162
  %207 = vmatprep.subr.bf16.mxu0 0
  %208 = vmatpush1.bf16.msra.mxu0 %v163
  %209 = vmatprep.subr.bf16.mxu0 0
  %210 = vmatpush1.bf16.msra.mxu0 %v164
  %211 = vmatprep.subr.bf16.mxu0 0
  %212 = vmatpush1.bf16.msra.mxu0 %v165
  %213 = vmatprep.subr.bf16.mxu0 0
  %214 = vmatpush1.bf16.msra.mxu0 %v166
  %215 = vmatprep.subr.bf16.mxu0 0
  %216 = vmatpush1.bf16.msra.mxu0 %v167
  %217 = vmatprep.subr.bf16.mxu0 0
  %218 = vmatpush1.bf16.msra.mxu0 %v168
  %219 = vmatprep.subr.bf16.mxu0 0
  %220 = vmatpush1.bf16.msra.mxu0 %v169
  %221 = vmatprep.subr.bf16.mxu0 0
  %222 = vmatpush1.bf16.msra.mxu0 %v170
  %223 = vmatprep.subr.bf16.mxu0 0
  %224 = vmatpush1.bf16.msra.mxu0 0
  %225 = vmatprep.subr.bf16.mxu0 0
  %226 = vmatpush1.bf16.msra.mxu0 0
  %227 = vmatprep.subr.bf16.mxu0 0
  %228 = vmatpush1.bf16.msra.mxu0 0
  %229 = vmatprep.subr.bf16.mxu0 0
  %230 = vmatpush1.bf16.msra.mxu0 0
  %231 = vmatprep.subr.bf16.mxu0 0
  %232 = vmatpush1.bf16.msra.mxu0 0
  %233 = vmatprep.subr.bf16.mxu0 0
  %234 = vmatpush1.bf16.msra.mxu0 0
  %235 = vmatprep.subr.bf16.mxu0 0
  %236 = vmatpush1.bf16.msra.mxu0 0
  %237 = vmatprep.mubr.bf16.mxu0 %v182
  %238 = vmatmul.mubr.bf16.gmra.mrb[0].mxu0 %v102
  %v239 = vpop.f32.mrb[0].mxu0
  %v240 = vadd.f32 %v53, %v239
  %v241 = vpop.f32.mrb[0].mxu0
  %v242 = vpop.f32.mrb[0].mxu0
  %v243 = vadd.f32 %v53, %v242
  %v244 = vpop.f32.mrb[0].mxu0
  %245 = vmatprep.mubr.bf16.mxu0 %v185
  %246 = vmatmul.mubr.bf16.gmra.mrb[0].mxu0 %v104
  %v247 = vpop.f32.mrb[0].mxu0
  %v248 = vadd.f32 %v53, %v247
  %v249 = vpop.f32.mrb[0].mxu0
  %v250 = vpop.f32.mrb[0].mxu0
  %v251 = vadd.f32 %v53, %v250
  %v252 = vpop.f32.mrb[0].mxu0
  %253 = vmatprep.mubr.bf16.mxu0 %v188
  %254 = vmatmul.mubr.bf16.gmra.mrb[0].mxu0 %v106
  %v255 = vpop.f32.mrb[0].mxu0
  %v256 = vadd.f32 %v53, %v255
  %v257 = vpop.f32.mrb[0].mxu0
  %v258 = vpop.f32.mrb[0].mxu0
  %v259 = vadd.f32 %v53, %v258
  %v260 = vpop.f32.mrb[0].mxu0
  %261 = vmatprep.mubr.bf16.mxu0 %v191
  %262 = vmatmul.mubr.bf16.gmra.mrb[0].mxu0 %v108
  %v263 = vpop.f32.mrb[0].mxu0
  %v264 = vadd.f32 %v53, %v263
  %v265 = vpop.f32.mrb[0].mxu0
  %v266 = vpop.f32.mrb[0].mxu0
  %v267 = vadd.f32 %v53, %v266
  %v268 = vpop.f32.mrb[0].mxu0
  %269 = vmatprep.mubr.bf16.mxu0 %v194
  %270 = vmatmul.mubr.bf16.gmra.mrb[0].mxu0 %v110
  %v271 = vpop.f32.mrb[0].mxu0
  %v272 = vadd.f32 %v53, %v271
  %v273 = vpop.f32.mrb[0].mxu0
  %v274 = vpop.f32.mrb[0].mxu0
  %v275 = vadd.f32 %v53, %v274
  %v276 = vpop.f32.mrb[0].mxu0
  %277 = vmatprep.mubr.bf16.mxu0 %v197
  %278 = vmatmul.mubr.bf16.gmra.mrb[0].mxu0 %v112
  %v279 = vpop.f32.mrb[0].mxu0
  %v280 = vadd.f32 %v53, %v279
  %v281 = vpop.f32.mrb[0].mxu0
  %v282 = vpop.f32.mrb[0].mxu0
  %v283 = vadd.f32 %v53, %v282
  %v284 = vpop.f32.mrb[0].mxu0
  %285 = vmatprep.mubr.bf16.mxu0 %v200
  %286 = vmatmul.mubr.bf16.gmra.mrb[0].mxu0 %v114
  %v287 = vpop.f32.mrb[0].mxu0
  %v288 = vadd.f32 %v53, %v287
  %v289 = vpop.f32.mrb[0].mxu0
  %v290 = vpop.f32.mrb[0].mxu0
  %v291 = vadd.f32 %v53, %v290
  %v292 = vpop.f32.mrb[0].mxu0
  %293 = vmatprep.mubr.bf16.mxu0 %v203
  %294 = vmatmul.mubr.bf16.gmra.mrb[0].mxu0 %v116
  %v295 = vpop.f32.mrb[0].mxu0
  %v296 = vadd.f32 %v53, %v295
  %v297 = vpop.f32.mrb[0].mxu0
  %v298 = vpop.f32.mrb[0].mxu0
  %v299 = vadd.f32 %v53, %v298
  %v300 = vpop.f32.mrb[0].mxu0
  %301 = vdwg.mxu0
  %vm302 = vcmp.gt.f32.partialorder %v240, 0.0
  %vm303 = vcmp.gt.f32.partialorder %v243, 0.0
  %vm304 = vcmp.gt.f32.partialorder %v248, 0.0
  %vm305 = vcmp.gt.f32.partialorder %v251, 0.0
  %vm306 = vcmp.gt.f32.partialorder %v256, 0.0
  %vm307 = vcmp.gt.f32.partialorder %v259, 0.0
  %vm308 = vcmp.gt.f32.partialorder %v264, 0.0
  %vm309 = vcmp.gt.f32.partialorder %v267, 0.0
  %vm310 = vcmp.gt.f32.partialorder %v272, 0.0
  %vm311 = vcmp.gt.f32.partialorder %v275, 0.0
  %vm312 = vcmp.gt.f32.partialorder %v280, 0.0
  %vm313 = vcmp.gt.f32.partialorder %v283, 0.0
  %vm314 = vcmp.gt.f32.partialorder %v288, 0.0
  %vm315 = vcmp.gt.f32.partialorder %v291, 0.0
  %vm316 = vcmp.gt.f32.partialorder %v296, 0.0
  %vm317 = vcmp.gt.f32.partialorder %v299, 0.0
  %v318 = vmul.f32 %v240, 0.2
  %v319 = vmul.f32 %v243, 0.2
  %v320 = vmul.f32 %v248, 0.2
  %v321 = vmul.f32 %v251, 0.2
  %v322 = vmul.f32 %v256, 0.2
  %v323 = vmul.f32 %v259, 0.2
  %v324 = vmul.f32 %v264, 0.2
  %v325 = vmul.f32 %v267, 0.2
  %v326 = vmul.f32 %v272, 0.2
  %v327 = vmul.f32 %v275, 0.2
  %v328 = vmul.f32 %v280, 0.2
  %v329 = vmul.f32 %v283, 0.2
  %v330 = vmul.f32 %v288, 0.2
  %v331 = vmul.f32 %v291, 0.2
  %v332 = vmul.f32 %v296, 0.2
  %v333 = vmul.f32 %v299, 0.2
  %v334 = vsel %vm302, %v240, %v318
  %v335 = vsel %vm303, %v243, %v319
  %v336 = vsel %vm304, %v248, %v320
  %v337 = vsel %vm305, %v251, %v321
  %v338 = vsel %vm306, %v256, %v322
  %v339 = vsel %vm307, %v259, %v323
  %v340 = vsel %vm308, %v264, %v324
  %v341 = vsel %vm309, %v267, %v325
  %v342 = vsel %vm310, %v272, %v326
  %v343 = vsel %vm311, %v275, %v327
  %v344 = vsel %vm312, %v280, %v328
  %v345 = vsel %vm313, %v283, %v329
  %v346 = vsel %vm314, %v288, %v330
  %v347 = vsel %vm315, %v291, %v331
  %v348 = vsel %vm316, %v296, %v332
  %v349 = vsel %vm317, %v299, %v333
  %v350 = vld [vmem:[%s2 + $0x1] sm:$0x1]
  %v351 = vlaneseq
  %v352 = vshrl.u32 %v351, 7
  %v353 = vsub.s32 0, %v352
  %v354 = vrot.slane %v350, %v353
  %v355 = vmul.f32 %v334, %v354
  %v356 = vmul.f32 %v335, %v354
  %v357 = vmul.f32 %v336, %v354
  %v358 = vmul.f32 %v337, %v354
  %v359 = vmul.f32 %v338, %v354
  %v360 = vmul.f32 %v339, %v354
  %v361 = vmul.f32 %v340, %v354
  %v362 = vmul.f32 %v341, %v354
  %v363 = vmul.f32 %v342, %v354
  %v364 = vmul.f32 %v343, %v354
  %v365 = vmul.f32 %v344, %v354
  %v366 = vmul.f32 %v345, %v354
  %v367 = vmul.f32 %v346, %v354
  %v368 = vmul.f32 %v347, %v354
  %v369 = vmul.f32 %v348, %v354
  %v370 = vmul.f32 %v349, %v354
  %v371 = vld [vmem:[%s2 + $0x2] sm:$0x1]
  %v372 = vlaneseq
  %v373 = vshrl.u32 %v372, 7
  %v374 = vsub.s32 0, %v373
  %v375 = vrot.slane %v371, %v374
  %v376 = vadd.f32 %v355, %v375
  %v377 = vadd.f32 %v356, %v375
  %v378 = vadd.f32 %v357, %v375
  %v379 = vadd.f32 %v358, %v375
  %v380 = vadd.f32 %v359, %v375
  %v381 = vadd.f32 %v360, %v375
  %v382 = vadd.f32 %v361, %v375
  %v383 = vadd.f32 %v362, %v375
  %v384 = vadd.f32 %v363, %v375
  %v385 = vadd.f32 %v364, %v375
  %v386 = vadd.f32 %v365, %v375
  %v387 = vadd.f32 %v366, %v375
  %v388 = vadd.f32 %v367, %v375
  %v389 = vadd.f32 %v368, %v375
  %v390 = vadd.f32 %v369, %v375
  %v391 = vadd.f32 %v370, %v375
  %v392 = vpack.c.bf16 %v377, %v376
  %v393 = vpack.c.bf16 %v379, %v378
  %v394 = vpack.c.bf16 %v381, %v380
  %v395 = vpack.c.bf16 %v383, %v382
  %v396 = vpack.c.bf16 %v385, %v384
  %v397 = vpack.c.bf16 %v387, %v386
  %v398 = vpack.c.bf16 %v389, %v388
  %v399 = vpack.c.bf16 %v391, %v390
  %v408 = vunpack.c.l.b16 %v392
  %v409 = vunpack.c.h.b16 %v392
  %v410 = vunpack.c.l.b16 %v393
  %v411 = vunpack.c.h.b16 %v393
  %v412 = vunpack.c.l.b16 %v394
  %v413 = vunpack.c.h.b16 %v394
  %v414 = vunpack.c.l.b16 %v395
  %v415 = vunpack.c.h.b16 %v395
  %v416 = vunpack.c.l.b16 %v396
  %v417 = vunpack.c.h.b16 %v396
  %v418 = vunpack.c.l.b16 %v397
  %v419 = vunpack.c.h.b16 %v397
  %v420 = vunpack.c.l.b16 %v398
  %v421 = vunpack.c.h.b16 %v398
  %v422 = vunpack.c.l.b16 %v399
  %v423 = vunpack.c.h.b16 %v399
  %v424 = vpack.c.b16 %v408, %v408
  %v425 = vpack.c.b16 %v409, %v409
  %v426 = vpack.c.b16 %v410, %v410
  %v427 = vpack.c.b16 %v411, %v411
  %v428 = vpack.c.b16 %v412, %v412
  %v429 = vpack.c.b16 %v413, %v413
  %v430 = vpack.c.b16 %v414, %v414
  %v431 = vpack.c.b16 %v415, %v415
  %v432 = vpack.c.b16 %v416, %v416
  %v433 = vpack.c.b16 %v417, %v417
  %v434 = vpack.c.b16 %v418, %v418
  %v435 = vpack.c.b16 %v419, %v419
  %v436 = vpack.c.b16 %v420, %v420
  %v437 = vpack.c.b16 %v421, %v421
  %v438 = vpack.c.b16 %v422, %v422
  %v439 = vpack.c.b16 %v423, %v423
  %vm456 = vcmask 257024
  %457 = vst.msk [vmem:[%s3] sm:$0xf] %vm456, %v424
  %458 = vst.msk [vmem:[%s3 + $0x4] sm:$0xf] %vm456, %v425
  %459 = vst.msk [vmem:[%s3 + $0x8] sm:$0xf] %vm456, %v426
  %460 = vst.msk [vmem:[%s3 + $0xc] sm:$0xf] %vm456, %v427
  %461 = vst.msk [vmem:[%s3 + $0x10] sm:$0xf] %vm456, %v428
  %462 = vst.msk [vmem:[%s3 + $0x14] sm:$0xf] %vm456, %v429
  %463 = vst.msk [vmem:[%s3 + $0x18] sm:$0xf] %vm456, %v430
  %464 = vst.msk [vmem:[%s3 + $0x1c] sm:$0xf] %vm456, %v431
  %465 = vst.msk [vmem:[%s3 + $0x20] sm:$0xf] %vm456, %v432
  %466 = vst.msk [vmem:[%s3 + $0x24] sm:$0xf] %vm456, %v433
  %467 = vst.msk [vmem:[%s3 + $0x28] sm:$0xf] %vm456, %v434
  %468 = vst.msk [vmem:[%s3 + $0x2c] sm:$0xf] %vm456, %v435
  %469 = vst.msk [vmem:[%s3 + $0x30] sm:$0xf] %vm456, %v436
  %470 = vst.msk [vmem:[%s3 + $0x34] sm:$0xf] %vm456, %v437
  %471 = vst.msk [vmem:[%s3 + $0x38] sm:$0xf] %vm456, %v438
  %472 = vst.msk [vmem:[%s3 + $0x3c] sm:$0xf] %vm456, %v439
  // Predicated region
  $region14: #{discriminator_forward.5} parent=0 // pred_check
    _
  $region15: #{discriminator_forward.5} parent=0 // pred_check_branch
    %474 = sbr.rel (0) target = $region17
  $region16: #{discriminator_forward.5} parent=0 // pred_region
    _
  $region17: #{discriminator_forward.5} parent=0 // pred_fallthru
    _
  // Predicated region
  $region18: #{discriminator_forward.5} parent=0 // pred_check
    _
  $region19: #{discriminator_forward.5} parent=0 // pred_check_branch
    %476 = sbr.rel (0) target = $region21
  $region20: #{discriminator_forward.5} parent=0 // pred_region
    _
  $region21: #{discriminator_forward.5} parent=0 // pred_fallthru
    _

// kernel: discriminator_forward.6
$region0: #{discriminator_forward.6}
  #allocation0 [shape = 'u32[]', space=smem, size = 0x4, offset = 0x4, fixed_abs, tag = 'smem constant byte address 0x4 - core index']
  #allocation1 [shape = 'u32[144,128]{1,0:T(1,128)}', space=vmem, size = 0x12000, scoped, tag = 'internal scratch']
  %s0 = inlined_call_operand.vmem [shape: bf16[32,288], index: 0, kind: input, shape index: {}]
  %s1 = inlined_call_operand.vmem [shape: bf16[288,64], index: 1, kind: input, shape index: {}]
  %s2 = inlined_call_operand.vmem [shape: f32[3,64], index: 2, kind: input, shape index: {}]
  %s3 = inlined_call_operand.vmem [shape: bf16[32,64], index: 3, kind: output, shape index: {}]
  %s4 = sld [smem:[#allocation0]]
  $region22: #{discriminator_forward.6} parent=0
    _
  %s6 = ssub.s32 1, %s4
  %s7 = scalar_select 0, %s6, %s4
  // Predicated region
  $region2: #{discriminator_forward.6} parent=0 // pred_check
    _
  $region3: #{discriminator_forward.6} parent=0 // pred_check_branch
    %9 = sbr.rel (0) target = $region5
  $region4: #{discriminator_forward.6} parent=0 // pred_region
    _
  $region5: #{discriminator_forward.6} parent=0 // pred_fallthru
    _
  // Predicated region
  $region6: #{discriminator_forward.6} parent=0 // pred_check
    _
  $region7: #{discriminator_forward.6} parent=0 // pred_check_branch
    %11 = sbr.rel (0) target = $region9
  $region8: #{discriminator_forward.6} parent=0 // pred_region
    _
  $region9: #{discriminator_forward.6} parent=0 // pred_fallthru
    _
  // Predicated region
  $region10: #{discriminator_forward.6} parent=0 // pred_check
    _
  $region11: #{discriminator_forward.6} parent=0 // pred_check_branch
    %13 = sbr.rel (0) target = $region13
  $region12: #{discriminator_forward.6} parent=0 // pred_region
    _
  $region13: #{discriminator_forward.6} parent=0 // pred_fallthru
    _
  %v15 = vld [vmem:[%s0] sm:$0xff]
  %v16 = vld [vmem:[%s0 + $0x8] sm:$0xf]
  %v17 = vld [vmem:[%s0 + $0xc] sm:$0xff]
  %v18 = vld [vmem:[%s0 + $0x14] sm:$0xf]
  %v19 = vld [vmem:[%s0 + $0x18] sm:$0xff]
  %v20 = vld [vmem:[%s0 + $0x20] sm:$0xf]
  %v21 = vld [vmem:[%s0 + $0x24] sm:$0xff]
  %v22 = vld [vmem:[%s0 + $0x2c] sm:$0xf]
  %v23 = vld [vmem:[%s1] sm:$0xf]
  %v24 = vld [vmem:[%s1 + $0x4] sm:$0xf]
  %v25 = vld [vmem:[%s1 + $0x8] sm:$0xf]
  %v26 = vld [vmem:[%s1 + $0xc] sm:$0xf]
  %v27 = vld [vmem:[%s1 + $0x10] sm:$0xf]
  %v28 = vld [vmem:[%s1 + $0x14] sm:$0xf]
  %v29 = vld [vmem:[%s1 + $0x18] sm:$0xf]
  %v30 = vld [vmem:[%s1 + $0x1c] sm:$0xf]
  %v31 = vld [vmem:[%s1 + $0x20] sm:$0xf]
  %v32 = vld [vmem:[%s1 + $0x24] sm:$0xf]
  %v33 = vld [vmem:[%s1 + $0x28] sm:$0xf]
  %v34 = vld [vmem:[%s1 + $0x2c] sm:$0xf]
  %v35 = vld [vmem:[%s1 + $0x30] sm:$0xf]
  %v36 = vld [vmem:[%s1 + $0x34] sm:$0xf]
  %v37 = vld [vmem:[%s1 + $0x38] sm:$0xf]
  %v38 = vld [vmem:[%s1 + $0x3c] sm:$0xf]
  %v39 = vld [vmem:[%s1 + $0x40] sm:$0xf]
  %v40 = vld [vmem:[%s1 + $0x44] sm:$0xf]
  %v41 = vld [vmem:[%s1 + $0x48] sm:$0xf]
  %v42 = vld [vmem:[%s1 + $0x4c] sm:$0xf]
  %v43 = vld [vmem:[%s1 + $0x50] sm:$0xf]
  %v44 = vld [vmem:[%s1 + $0x54] sm:$0xf]
  %v45 = vld [vmem:[%s1 + $0x58] sm:$0xf]
  %v46 = vld [vmem:[%s1 + $0x5c] sm:$0xf]
  %v47 = vld [vmem:[%s1 + $0x60] sm:$0xf]
  %v48 = vld [vmem:[%s1 + $0x64] sm:$0xf]
  %v49 = vld [vmem:[%s1 + $0x68] sm:$0xf]
  %v50 = vld [vmem:[%s1 + $0x6c] sm:$0xf]
  %v51 = vld [vmem:[%s1 + $0x70] sm:$0xf]
  %v52 = vld [vmem:[%s1 + $0x74] sm:$0xf]
  %v53 = vld [vmem:[%s1 + $0x78] sm:$0xf]
  %v54 = vld [vmem:[%s1 + $0x7c] sm:$0xf]
  %v55 = vld [vmem:[%s1 + $0x80] sm:$0xf]
  %v56 = vld [vmem:[%s1 + $0x84] sm:$0xf]
  %v57 = vld [vmem:[%s1 + $0x88] sm:$0xf]
  %v58 = vld [vmem:[%s1 + $0x8c] sm:$0xf]
  %v59 = vld [vmem:[%s2] sm:$0x1]
  %v60 = vlaneseq
  %v61 = vshrl.u32 %v60, 7
  %v62 = vsub.s32 0, %v61
  %v63 = vrot.slane %v59, %v62
  %v72 = vunpack.c.l.b16 %v15
  %v73 = vunpack.c.h.b16 %v15
  %v74 = vunpack.c.l.b16 %v16
  %v75 = vunpack.c.l.b16 %v17
  %v76 = vunpack.c.h.b16 %v17
  %v77 = vunpack.c.l.b16 %v18
  %v78 = vunpack.c.l.b16 %v19
  %v79 = vunpack.c.h.b16 %v19
  %v80 = vunpack.c.l.b16 %v20
  %v81 = vunpack.c.l.b16 %v21
  %v82 = vunpack.c.h.b16 %v21
  %v83 = vunpack.c.l.b16 %v22
  %v84 = vpack.c.b16 %v75, %v72
  %v85 = vpack.c.b16 %v76, %v73
  %v86 = vpack.c.b16 %v77, %v74
  %v87 = vpack.c.b16 %v81, %v78
  %v88 = vpack.c.b16 %v82, %v79
  %v89 = vpack.c.b16 %v83, %v80
  %v130 = vunpack.c.l.b16 %v23
  %v131 = vunpack.c.l.b16 %v24
  %v132 = vunpack.c.l.b16 %v25
  %v133 = vunpack.c.l.b16 %v26
  %v134 = vunpack.c.l.b16 %v27
  %v135 = vunpack.c.l.b16 %v28
  %v136 = vunpack.c.l.b16 %v29
  %v137 = vunpack.c.l.b16 %v30
  %v138 = vunpack.c.l.b16 %v31
  %v139 = vunpack.c.l.b16 %v32
  %v140 = vunpack.c.l.b16 %v33
  %v141 = vunpack.c.l.b16 %v34
  %v142 = vunpack.c.l.b16 %v35
  %v143 = vunpack.c.l.b16 %v36
  %v144 = vunpack.c.l.b16 %v37
  %v145 = vunpack.c.l.b16 %v38
  %v146 = vunpack.c.l.b16 %v39
  %v147 = vunpack.c.l.b16 %v40
  %v148 = vunpack.c.l.b16 %v41
  %v149 = vunpack.c.l.b16 %v42
  %v150 = vunpack.c.l.b16 %v43
  %v151 = vunpack.c.l.b16 %v44
  %v152 = vunpack.c.l.b16 %v45
  %v153 = vunpack.c.l.b16 %v46
  %v154 = vunpack.c.l.b16 %v47
  %v155 = vunpack.c.l.b16 %v48
  %v156 = vunpack.c.l.b16 %v49
  %v157 = vunpack.c.l.b16 %v50
  %v158 = vunpack.c.l.b16 %v51
  %v159 = vunpack.c.l.b16 %v52
  %v160 = vunpack.c.l.b16 %v53
  %v161 = vunpack.c.l.b16 %v54
  %v162 = vunpack.c.l.b16 %v55
  %v163 = vunpack.c.l.b16 %v56
  %v164 = vunpack.c.l.b16 %v57
  %v165 = vunpack.c.l.b16 %v58
  %v166 = vpack.c.b16 %v131, %v130
  %v167 = vpack.c.b16 %v133, %v132
  %v168 = vpack.c.b16 %v135, %v134
  %v169 = vpack.c.b16 %v137, %v136
  %v170 = vpack.c.b16 %v139, %v138
  %v171 = vpack.c.b16 %v141, %v140
  %v172 = vpack.c.b16 %v143, %v142
  %v173 = vpack.c.b16 %v145, %v144
  %v174 = vpack.c.b16 %v147, %v146
  %v175 = vpack.c.b16 %v149, %v148
  %v176 = vpack.c.b16 %v151, %v150
  %v177 = vpack.c.b16 %v153, %v152
  %v178 = vpack.c.b16 %v155, %v154
  %v179 = vpack.c.b16 %v157, %v156
  %v180 = vpack.c.b16 %v159, %v158
  %v181 = vpack.c.b16 %v161, %v160
  %v182 = vpack.c.b16 %v163, %v162
  %v183 = vpack.c.b16 %v165, %v164
  %vm202 = vcmask 261120
  %v204 = vsel %vm202, %v86, 0
  %v207 = vsel %vm202, %v89, 0
  %209 = vmatprep.subr.bf16.mxu0 0
  %210 = vmatpush1.bf16.msra.mxu0 %v166
  %211 = vmatprep.subr.bf16.mxu0 0
  %212 = vmatpush1.bf16.msra.mxu0 %v167
  %213 = vmatprep.subr.bf16.mxu0 0
  %214 = vmatpush1.bf16.msra.mxu0 %v168
  %215 = vmatprep.subr.bf16.mxu0 0
  %216 = vmatpush1.bf16.msra.mxu0 %v169
  %217 = vmatprep.subr.bf16.mxu0 0
  %218 = vmatpush1.bf16.msra.mxu0 %v170
  %219 = vmatprep.subr.bf16.mxu0 0
  %220 = vmatpush1.bf16.msra.mxu0 %v171
  %221 = vmatprep.subr.bf16.mxu0 0
  %222 = vmatpush1.bf16.msra.mxu0 %v172
  %223 = vmatprep.subr.bf16.mxu0 0
  %224 = vmatpush1.bf16.msra.mxu0 %v173
  %225 = vmatprep.subr.bf16.mxu0 0
  %226 = vmatpush1.bf16.msra.mxu0 %v174
  %227 = vmatprep.subr.bf16.mxu0 0
  %228 = vmatpush1.bf16.msra.mxu0 %v175
  %229 = vmatprep.subr.bf16.mxu0 0
  %230 = vmatpush1.bf16.msra.mxu0 %v176
  %231 = vmatprep.subr.bf16.mxu0 0
  %232 = vmatpush1.bf16.msra.mxu0 %v177
  %233 = vmatprep.subr.bf16.mxu0 0
  %234 = vmatpush1.bf16.msra.mxu0 %v178
  %235 = vmatprep.subr.bf16.mxu0 0
  %236 = vmatpush1.bf16.msra.mxu0 %v179
  %237 = vmatprep.subr.bf16.mxu0 0
  %238 = vmatpush1.bf16.msra.mxu0 %v180
  %239 = vmatprep.subr.bf16.mxu0 0
  %240 = vmatpush1.bf16.msra.mxu0 %v181
  %241 = vmatprep.mubr.bf16.mxu0 %v85
  %242 = vmatmul.mubr.bf16.gmra.mrb[0].mxu0 %v84
  %v243 = vpop.f32.mrb[0].mxu0
  %v244 = vadd.f32 %v63, %v243
  %v245 = vpop.f32.mrb[0].mxu0
  %v246 = vpop.f32.mrb[0].mxu0
  %v247 = vadd.f32 %v63, %v246
  %v248 = vpop.f32.mrb[0].mxu0
  %249 = vmatprep.mubr.bf16.mxu0 %v88
  %250 = vmatmul.mubr.bf16.gmra.mrb[0].mxu0 %v87
  %v251 = vpop.f32.mrb[0].mxu0
  %v252 = vadd.f32 %v63, %v251
  %v253 = vpop.f32.mrb[0].mxu0
  %v254 = vpop.f32.mrb[0].mxu0
  %v255 = vadd.f32 %v63, %v254
  %v256 = vpop.f32.mrb[0].mxu0
  %257 = vdwg.mxu0
  %258 = vmatprep.subr.bf16.mxu0 0
  %259 = vmatpush1.bf16.msra.mxu0 %v182
  %260 = vmatprep.subr.bf16.mxu0 0
  %261 = vmatpush1.bf16.msra.mxu0 %v183
  %262 = vmatprep.subr.bf16.mxu0 0
  %263 = vmatpush1.bf16.msra.mxu0 0
  %264 = vmatprep.subr.bf16.mxu0 0
  %265 = vmatpush1.bf16.msra.mxu0 0
  %266 = vmatprep.subr.bf16.mxu0 0
  %267 = vmatpush1.bf16.msra.mxu0 0
  %268 = vmatprep.subr.bf16.mxu0 0
  %269 = vmatpush1.bf16.msra.mxu0 0
  %270 = vmatprep.subr.bf16.mxu0 0
  %271 = vmatpush1.bf16.msra.mxu0 0
  %272 = vmatprep.subr.bf16.mxu0 0
  %273 = vmatpush1.bf16.msra.mxu0 0
  %274 = vmatprep.subr.bf16.mxu0 0
  %275 = vmatpush1.bf16.msra.mxu0 0
  %276 = vmatprep.subr.bf16.mxu0 0
  %277 = vmatpush1.bf16.msra.mxu0 0
  %278 = vmatprep.subr.bf16.mxu0 0
  %279 = vmatpush1.bf16.msra.mxu0 0
  %280 = vmatprep.subr.bf16.mxu0 0
  %281 = vmatpush1.bf16.msra.mxu0 0
  %282 = vmatprep.subr.bf16.mxu0 0
  %283 = vmatpush1.bf16.msra.mxu0 0
  %284 = vmatprep.subr.bf16.mxu0 0
  %285 = vmatpush1.bf16.msra.mxu0 0
  %286 = vmatprep.subr.bf16.mxu0 0
  %287 = vmatpush1.bf16.msra.mxu0 0
  %288 = vmatprep.subr.bf16.mxu0 0
  %289 = vmatpush1.bf16.msra.mxu0 0
  %290 = vmatprep.mubr.bf16.mxu0 0
  %291 = vmatmul.mubr.bf16.gmra.mrb[0].mxu0 %v204
  %v292 = vpop.f32.mrb[0].mxu0
  %v293 = vadd.f32 %v244, %v292
  %v294 = vpop.f32.mrb[0].mxu0
  %v295 = vpop.f32.mrb[0].mxu0
  %v296 = vadd.f32 %v247, %v295
  %v297 = vpop.f32.mrb[0].mxu0
  %298 = vmatprep.mubr.bf16.mxu0 0
  %299 = vmatmul.mubr.bf16.gmra.mrb[0].mxu0 %v207
  %v300 = vpop.f32.mrb[0].mxu0
  %v301 = vadd.f32 %v252, %v300
  %v302 = vpop.f32.mrb[0].mxu0
  %v303 = vpop.f32.mrb[0].mxu0
  %v304 = vadd.f32 %v255, %v303
  %v305 = vpop.f32.mrb[0].mxu0
  %306 = vdwg.mxu0
  %vm307 = vcmp.gt.f32.partialorder %v293, 0.0
  %vm308 = vcmp.gt.f32.partialorder %v296, 0.0
  %vm309 = vcmp.gt.f32.partialorder %v301, 0.0
  %vm310 = vcmp.gt.f32.partialorder %v304, 0.0
  %v311 = vmul.f32 %v293, 0.2
  %v312 = vmul.f32 %v296, 0.2
  %v313 = vmul.f32 %v301, 0.2
  %v314 = vmul.f32 %v304, 0.2
  %v315 = vsel %vm307, %v293, %v311
  %v316 = vsel %vm308, %v296, %v312
  %v317 = vsel %vm309, %v301, %v313
  %v318 = vsel %vm310, %v304, %v314
  %v319 = vld [vmem:[%s2 + $0x1] sm:$0x1]
  %v320 = vlaneseq
  %v321 = vshrl.u32 %v320, 7
  %v322 = vsub.s32 0, %v321
  %v323 = vrot.slane %v319, %v322
  %v324 = vmul.f32 %v315, %v323
  %v325 = vmul.f32 %v316, %v323
  %v326 = vmul.f32 %v317, %v323
  %v327 = vmul.f32 %v318, %v323
  %v328 = vld [vmem:[%s2 + $0x2] sm:$0x1]
  %v329 = vlaneseq
  %v330 = vshrl.u32 %v329, 7
  %v331 = vsub.s32 0, %v330
  %v332 = vrot.slane %v328, %v331
  %v333 = vadd.f32 %v324, %v332
  %v334 = vadd.f32 %v325, %v332
  %v335 = vadd.f32 %v326, %v332
  %v336 = vadd.f32 %v327, %v332
  %v337 = vpack.c.bf16 %v334, %v333
  %v338 = vpack.c.bf16 %v336, %v335
  %v341 = vunpack.c.l.b16 %v337
  %v342 = vunpack.c.h.b16 %v337
  %v343 = vunpack.c.l.b16 %v338
  %v344 = vunpack.c.h.b16 %v338
  %v345 = vpack.c.b16 %v341, %v341
  %v346 = vpack.c.b16 %v342, %v342
  %v347 = vpack.c.b16 %v343, %v343
  %v348 = vpack.c.b16 %v344, %v344
  %vm353 = vcmask 519168
  %354 = vst.msk [vmem:[%s3] sm:$0xf] %vm353, %v345
  %355 = vst.msk [vmem:[%s3 + $0x4] sm:$0xf] %vm353, %v346
  %356 = vst.msk [vmem:[%s3 + $0x8] sm:$0xf] %vm353, %v347
  %357 = vst.msk [vmem:[%s3 + $0xc] sm:$0xf] %vm353, %v348
  // Predicated region
  $region14: #{discriminator_forward.6} parent=0 // pred_check
    _
  $region15: #{discriminator_forward.6} parent=0 // pred_check_branch
    %359 = sbr.rel (0) target = $region17
  $region16: #{discriminator_forward.6} parent=0 // pred_region
    _
  $region17: #{discriminator_forward.6} parent=0 // pred_fallthru
    _
  // Predicated region
  $region18: #{discriminator_forward.6} parent=0 // pred_check
    _
  $region19: #{discriminator_forward.6} parent=0 // pred_check_branch
    %361 = sbr.rel (0) target = $region21
  $region20: #{discriminator_forward.6} parent=0 // pred_region
    _
  $region21: #{discriminator_forward.6} parent=0 // pred_fallthru
    _

// kernel: discriminator_forward.7
$region0: #{discriminator_forward.7}
  #allocation0 [shape = 'u32[]', space=smem, size = 0x4, offset = 0x4, fixed_abs, tag = 'smem constant byte address 0x4 - core index']
  #allocation1 [shape = 'u32[144,128]{1,0:T(1,128)}', space=vmem, size = 0x12000, scoped, tag = 'internal scratch']
  %s0 = inlined_call_operand.vmem [shape: bf16[4,2,576], index: 0, kind: input, shape index: {}]
  %s1 = inlined_call_operand.vmem [shape: bf16[576,128], index: 1, kind: input, shape index: {}]
  %s2 = inlined_call_operand.vmem [shape: f32[3,128], index: 2, kind: input, shape index: {}]
  %s3 = inlined_call_operand.vmem [shape: bf16[4,128,128], index: 3, kind: input, shape index: {}]
  %s4 = inlined_call_operand.vmem [shape: f32[1,128], index: 4, kind: input, shape index: {}]
  %s5 = inlined_call_operand.vmem [shape: f32[2,128], index: 5, kind: output, shape index: {}]
  %s6 = sld [smem:[#allocation0]]
  $region30: #{discriminator_forward.7} parent=0
    _
  %s8 = ssub.s32 1, %s6
  %s9 = scalar_select 0, %s8, %s6
  // Predicated region
  $region2: #{discriminator_forward.7} parent=0 // pred_check
    _
  $region3: #{discriminator_forward.7} parent=0 // pred_check_branch
    %11 = sbr.rel (0) target = $region5
  $region4: #{discriminator_forward.7} parent=0 // pred_region
    _
  $region5: #{discriminator_forward.7} parent=0 // pred_fallthru
    _
  // Predicated region
  $region6: #{discriminator_forward.7} parent=0 // pred_check
    _
  $region7: #{discriminator_forward.7} parent=0 // pred_check_branch
    %13 = sbr.rel (0) target = $region9
  $region8: #{discriminator_forward.7} parent=0 // pred_region
    _
  $region9: #{discriminator_forward.7} parent=0 // pred_fallthru
    _
  // Predicated region
  $region10: #{discriminator_forward.7} parent=0 // pred_check
    _
  $region11: #{discriminator_forward.7} parent=0 // pred_check_branch
    %15 = sbr.rel (0) target = $region13
  $region12: #{discriminator_forward.7} parent=0 // pred_region
    _
  $region13: #{discriminator_forward.7} parent=0 // pred_fallthru
    _
  // Predicated region
  $region14: #{discriminator_forward.7} parent=0 // pred_check
    _
  $region15: #{discriminator_forward.7} parent=0 // pred_check_branch
    %17 = sbr.rel (0) target = $region17
  $region16: #{discriminator_forward.7} parent=0 // pred_region
    _
  $region17: #{discriminator_forward.7} parent=0 // pred_fallthru
    _
  // Predicated region
  $region18: #{discriminator_forward.7} parent=0 // pred_check
    _
  $region19: #{discriminator_forward.7} parent=0 // pred_check_branch
    %19 = sbr.rel (0) target = $region21
  $region20: #{discriminator_forward.7} parent=0 // pred_region
    _
  $region21: #{discriminator_forward.7} parent=0 // pred_fallthru
    _
  %v21 = vld [vmem:[%s1] sm:$0xf]
  %v22 = vld [vmem:[%s1 + $0x4] sm:$0xf]
  %v23 = vld [vmem:[%s1 + $0x8] sm:$0xf]
  %v24 = vld [vmem:[%s1 + $0xc] sm:$0xf]
  %v25 = vld [vmem:[%s1 + $0x10] sm:$0xf]
  %v26 = vld [vmem:[%s1 + $0x14] sm:$0xf]
  %v27 = vld [vmem:[%s1 + $0x18] sm:$0xf]
  %v28 = vld [vmem:[%s1 + $0x1c] sm:$0xf]
  %v29 = vld [vmem:[%s1 + $0x20] sm:$0xf]
  %v30 = vld [vmem:[%s1 + $0x24] sm:$0xf]
  %v31 = vld [vmem:[%s1 + $0x28] sm:$0xf]
  %v32 = vld [vmem:[%s1 + $0x2c] sm:$0xf]
  %v33 = vld [vmem:[%s1 + $0x30] sm:$0xf]
  %v34 = vld [vmem:[%s1 + $0x34] sm:$0xf]
  %v35 = vld [vmem:[%s1 + $0x38] sm:$0xf]
  %v36 = vld [vmem:[%s1 + $0x3c] sm:$0xf]
  %v37 = vld [vmem:[%s1 + $0x40] sm:$0xf]
  %v38 = vld [vmem:[%s1 + $0x44] sm:$0xf]
  %v39 = vld [vmem:[%s1 + $0x48] sm:$0xf]
  %v40 = vld [vmem:[%s1 + $0x4c] sm:$0xf]
  %v41 = vld [vmem:[%s1 + $0x50] sm:$0xf]
  %v42 = vld [vmem:[%s1 + $0x54] sm:$0xf]
  %v43 = vld [vmem:[%s1 + $0x58] sm:$0xf]
  %v44 = vld [vmem:[%s1 + $0x5c] sm:$0xf]
  %v45 = vld [vmem:[%s1 + $0x60] sm:$0xf]
  %v46 = vld [vmem:[%s1 + $0x64] sm:$0xf]
  %v47 = vld [vmem:[%s1 + $0x68] sm:$0xf]
  %v48 = vld [vmem:[%s1 + $0x6c] sm:$0xf]
  %v49 = vld [vmem:[%s1 + $0x70] sm:$0xf]
  %v50 = vld [vmem:[%s1 + $0x74] sm:$0xf]
  %v51 = vld [vmem:[%s1 + $0x78] sm:$0xf]
  %v52 = vld [vmem:[%s1 + $0x7c] sm:$0xf]
  %v53 = vld [vmem:[%s1 + $0x80] sm:$0xf]
  %v54 = vld [vmem:[%s1 + $0x84] sm:$0xf]
  %v55 = vld [vmem:[%s1 + $0x88] sm:$0xf]
  %v56 = vld [vmem:[%s1 + $0x8c] sm:$0xf]
  %v57 = vld [vmem:[%s1 + $0x90] sm:$0xf]
  %v58 = vld [vmem:[%s1 + $0x94] sm:$0xf]
  %v59 = vld [vmem:[%s1 + $0x98] sm:$0xf]
  %v60 = vld [vmem:[%s1 + $0x9c] sm:$0xf]
  %v61 = vld [vmem:[%s1 + $0xa0] sm:$0xf]
  %v62 = vld [vmem:[%s1 + $0xa4] sm:$0xf]
  %v63 = vld [vmem:[%s1 + $0xa8] sm:$0xf]
  %v64 = vld [vmem:[%s1 + $0xac] sm:$0xf]
  %v65 = vld [vmem:[%s1 + $0xb0] sm:$0xf]
  %v66 = vld [vmem:[%s1 + $0xb4] sm:$0xf]
  %v67 = vld [vmem:[%s1 + $0xb8] sm:$0xf]
  %v68 = vld [vmem:[%s1 + $0xbc] sm:$0xf]
  %v69 = vld [vmem:[%s1 + $0xc0] sm:$0xf]
  %v70 = vld [vmem:[%s1 + $0xc4] sm:$0xf]
  %v71 = vld [vmem:[%s1 + $0xc8] sm:$0xf]
  %v72 = vld [vmem:[%s1 + $0xcc] sm:$0xf]
  %v73 = vld [vmem:[%s1 + $0xd0] sm:$0xf]
  %v74 = vld [vmem:[%s1 + $0xd4] sm:$0xf]
  %v75 = vld [vmem:[%s1 + $0xd8] sm:$0xf]
  %v76 = vld [vmem:[%s1 + $0xdc] sm:$0xf]
  %v77 = vld [vmem:[%s1 + $0xe0] sm:$0xf]
  %v78 = vld [vmem:[%s1 + $0xe4] sm:$0xf]
  %v79 = vld [vmem:[%s1 + $0xe8] sm:$0xf]
  %v80 = vld [vmem:[%s1 + $0xec] sm:$0xf]
  %v81 = vld [vmem:[%s1 + $0xf0] sm:$0xf]
  %v82 = vld [vmem:[%s1 + $0xf4] sm:$0xf]
  %v83 = vld [vmem:[%s1 + $0xf8] sm:$0xf]
  %v84 = vld [vmem:[%s1 + $0xfc] sm:$0xf]
  %v85 = vld [vmem:[%s1 + $0x100] sm:$0xf]
  %v86 = vld [vmem:[%s1 + $0x104] sm:$0xf]
  %v87 = vld [vmem:[%s1 + $0x108] sm:$0xf]
  %v88 = vld [vmem:[%s1 + $0x10c] sm:$0xf]
  %v89 = vld [vmem:[%s1 + $0x110] sm:$0xf]
  %v90 = vld [vmem:[%s1 + $0x114] sm:$0xf]
  %v91 = vld [vmem:[%s1 + $0x118] sm:$0xf]
  %v92 = vld [vmem:[%s1 + $0x11c] sm:$0xf]
  %v93 = vld [vmem:[%s2] sm:$0x1]
  %v94 = vld [vmem:[%s2 + $0x1] sm:$0x1]
  %v95 = vld [vmem:[%s2 + $0x2] sm:$0x1]
  %v96 = vld [vmem:[%s0] sm:$0x1f]
  %v97 = vlaneseq
  %v98 = vshrl.u32 %v97, 7
  %v99 = vsub.s32 0, %v98
  %v100 = vrot.slane %v93, %v99
  %v102 = vcombine.high %v96, %v96
  %v104 = vunpack.c.l.s4 1966171168
  %v105 = vunpack.c.0.s8 %v104
  %v106 = vlaneseq
  %v107 = vshrl.u32 %v106, 7
  %v108 = vsub.s32 %v105, %v107
  %v109 = vrot.slane %v96, %v108
  %v111 = vunpack.c.l.s4 1966171168
  %v112 = vunpack.c.0.s8 %v111
  %v113 = vlaneseq
  %v114 = vshrl.u32 %v113, 7
  %v115 = vsub.s32 %v112, %v114
  %v116 = vrot.slane %v102, %v115
  %v117 = vcombine.high %v109, %v109
  %v119 = vunpack.c.l.s4 1966171168
  %v120 = vunpack.c.0.s8 %v119
  %v121 = vlaneseq
  %v122 = vshrl.u32 %v121, 7
  %v123 = vsub.s32 %v120, %v122
  %v124 = vrot.slane %v109, %v123
  %v126 = vunpack.c.l.s4 1966171168
  %v127 = vunpack.c.0.s8 %v126
  %v128 = vlaneseq
  %v129 = vshrl.u32 %v128, 7
  %v130 = vsub.s32 %v127, %v129
  %v131 = vrot.slane %v116, %v130
  %v133 = vunpack.c.l.s4 1966171168
  %v134 = vunpack.c.0.s8 %v133
  %v135 = vlaneseq
  %v136 = vshrl.u32 %v135, 7
  %v137 = vsub.s32 %v134, %v136
  %v138 = vrot.slane %v117, %v137
  %v139 = vcombine.high %v124, %v124
  %v140 = vcombine.high %v138, %v138
  %v217 = vunpack.c.l.b16 %v21
  %v218 = vunpack.c.l.b16 %v22
  %v219 = vunpack.c.l.b16 %v23
  %v220 = vunpack.c.l.b16 %v24
  %v221 = vunpack.c.l.b16 %v25
  %v222 = vunpack.c.l.b16 %v26
  %v223 = vunpack.c.l.b16 %v27
  %v224 = vunpack.c.l.b16 %v28
  %v225 = vunpack.c.l.b16 %v29
  %v226 = vunpack.c.l.b16 %v30
  %v227 = vunpack.c.l.b16 %v31
  %v228 = vunpack.c.l.b16 %v32
  %v229 = vunpack.c.l.b16 %v33
  %v230 = vunpack.c.l.b16 %v34
  %v231 = vunpack.c.l.b16 %v35
  %v232 = vunpack.c.l.b16 %v36
  %v233 = vunpack.c.l.b16 %v37
  %v234 = vunpack.c.l.b16 %v38
  %v235 = vunpack.c.l.b16 %v39
  %v236 = vunpack.c.l.b16 %v40
  %v237 = vunpack.c.l.b16 %v41
  %v238 = vunpack.c.l.b16 %v42
  %v239 = vunpack.c.l.b16 %v43
  %v240 = vunpack.c.l.b16 %v44
  %v241 = vunpack.c.l.b16 %v45
  %v242 = vunpack.c.l.b16 %v46
  %v243 = vunpack.c.l.b16 %v47
  %v244 = vunpack.c.l.b16 %v48
  %v245 = vunpack.c.l.b16 %v49
  %v246 = vunpack.c.l.b16 %v50
  %v247 = vunpack.c.l.b16 %v51
  %v248 = vunpack.c.l.b16 %v52
  %v249 = vunpack.c.l.b16 %v53
  %v250 = vunpack.c.l.b16 %v54
  %v251 = vunpack.c.l.b16 %v55
  %v252 = vunpack.c.l.b16 %v56
  %v253 = vunpack.c.l.b16 %v57
  %v254 = vunpack.c.l.b16 %v58
  %v255 = vunpack.c.l.b16 %v59
  %v256 = vunpack.c.l.b16 %v60
  %v257 = vunpack.c.l.b16 %v61
  %v258 = vunpack.c.l.b16 %v62
  %v259 = vunpack.c.l.b16 %v63
  %v260 = vunpack.c.l.b16 %v64
  %v261 = vunpack.c.l.b16 %v65
  %v262 = vunpack.c.l.b16 %v66
  %v263 = vunpack.c.l.b16 %v67
  %v264 = vunpack.c.l.b16 %v68
  %v265 = vunpack.c.l.b16 %v69
  %v266 = vunpack.c.l.b16 %v70
  %v267 = vunpack.c.l.b16 %v71
  %v268 = vunpack.c.l.b16 %v72
  %v269 = vunpack.c.l.b16 %v73
  %v270 = vunpack.c.l.b16 %v74
  %v271 = vunpack.c.l.b16 %v75
  %v272 = vunpack.c.l.b16 %v76
  %v273 = vunpack.c.l.b16 %v77
  %v274 = vunpack.c.l.b16 %v78
  %v275 = vunpack.c.l.b16 %v79
  %v276 = vunpack.c.l.b16 %v80
  %v277 = vunpack.c.l.b16 %v81
  %v278 = vunpack.c.l.b16 %v82
  %v279 = vunpack.c.l.b16 %v83
  %v280 = vunpack.c.l.b16 %v84
  %v281 = vunpack.c.l.b16 %v85
  %v282 = vunpack.c.l.b16 %v86
  %v283 = vunpack.c.l.b16 %v87
  %v284 = vunpack.c.l.b16 %v88
  %v285 = vunpack.c.l.b16 %v89
  %v286 = vunpack.c.l.b16 %v90
  %v287 = vunpack.c.l.b16 %v91
  %v288 = vunpack.c.l.b16 %v92
  %v289 = vpack.c.b16 %v218, %v217
  %v290 = vpack.c.b16 %v220, %v219
  %v291 = vpack.c.b16 %v222, %v221
  %v292 = vpack.c.b16 %v224, %v223
  %v293 = vpack.c.b16 %v226, %v225
  %v294 = vpack.c.b16 %v228, %v227
  %v295 = vpack.c.b16 %v230, %v229
  %v296 = vpack.c.b16 %v232, %v231
  %v297 = vpack.c.b16 %v234, %v233
  %v298 = vpack.c.b16 %v236, %v235
  %v299 = vpack.c.b16 %v238, %v237
  %v300 = vpack.c.b16 %v240, %v239
  %v301 = vpack.c.b16 %v242, %v241
  %v302 = vpack.c.b16 %v244, %v243
  %v303 = vpack.c.b16 %v246, %v245
  %v304 = vpack.c.b16 %v248, %v247
  %v305 = vpack.c.b16 %v250, %v249
  %v306 = vpack.c.b16 %v252, %v251
  %v307 = vpack.c.b16 %v254, %v253
  %v308 = vpack.c.b16 %v256, %v255
  %v309 = vpack.c.b16 %v258, %v257
  %v310 = vpack.c.b16 %v260, %v259
  %v311 = vpack.c.b16 %v262, %v261
  %v312 = vpack.c.b16 %v264, %v263
  %v313 = vpack.c.b16 %v266, %v265
  %v314 = vpack.c.b16 %v268, %v267
  %v315 = vpack.c.b16 %v270, %v269
  %v316 = vpack.c.b16 %v272, %v271
  %v317 = vpack.c.b16 %v274, %v273
  %v318 = vpack.c.b16 %v276, %v275
  %v319 = vpack.c.b16 %v278, %v277
  %v320 = vpack.c.b16 %v280, %v279
  %v321 = vpack.c.b16 %v282, %v281
  %v322 = vpack.c.b16 %v284, %v283
  %v323 = vpack.c.b16 %v286, %v285
  %v324 = vpack.c.b16 %v288, %v287
  %vm361 = vcmask 523264
  %v363 = vsel %vm361, %v131, 0
  %365 = vmatprep.subr.bf16.mxu0 0
  %366 = vmatpush1.bf16.msra.mxu0 %v289
  %367 = vmatprep.subr.bf16.mxu0 0
  %368 = vmatpush1.bf16.msra.mxu0 %v290
  %369 = vmatprep.subr.bf16.mxu0 0
  %370 = vmatpush1.bf16.msra.mxu0 %v291
  %371 = vmatprep.subr.bf16.mxu0 0
  %372 = vmatpush1.bf16.msra.mxu0 %v292
  %373 = vmatprep.subr.bf16.mxu0 0
  %374 = vmatpush1.bf16.msra.mxu0 %v293
  %375 = vmatprep.subr.bf16.mxu0 0
  %376 = vmatpush1.bf16.msra.mxu0 %v294
  %377 = vmatprep.subr.bf16.mxu0 0
  %378 = vmatpush1.bf16.msra.mxu0 %v295
  %379 = vmatprep.subr.bf16.mxu0 0
  %380 = vmatpush1.bf16.msra.mxu0 %v296
  %381 = vmatprep.subr.bf16.mxu0 0
  %382 = vmatpush1.bf16.msra.mxu0 %v297
  %383 = vmatprep.subr.bf16.mxu0 0
  %384 = vmatpush1.bf16.msra.mxu0 %v298
  %385 = vmatprep.subr.bf16.mxu0 0
  %386 = vmatpush1.bf16.msra.mxu0 %v299
  %387 = vmatprep.subr.bf16.mxu0 0
  %388 = vmatpush1.bf16.msra.mxu0 %v300
  %389 = vmatprep.subr.bf16.mxu0 0
  %390 = vmatpush1.bf16.msra.mxu0 %v301
  %391 = vmatprep.subr.bf16.mxu0 0
  %392 = vmatpush1.bf16.msra.mxu0 %v302
  %393 = vmatprep.subr.bf16.mxu0 0
  %394 = vmatpush1.bf16.msra.mxu0 %v303
  %395 = vmatprep.subr.bf16.mxu0 0
  %396 = vmatpush1.bf16.msra.mxu0 %v304
  %397 = vmatprep.mubr.bf16.mxu0 %v138
  %398 = vmatmul.mubr.bf16.gmra.mrb[0].mxu0 %v124
  %v399 = vpop.f32.mrb[0].mxu0
  %v400 = vadd.f32 %v100, %v399
  %v401 = vpop.f32.mrb[0].mxu0
  %v402 = vpop.f32.mrb[0].mxu0
  %v403 = vpop.f32.mrb[0].mxu0
  %404 = vdwg.mxu0
  %405 = vmatprep.subr.bf16.mxu0 0
  %406 = vmatpush1.bf16.msra.mxu0 %v305
  %407 = vmatprep.subr.bf16.mxu0 0
  %408 = vmatpush1.bf16.msra.mxu0 %v306
  %409 = vmatprep.subr.bf16.mxu0 0
  %410 = vmatpush1.bf16.msra.mxu0 %v307
  %411 = vmatprep.subr.bf16.mxu0 0
  %412 = vmatpush1.bf16.msra.mxu0 %v308
  %413 = vmatprep.subr.bf16.mxu0 0
  %414 = vmatpush1.bf16.msra.mxu0 %v309
  %415 = vmatprep.subr.bf16.mxu0 0
  %416 = vmatpush1.bf16.msra.mxu0 %v310
  %417 = vmatprep.subr.bf16.mxu0 0
  %418 = vmatpush1.bf16.msra.mxu0 %v311
  %419 = vmatprep.subr.bf16.mxu0 0
  %420 = vmatpush1.bf16.msra.mxu0 %v312
  %421 = vmatprep.subr.bf16.mxu0 0
  %422 = vmatpush1.bf16.msra.mxu0 %v313
  %423 = vmatprep.subr.bf16.mxu0 0
  %424 = vmatpush1.bf16.msra.mxu0 %v314
  %425 = vmatprep.subr.bf16.mxu0 0
  %426 = vmatpush1.bf16.msra.mxu0 %v315
  %427 = vmatprep.subr.bf16.mxu0 0
  %428 = vmatpush1.bf16.msra.mxu0 %v316
  %429 = vmatprep.subr.bf16.mxu0 0
  %430 = vmatpush1.bf16.msra.mxu0 %v317
  %431 = vmatprep.subr.bf16.mxu0 0
  %432 = vmatpush1.bf16.msra.mxu0 %v318
  %433 = vmatprep.subr.bf16.mxu0 0
  %434 = vmatpush1.bf16.msra.mxu0 %v319
  %435 = vmatprep.subr.bf16.mxu0 0
  %436 = vmatpush1.bf16.msra.mxu0 %v320
  %437 = vmatprep.mubr.bf16.mxu0 %v140
  %438 = vmatmul.mubr.bf16.gmra.mrb[0].mxu0 %v139
  %v439 = vpop.f32.mrb[0].mxu0
  %v440 = vadd.f32 %v400, %v439
  %v441 = vpop.f32.mrb[0].mxu0
  %v442 = vpop.f32.mrb[0].mxu0
  %v443 = vpop.f32.mrb[0].mxu0
  %444 = vdwg.mxu0
  %445 = vmatprep.subr.bf16.mxu0 0
  %446 = vmatpush1.bf16.msra.mxu0 %v321
  %447 = vmatprep.subr.bf16.mxu0 0
  %448 = vmatpush1.bf16.msra.mxu0 %v322
  %449 = vmatprep.subr.bf16.mxu0 0
  %450 = vmatpush1.bf16.msra.mxu0 %v323
  %451 = vmatprep.subr.bf16.mxu0 0
  %452 = vmatpush1.bf16.msra.mxu0 %v324
  %453 = vmatprep.subr.bf16.mxu0 0
  %454 = vmatpush1.bf16.msra.mxu0 0
  %455 = vmatprep.subr.bf16.mxu0 0
  %456 = vmatpush1.bf16.msra.mxu0 0
  %457 = vmatprep.subr.bf16.mxu0 0
  %458 = vmatpush1.bf16.msra.mxu0 0
  %459 = vmatprep.subr.bf16.mxu0 0
  %460 = vmatpush1.bf16.msra.mxu0 0
  %461 = vmatprep.subr.bf16.mxu0 0
  %462 = vmatpush1.bf16.msra.mxu0 0
  %463 = vmatprep.subr.bf16.mxu0 0
  %464 = vmatpush1.bf16.msra.mxu0 0
  %465 = vmatprep.subr.bf16.mxu0 0
  %466 = vmatpush1.bf16.msra.mxu0 0
  %467 = vmatprep.subr.bf16.mxu0 0
  %468 = vmatpush1.bf16.msra.mxu0 0
  %469 = vmatprep.subr.bf16.mxu0 0
  %470 = vmatpush1.bf16.msra.mxu0 0
  %471 = vmatprep.subr.bf16.mxu0 0
  %472 = vmatpush1.bf16.msra.mxu0 0
  %473 = vmatprep.subr.bf16.mxu0 0
  %474 = vmatpush1.bf16.msra.mxu0 0
  %475 = vmatprep.subr.bf16.mxu0 0
  %476 = vmatpush1.bf16.msra.mxu0 0
  %477 = vmatprep.mubr.bf16.mxu0 0
  %478 = vmatmul.mubr.bf16.gmra.mrb[0].mxu0 %v363
  %v479 = vpop.f32.mrb[0].mxu0
  %v480 = vadd.f32 %v440, %v479
  %v481 = vpop.f32.mrb[0].mxu0
  %v482 = vpop.f32.mrb[0].mxu0
  %v483 = vpop.f32.mrb[0].mxu0
  %484 = vdwg.mxu0
  %vm485 = vcmp.gt.f32.partialorder %v480, 0.0
  %v486 = vmul.f32 %v480, 0.2
  %v487 = vsel %vm485, %v480, %v486
  %v488 = vlaneseq
  %v489 = vshrl.u32 %v488, 7
  %v490 = vsub.s32 0, %v489
  %v491 = vrot.slane %v94, %v490
  %v492 = vmul.f32 %v487, %v491
  %v493 = vlaneseq
  %v494 = vshrl.u32 %v493, 7
  %v495 = vsub.s32 0, %v494
  %v496 = vrot.slane %v95, %v495
  %v497 = vadd.f32 %v492, %v496
  %v498 = vpack.c.bf16 %v497, %v497
  %v499 = vld [vmem:[%s3] sm:$0xf]
  %v500 = vld [vmem:[%s3 + $0x4] sm:$0xf]
  %v501 = vld [vmem:[%s3 + $0x8] sm:$0xf]
  %v502 = vld [vmem:[%s3 + $0xc] sm:$0xf]
  %v503 = vld [vmem:[%s3 + $0x10] sm:$0xf]
  %v504 = vld [vmem:[%s3 + $0x14] sm:$0xf]
  %v505 = vld [vmem:[%s3 + $0x18] sm:$0xf]
  %v506 = vld [vmem:[%s3 + $0x1c] sm:$0xf]
  %v507 = vld [vmem:[%s3 + $0x20] sm:$0xf]
  %v508 = vld [vmem:[%s3 + $0x24] sm:$0xf]
  %v509 = vld [vmem:[%s3 + $0x28] sm:$0xf]
  %v510 = vld [vmem:[%s3 + $0x2c] sm:$0xf]
  %v511 = vld [vmem:[%s3 + $0x30] sm:$0xf]
  %v512 = vld [vmem:[%s3 + $0x34] sm:$0xf]
  %v513 = vld [vmem:[%s3 + $0x38] sm:$0xf]
  %v514 = vld [vmem:[%s3 + $0x3c] sm:$0xf]
  %s515 = scalar_lea.vmem %s0, 5
  %v516 = vld [vmem:[%s515] sm:$0x1f]
  %v518 = vcombine.high %v516, %v516
  %v520 = vunpack.c.l.s4 1966171168
  %v521 = vunpack.c.0.s8 %v520
  %v522 = vlaneseq
  %v523 = vshrl.u32 %v522, 7
  %v524 = vsub.s32 %v521, %v523
  %v525 = vrot.slane %v516, %v524
  %v527 = vunpack.c.l.s4 1966171168
  %v528 = vunpack.c.0.s8 %v527
  %v529 = vlaneseq
  %v530 = vshrl.u32 %v529, 7
  %v531 = vsub.s32 %v528, %v530
  %v532 = vrot.slane %v518, %v531
  %v533 = vcombine.high %v525, %v525
  %v535 = vunpack.c.l.s4 1966171168
  %v536 = vunpack.c.0.s8 %v535
  %v537 = vlaneseq
  %v538 = vshrl.u32 %v537, 7
  %v539 = vsub.s32 %v536, %v538
  %v540 = vrot.slane %v525, %v539
  %v542 = vunpack.c.l.s4 1966171168
  %v543 = vunpack.c.0.s8 %v542
  %v544 = vlaneseq
  %v545 = vshrl.u32 %v544, 7
  %v546 = vsub.s32 %v543, %v545
  %v547 = vrot.slane %v532, %v546
  %v549 = vunpack.c.l.s4 1966171168
  %v550 = vunpack.c.0.s8 %v549
  %v551 = vlaneseq
  %v552 = vshrl.u32 %v551, 7
  %v553 = vsub.s32 %v550, %v552
  %v554 = vrot.slane %v533, %v553
  %v555 = vcombine.high %v540, %v540
  %v556 = vcombine.high %v554, %v554
  %v562 = vsel %vm361, %v547, 0
  %564 = vmatprep.subr.bf16.mxu0 0
  %565 = vmatpush1.bf16.msra.mxu0 %v289
  %566 = vmatprep.subr.bf16.mxu0 0
  %567 = vmatpush1.bf16.msra.mxu0 %v290
  %568 = vmatprep.subr.bf16.mxu0 0
  %569 = vmatpush1.bf16.msra.mxu0 %v291
  %570 = vmatprep.subr.bf16.mxu0 0
  %571 = vmatpush1.bf16.msra.mxu0 %v292
  %572 = vmatprep.subr.bf16.mxu0 0
  %573 = vmatpush1.bf16.msra.mxu0 %v293
  %574 = vmatprep.subr.bf16.mxu0 0
  %575 = vmatpush1.bf16.msra.mxu0 %v294
  %576 = vmatprep.subr.bf16.mxu0 0
  %577 = vmatpush1.bf16.msra.mxu0 %v295
  %578 = vmatprep.subr.bf16.mxu0 0
  %579 = vmatpush1.bf16.msra.mxu0 %v296
  %580 = vmatprep.subr.bf16.mxu0 0
  %581 = vmatpush1.bf16.msra.mxu0 %v297
  %582 = vmatprep.subr.bf16.mxu0 0
  %583 = vmatpush1.bf16.msra.mxu0 %v298
  %584 = vmatprep.subr.bf16.mxu0 0
  %585 = vmatpush1.bf16.msra.mxu0 %v299
  %586 = vmatprep.subr.bf16.mxu0 0
  %587 = vmatpush1.bf16.msra.mxu0 %v300
  %588 = vmatprep.subr.bf16.mxu0 0
  %589 = vmatpush1.bf16.msra.mxu0 %v301
  %590 = vmatprep.subr.bf16.mxu0 0
  %591 = vmatpush1.bf16.msra.mxu0 %v302
  %592 = vmatprep.subr.bf16.mxu0 0
  %593 = vmatpush1.bf16.msra.mxu0 %v303
  %594 = vmatprep.subr.bf16.mxu0 0
  %595 = vmatpush1.bf16.msra.mxu0 %v304
  %596 = vmatprep.mubr.bf16.mxu0 %v554
  %597 = vmatmul.mubr.bf16.gmra.mrb[0].mxu0 %v540
  %v598 = vpop.f32.mrb[0].mxu0
  %v599 = vadd.f32 %v100, %v598
  %v600 = vpop.f32.mrb[0].mxu0
  %v601 = vpop.f32.mrb[0].mxu0
  %v602 = vpop.f32.mrb[0].mxu0
  %603 = vdwg.mxu0
  %604 = vmatprep.subr.bf16.mxu0 0
  %605 = vmatpush1.bf16.msra.mxu0 %v305
  %606 = vmatprep.subr.bf16.mxu0 0
  %607 = vmatpush1.bf16.msra.mxu0 %v306
  %608 = vmatprep.subr.bf16.mxu0 0
  %609 = vmatpush1.bf16.msra.mxu0 %v307
  %610 = vmatprep.subr.bf16.mxu0 0
  %611 = vmatpush1.bf16.msra.mxu0 %v308
  %612 = vmatprep.subr.bf16.mxu0 0
  %613 = vmatpush1.bf16.msra.mxu0 %v309
  %614 = vmatprep.subr.bf16.mxu0 0
  %615 = vmatpush1.bf16.msra.mxu0 %v310
  %616 = vmatprep.subr.bf16.mxu0 0
  %617 = vmatpush1.bf16.msra.mxu0 %v311
  %618 = vmatprep.subr.bf16.mxu0 0
  %619 = vmatpush1.bf16.msra.mxu0 %v312
  %620 = vmatprep.subr.bf16.mxu0 0
  %621 = vmatpush1.bf16.msra.mxu0 %v313
  %622 = vmatprep.subr.bf16.mxu0 0
  %623 = vmatpush1.bf16.msra.mxu0 %v314
  %624 = vmatprep.subr.bf16.mxu0 0
  %625 = vmatpush1.bf16.msra.mxu0 %v315
  %626 = vmatprep.subr.bf16.mxu0 0
  %627 = vmatpush1.bf16.msra.mxu0 %v316
  %628 = vmatprep.subr.bf16.mxu0 0
  %629 = vmatpush1.bf16.msra.mxu0 %v317
  %630 = vmatprep.subr.bf16.mxu0 0
  %631 = vmatpush1.bf16.msra.mxu0 %v318
  %632 = vmatprep.subr.bf16.mxu0 0
  %633 = vmatpush1.bf16.msra.mxu0 %v319
  %634 = vmatprep.subr.bf16.mxu0 0
  %635 = vmatpush1.bf16.msra.mxu0 %v320
  %636 = vmatprep.mubr.bf16.mxu0 %v556
  %637 = vmatmul.mubr.bf16.gmra.mrb[0].mxu0 %v555
  %v638 = vpop.f32.mrb[0].mxu0
  %v639 = vadd.f32 %v599, %v638
  %v640 = vpop.f32.mrb[0].mxu0
  %v641 = vpop.f32.mrb[0].mxu0
  %v642 = vpop.f32.mrb[0].mxu0
  %643 = vdwg.mxu0
  %644 = vmatprep.subr.bf16.mxu0 0
  %645 = vmatpush1.bf16.msra.mxu0 %v321
  %646 = vmatprep.subr.bf16.mxu0 0
  %647 = vmatpush1.bf16.msra.mxu0 %v322
  %648 = vmatprep.subr.bf16.mxu0 0
  %649 = vmatpush1.bf16.msra.mxu0 %v323
  %650 = vmatprep.subr.bf16.mxu0 0
  %651 = vmatpush1.bf16.msra.mxu0 %v324
  %652 = vmatprep.subr.bf16.mxu0 0
  %653 = vmatpush1.bf16.msra.mxu0 0
  %654 = vmatprep.subr.bf16.mxu0 0
  %655 = vmatpush1.bf16.msra.mxu0 0
  %656 = vmatprep.subr.bf16.mxu0 0
  %657 = vmatpush1.bf16.msra.mxu0 0
  %658 = vmatprep.subr.bf16.mxu0 0
  %659 = vmatpush1.bf16.msra.mxu0 0
  %660 = vmatprep.subr.bf16.mxu0 0
  %661 = vmatpush1.bf16.msra.mxu0 0
  %662 = vmatprep.subr.bf16.mxu0 0
  %663 = vmatpush1.bf16.msra.mxu0 0
  %664 = vmatprep.subr.bf16.mxu0 0
  %665 = vmatpush1.bf16.msra.mxu0 0
  %666 = vmatprep.subr.bf16.mxu0 0
  %667 = vmatpush1.bf16.msra.mxu0 0
  %668 = vmatprep.subr.bf16.mxu0 0
  %669 = vmatpush1.bf16.msra.mxu0 0
  %670 = vmatprep.subr.bf16.mxu0 0
  %671 = vmatpush1.bf16.msra.mxu0 0
  %672 = vmatprep.subr.bf16.mxu0 0
  %673 = vmatpush1.bf16.msra.mxu0 0
  %674 = vmatprep.subr.bf16.mxu0 0
  %675 = vmatpush1.bf16.msra.mxu0 0
  %676 = vmatprep.mubr.bf16.mxu0 0
  %677 = vmatmul.mubr.bf16.gmra.mrb[0].mxu0 %v562
  %v678 = vpop.f32.mrb[0].mxu0
  %v679 = vadd.f32 %v639, %v678
  %v680 = vpop.f32.mrb[0].mxu0
  %v681 = vpop.f32.mrb[0].mxu0
  %v682 = vpop.f32.mrb[0].mxu0
  %683 = vdwg.mxu0
  %vm684 = vcmp.gt.f32.partialorder %v679, 0.0
  %v685 = vmul.f32 %v679, 0.2
  %v686 = vsel %vm684, %v679, %v685
  %v687 = vmul.f32 %v686, %v491
  %v688 = vadd.f32 %v687, %v496
  %v689 = vpack.c.bf16 %v688, %v688
  %s690 = scalar_lea.vmem %s3, 64
  %v691 = vld [vmem:[%s690] sm:$0xf]
  %v692 = vld [vmem:[%s690 + $0x4] sm:$0xf]
  %v693 = vld [vmem:[%s690 + $0x8] sm:$0xf]
  %v694 = vld [vmem:[%s690 + $0xc] sm:$0xf]
  %v695 = vld [vmem:[%s690 + $0x10] sm:$0xf]
  %v696 = vld [vmem:[%s690 + $0x14] sm:$0xf]
  %v697 = vld [vmem:[%s690 + $0x18] sm:$0xf]
  %v698 = vld [vmem:[%s690 + $0x1c] sm:$0xf]
  %v699 = vld [vmem:[%s690 + $0x20] sm:$0xf]
  %v700 = vld [vmem:[%s690 + $0x24] sm:$0xf]
  %v701 = vld [vmem:[%s690 + $0x28] sm:$0xf]
  %v702 = vld [vmem:[%s690 + $0x2c] sm:$0xf]
  %v703 = vld [vmem:[%s690 + $0x30] sm:$0xf]
  %v704 = vld [vmem:[%s690 + $0x34] sm:$0xf]
  %v705 = vld [vmem:[%s690 + $0x38] sm:$0xf]
  %v706 = vld [vmem:[%s690 + $0x3c] sm:$0xf]
  %v723 = vunpack.c.l.b16 %v691
  %v724 = vunpack.c.l.b16 %v692
  %v725 = vunpack.c.l.b16 %v693
  %v726 = vunpack.c.l.b16 %v694
  %v727 = vunpack.c.l.b16 %v695
  %v728 = vunpack.c.l.b16 %v696
  %v729 = vunpack.c.l.b16 %v697
  %v730 = vunpack.c.l.b16 %v698
  %v731 = vunpack.c.l.b16 %v699
  %v732 = vunpack.c.l.b16 %v700
  %v733 = vunpack.c.l.b16 %v701
  %v734 = vunpack.c.l.b16 %v702
  %v735 = vunpack.c.l.b16 %v703
  %v736 = vunpack.c.l.b16 %v704
  %v737 = vunpack.c.l.b16 %v705
  %v738 = vunpack.c.l.b16 %v706
  %v739 = vpack.c.b16 %v724, %v723
  %v740 = vpack.c.b16 %v726, %v725
  %v741 = vpack.c.b16 %v728, %v727
  %v742 = vpack.c.b16 %v730, %v729
  %v743 = vpack.c.b16 %v732, %v731
  %v744 = vpack.c.b16 %v734, %v733
  %v745 = vpack.c.b16 %v736, %v735
  %v746 = vpack.c.b16 %v738, %v737
  %755 = vmatprep.subr.bf16.mxu0 0
  %756 = vmatpush1.bf16.msra.mxu0 %v739
  %757 = vmatprep.subr.bf16.mxu0 0
  %758 = vmatpush1.bf16.msra.mxu0 %v740
  %759 = vmatprep.subr.bf16.mxu0 0
  %760 = vmatpush1.bf16.msra.mxu0 %v741
  %761 = vmatprep.subr.bf16.mxu0 0
  %762 = vmatpush1.bf16.msra.mxu0 %v742
  %763 = vmatprep.subr.bf16.mxu0 0
  %764 = vmatpush1.bf16.msra.mxu0 %v743
  %765 = vmatprep.subr.bf16.mxu0 0
  %766 = vmatpush1.bf16.msra.mxu0 %v744
  %767 = vmatprep.subr.bf16.mxu0 0
  %768 = vmatpush1.bf16.msra.mxu0 %v745
  %769 = vmatprep.subr.bf16.mxu0 0
  %770 = vmatpush1.bf16.msra.mxu0 %v746
  %771 = vmatprep.subr.bf16.mxu0 0
  %772 = vmatpush1.bf16.msra.mxu0 0
  %773 = vmatprep.subr.bf16.mxu0 0
  %774 = vmatpush1.bf16.msra.mxu0 0
  %775 = vmatprep.subr.bf16.mxu0 0
  %776 = vmatpush1.bf16.msra.mxu0 0
  %777 = vmatprep.subr.bf16.mxu0 0
  %778 = vmatpush1.bf16.msra.mxu0 0
  %779 = vmatprep.subr.bf16.mxu0 0
  %780 = vmatpush1.bf16.msra.mxu0 0
  %781 = vmatprep.subr.bf16.mxu0 0
  %782 = vmatpush1.bf16.msra.mxu0 0
  %783 = vmatprep.subr.bf16.mxu0 0
  %784 = vmatpush1.bf16.msra.mxu0 0
  %785 = vmatprep.subr.bf16.mxu0 0
  %786 = vmatpush1.bf16.msra.mxu0 0
  %787 = vmatprep.mubr.bf16.mxu0 0
  %788 = vmatmul.mubr.bf16.gmra.mrb[0].mxu0 %v689
  %v789 = vpop.f32.mrb[0].mxu0
  %v790 = vadd.f32 0.0, %v789
  %v791 = vpop.f32.mrb[0].mxu0
  %v792 = vpop.f32.mrb[0].mxu0
  %v793 = vpop.f32.mrb[0].mxu0
  %794 = vdwg.mxu0
  %v811 = vunpack.c.l.b16 %v499
  %v812 = vunpack.c.l.b16 %v500
  %v813 = vunpack.c.l.b16 %v501
  %v814 = vunpack.c.l.b16 %v502
  %v815 = vunpack.c.l.b16 %v503
  %v816 = vunpack.c.l.b16 %v504
  %v817 = vunpack.c.l.b16 %v505
  %v818 = vunpack.c.l.b16 %v506
  %v819 = vunpack.c.l.b16 %v507
  %v820 = vunpack.c.l.b16 %v508
  %v821 = vunpack.c.l.b16 %v509
  %v822 = vunpack.c.l.b16 %v510
  %v823 = vunpack.c.l.b16 %v511
  %v824 = vunpack.c.l.b16 %v512
  %v825 = vunpack.c.l.b16 %v513
  %v826 = vunpack.c.l.b16 %v514
  %v827 = vpack.c.b16 %v812, %v811
  %v828 = vpack.c.b16 %v814, %v813
  %v829 = vpack.c.b16 %v816, %v815
  %v830 = vpack.c.b16 %v818, %v817
  %v831 = vpack.c.b16 %v820, %v819
  %v832 = vpack.c.b16 %v822, %v821
  %v833 = vpack.c.b16 %v824, %v823
  %v834 = vpack.c.b16 %v826, %v825
  %843 = vmatprep.subr.bf16.mxu0 0
  %844 = vmatpush1.bf16.msra.mxu0 %v827
  %845 = vmatprep.subr.bf16.mxu0 0
  %846 = vmatpush1.bf16.msra.mxu0 %v828
  %847 = vmatprep.subr.bf16.mxu0 0
  %848 = vmatpush1.bf16.msra.mxu0 %v829
  %849 = vmatprep.subr.bf16.mxu0 0
  %850 = vmatpush1.bf16.msra.mxu0 %v830
  %851 = vmatprep.subr.bf16.mxu0 0
  %852 = vmatpush1.bf16.msra.mxu0 %v831
  %853 = vmatprep.subr.bf16.mxu0 0
  %854 = vmatpush1.bf16.msra.mxu0 %v832
  %855 = vmatprep.subr.bf16.mxu0 0
  %856 = vmatpush1.bf16.msra.mxu0 %v833
  %857 = vmatprep.subr.bf16.mxu0 0
  %858 = vmatpush1.bf16.msra.mxu0 %v834
  %859 = vmatprep.subr.bf16.mxu0 0
  %860 = vmatpush1.bf16.msra.mxu0 0
  %861 = vmatprep.subr.bf16.mxu0 0
  %862 = vmatpush1.bf16.msra.mxu0 0
  %863 = vmatprep.subr.bf16.mxu0 0
  %864 = vmatpush1.bf16.msra.mxu0 0
  %865 = vmatprep.subr.bf16.mxu0 0
  %866 = vmatpush1.bf16.msra.mxu0 0
  %867 = vmatprep.subr.bf16.mxu0 0
  %868 = vmatpush1.bf16.msra.mxu0 0
  %869 = vmatprep.subr.bf16.mxu0 0
  %870 = vmatpush1.bf16.msra.mxu0 0
  %871 = vmatprep.subr.bf16.mxu0 0
  %872 = vmatpush1.bf16.msra.mxu0 0
  %873 = vmatprep.subr.bf16.mxu0 0
  %874 = vmatpush1.bf16.msra.mxu0 0
  %875 = vmatprep.mubr.bf16.mxu0 0
  %876 = vmatmul.mubr.bf16.gmra.mrb[0].mxu0 %v498
  %v877 = vpop.f32.mrb[0].mxu0
  %v878 = vadd.f32 %v790, %v877
  %v879 = vpop.f32.mrb[0].mxu0
  %v880 = vpop.f32.mrb[0].mxu0
  %v881 = vpop.f32.mrb[0].mxu0
  %882 = vdwg.mxu0
  %s883 = scalar_lea.vmem %s0, 10
  %v884 = vld [vmem:[%s883] sm:$0x1f]
  %v886 = vcombine.high %v884, %v884
  %v888 = vunpack.c.l.s4 1966171168
  %v889 = vunpack.c.0.s8 %v888
  %v890 = vlaneseq
  %v891 = vshrl.u32 %v890, 7
  %v892 = vsub.s32 %v889, %v891
  %v893 = vrot.slane %v884, %v892
  %v895 = vunpack.c.l.s4 1966171168
  %v896 = vunpack.c.0.s8 %v895
  %v897 = vlaneseq
  %v898 = vshrl.u32 %v897, 7
  %v899 = vsub.s32 %v896, %v898
  %v900 = vrot.slane %v886, %v899
  %v901 = vcombine.high %v893, %v893
  %v903 = vunpack.c.l.s4 1966171168
  %v904 = vunpack.c.0.s8 %v903
  %v905 = vlaneseq
  %v906 = vshrl.u32 %v905, 7
  %v907 = vsub.s32 %v904, %v906
  %v908 = vrot.slane %v893, %v907
  %v910 = vunpack.c.l.s4 1966171168
  %v911 = vunpack.c.0.s8 %v910
  %v912 = vlaneseq
  %v913 = vshrl.u32 %v912, 7
  %v914 = vsub.s32 %v911, %v913
  %v915 = vrot.slane %v900, %v914
  %v917 = vunpack.c.l.s4 1966171168
  %v918 = vunpack.c.0.s8 %v917
  %v919 = vlaneseq
  %v920 = vshrl.u32 %v919, 7
  %v921 = vsub.s32 %v918, %v920
  %v922 = vrot.slane %v901, %v921
  %v923 = vcombine.high %v908, %v908
  %v924 = vcombine.high %v922, %v922
  %v930 = vsel %vm361, %v915, 0
  %932 = vmatprep.subr.bf16.mxu0 0
  %933 = vmatpush1.bf16.msra.mxu0 %v289
  %934 = vmatprep.subr.bf16.mxu0 0
  %935 = vmatpush1.bf16.msra.mxu0 %v290
  %936 = vmatprep.subr.bf16.mxu0 0
  %937 = vmatpush1.bf16.msra.mxu0 %v291
  %938 = vmatprep.subr.bf16.mxu0 0
  %939 = vmatpush1.bf16.msra.mxu0 %v292
  %940 = vmatprep.subr.bf16.mxu0 0
  %941 = vmatpush1.bf16.msra.mxu0 %v293
  %942 = vmatprep.subr.bf16.mxu0 0
  %943 = vmatpush1.bf16.msra.mxu0 %v294
  %944 = vmatprep.subr.bf16.mxu0 0
  %945 = vmatpush1.bf16.msra.mxu0 %v295
  %946 = vmatprep.subr.bf16.mxu0 0
  %947 = vmatpush1.bf16.msra.mxu0 %v296
  %948 = vmatprep.subr.bf16.mxu0 0
  %949 = vmatpush1.bf16.msra.mxu0 %v297
  %950 = vmatprep.subr.bf16.mxu0 0
  %951 = vmatpush1.bf16.msra.mxu0 %v298
  %952 = vmatprep.subr.bf16.mxu0 0
  %953 = vmatpush1.bf16.msra.mxu0 %v299
  %954 = vmatprep.subr.bf16.mxu0 0
  %955 = vmatpush1.bf16.msra.mxu0 %v300
  %956 = vmatprep.subr.bf16.mxu0 0
  %957 = vmatpush1.bf16.msra.mxu0 %v301
  %958 = vmatprep.subr.bf16.mxu0 0
  %959 = vmatpush1.bf16.msra.mxu0 %v302
  %960 = vmatprep.subr.bf16.mxu0 0
  %961 = vmatpush1.bf16.msra.mxu0 %v303
  %962 = vmatprep.subr.bf16.mxu0 0
  %963 = vmatpush1.bf16.msra.mxu0 %v304
  %964 = vmatprep.mubr.bf16.mxu0 %v922
  %965 = vmatmul.mubr.bf16.gmra.mrb[0].mxu0 %v908
  %v966 = vpop.f32.mrb[0].mxu0
  %v967 = vadd.f32 %v100, %v966
  %v968 = vpop.f32.mrb[0].mxu0
  %v969 = vpop.f32.mrb[0].mxu0
  %v970 = vpop.f32.mrb[0].mxu0
  %971 = vdwg.mxu0
  %972 = vmatprep.subr.bf16.mxu0 0
  %973 = vmatpush1.bf16.msra.mxu0 %v305
  %974 = vmatprep.subr.bf16.mxu0 0
  %975 = vmatpush1.bf16.msra.mxu0 %v306
  %976 = vmatprep.subr.bf16.mxu0 0
  %977 = vmatpush1.bf16.msra.mxu0 %v307
  %978 = vmatprep.subr.bf16.mxu0 0
  %979 = vmatpush1.bf16.msra.mxu0 %v308
  %980 = vmatprep.subr.bf16.mxu0 0
  %981 = vmatpush1.bf16.msra.mxu0 %v309
  %982 = vmatprep.subr.bf16.mxu0 0
  %983 = vmatpush1.bf16.msra.mxu0 %v310
  %984 = vmatprep.subr.bf16.mxu0 0
  %985 = vmatpush1.bf16.msra.mxu0 %v311
  %986 = vmatprep.subr.bf16.mxu0 0
  %987 = vmatpush1.bf16.msra.mxu0 %v312
  %988 = vmatprep.subr.bf16.mxu0 0
  %989 = vmatpush1.bf16.msra.mxu0 %v313
  %990 = vmatprep.subr.bf16.mxu0 0
  %991 = vmatpush1.bf16.msra.mxu0 %v314
  %992 = vmatprep.subr.bf16.mxu0 0
  %993 = vmatpush1.bf16.msra.mxu0 %v315
  %994 = vmatprep.subr.bf16.mxu0 0
  %995 = vmatpush1.bf16.msra.mxu0 %v316
  %996 = vmatprep.subr.bf16.mxu0 0
  %997 = vmatpush1.bf16.msra.mxu0 %v317
  %998 = vmatprep.subr.bf16.mxu0 0
  %999 = vmatpush1.bf16.msra.mxu0 %v318
  %1000 = vmatprep.subr.bf16.mxu0 0
  %1001 = vmatpush1.bf16.msra.mxu0 %v319
  %1002 = vmatprep.subr.bf16.mxu0 0
  %1003 = vmatpush1.bf16.msra.mxu0 %v320
  %1004 = vmatprep.mubr.bf16.mxu0 %v924
  %1005 = vmatmul.mubr.bf16.gmra.mrb[0].mxu0 %v923
  %v1006 = vpop.f32.mrb[0].mxu0
  %v1007 = vadd.f32 %v967, %v1006
  %v1008 = vpop.f32.mrb[0].mxu0
  %v1009 = vpop.f32.mrb[0].mxu0
  %v1010 = vpop.f32.mrb[0].mxu0
  %1011 = vdwg.mxu0
  %1012 = vmatprep.subr.bf16.mxu0 0
  %1013 = vmatpush1.bf16.msra.mxu0 %v321
  %1014 = vmatprep.subr.bf16.mxu0 0
  %1015 = vmatpush1.bf16.msra.mxu0 %v322
  %1016 = vmatprep.subr.bf16.mxu0 0
  %1017 = vmatpush1.bf16.msra.mxu0 %v323
  %1018 = vmatprep.subr.bf16.mxu0 0
  %1019 = vmatpush1.bf16.msra.mxu0 %v324
  %1020 = vmatprep.subr.bf16.mxu0 0
  %1021 = vmatpush1.bf16.msra.mxu0 0
  %1022 = vmatprep.subr.bf16.mxu0 0
  %1023 = vmatpush1.bf16.msra.mxu0 0
  %1024 = vmatprep.subr.bf16.mxu0 0
  %1025 = vmatpush1.bf16.msra.mxu0 0
  %1026 = vmatprep.subr.bf16.mxu0 0
  %1027 = vmatpush1.bf16.msra.mxu0 0
  %1028 = vmatprep.subr.bf16.mxu0 0
  %1029 = vmatpush1.bf16.msra.mxu0 0
  %1030 = vmatprep.subr.bf16.mxu0 0
  %1031 = vmatpush1.bf16.msra.mxu0 0
  %1032 = vmatprep.subr.bf16.mxu0 0
  %1033 = vmatpush1.bf16.msra.mxu0 0
  %1034 = vmatprep.subr.bf16.mxu0 0
  %1035 = vmatpush1.bf16.msra.mxu0 0
  %1036 = vmatprep.subr.bf16.mxu0 0
  %1037 = vmatpush1.bf16.msra.mxu0 0
  %1038 = vmatprep.subr.bf16.mxu0 0
  %1039 = vmatpush1.bf16.msra.mxu0 0
  %1040 = vmatprep.subr.bf16.mxu0 0
  %1041 = vmatpush1.bf16.msra.mxu0 0
  %1042 = vmatprep.subr.bf16.mxu0 0
  %1043 = vmatpush1.bf16.msra.mxu0 0
  %1044 = vmatprep.mubr.bf16.mxu0 0
  %1045 = vmatmul.mubr.bf16.gmra.mrb[0].mxu0 %v930
  %v1046 = vpop.f32.mrb[0].mxu0
  %v1047 = vadd.f32 %v1007, %v1046
  %v1048 = vpop.f32.mrb[0].mxu0
  %v1049 = vpop.f32.mrb[0].mxu0
  %v1050 = vpop.f32.mrb[0].mxu0
  %1051 = vdwg.mxu0
  %vm1052 = vcmp.gt.f32.partialorder %v1047, 0.0
  %v1053 = vmul.f32 %v1047, 0.2
  %v1054 = vsel %vm1052, %v1047, %v1053
  %v1055 = vmul.f32 %v1054, %v491
  %v1056 = vadd.f32 %v1055, %v496
  %v1057 = vpack.c.bf16 %v1056, %v1056
  %s1058 = scalar_lea.vmem %s3, 128
  %v1059 = vld [vmem:[%s1058] sm:$0xf]
  %v1060 = vld [vmem:[%s1058 + $0x4] sm:$0xf]
  %v1061 = vld [vmem:[%s1058 + $0x8] sm:$0xf]
  %v1062 = vld [vmem:[%s1058 + $0xc] sm:$0xf]
  %v1063 = vld [vmem:[%s1058 + $0x10] sm:$0xf]
  %v1064 = vld [vmem:[%s1058 + $0x14] sm:$0xf]
  %v1065 = vld [vmem:[%s1058 + $0x18] sm:$0xf]
  %v1066 = vld [vmem:[%s1058 + $0x1c] sm:$0xf]
  %v1067 = vld [vmem:[%s1058 + $0x20] sm:$0xf]
  %v1068 = vld [vmem:[%s1058 + $0x24] sm:$0xf]
  %v1069 = vld [vmem:[%s1058 + $0x28] sm:$0xf]
  %v1070 = vld [vmem:[%s1058 + $0x2c] sm:$0xf]
  %v1071 = vld [vmem:[%s1058 + $0x30] sm:$0xf]
  %v1072 = vld [vmem:[%s1058 + $0x34] sm:$0xf]
  %v1073 = vld [vmem:[%s1058 + $0x38] sm:$0xf]
  %v1074 = vld [vmem:[%s1058 + $0x3c] sm:$0xf]
  %v1091 = vunpack.c.l.b16 %v1059
  %v1092 = vunpack.c.l.b16 %v1060
  %v1093 = vunpack.c.l.b16 %v1061
  %v1094 = vunpack.c.l.b16 %v1062
  %v1095 = vunpack.c.l.b16 %v1063
  %v1096 = vunpack.c.l.b16 %v1064
  %v1097 = vunpack.c.l.b16 %v1065
  %v1098 = vunpack.c.l.b16 %v1066
  %v1099 = vunpack.c.l.b16 %v1067
  %v1100 = vunpack.c.l.b16 %v1068
  %v1101 = vunpack.c.l.b16 %v1069
  %v1102 = vunpack.c.l.b16 %v1070
  %v1103 = vunpack.c.l.b16 %v1071
  %v1104 = vunpack.c.l.b16 %v1072
  %v1105 = vunpack.c.l.b16 %v1073
  %v1106 = vunpack.c.l.b16 %v1074
  %v1107 = vpack.c.b16 %v1092, %v1091
  %v1108 = vpack.c.b16 %v1094, %v1093
  %v1109 = vpack.c.b16 %v1096, %v1095
  %v1110 = vpack.c.b16 %v1098, %v1097
  %v1111 = vpack.c.b16 %v1100, %v1099
  %v1112 = vpack.c.b16 %v1102, %v1101
  %v1113 = vpack.c.b16 %v1104, %v1103
  %v1114 = vpack.c.b16 %v1106, %v1105
  %1123 = vmatprep.subr.bf16.mxu0 0
  %1124 = vmatpush1.bf16.msra.mxu0 %v1107
  %1125 = vmatprep.subr.bf16.mxu0 0
  %1126 = vmatpush1.bf16.msra.mxu0 %v1108
  %1127 = vmatprep.subr.bf16.mxu0 0
  %1128 = vmatpush1.bf16.msra.mxu0 %v1109
  %1129 = vmatprep.subr.bf16.mxu0 0
  %1130 = vmatpush1.bf16.msra.mxu0 %v1110
  %1131 = vmatprep.subr.bf16.mxu0 0
  %1132 = vmatpush1.bf16.msra.mxu0 %v1111
  %1133 = vmatprep.subr.bf16.mxu0 0
  %1134 = vmatpush1.bf16.msra.mxu0 %v1112
  %1135 = vmatprep.subr.bf16.mxu0 0
  %1136 = vmatpush1.bf16.msra.mxu0 %v1113
  %1137 = vmatprep.subr.bf16.mxu0 0
  %1138 = vmatpush1.bf16.msra.mxu0 %v1114
  %1139 = vmatprep.subr.bf16.mxu0 0
  %1140 = vmatpush1.bf16.msra.mxu0 0
  %1141 = vmatprep.subr.bf16.mxu0 0
  %1142 = vmatpush1.bf16.msra.mxu0 0
  %1143 = vmatprep.subr.bf16.mxu0 0
  %1144 = vmatpush1.bf16.msra.mxu0 0
  %1145 = vmatprep.subr.bf16.mxu0 0
  %1146 = vmatpush1.bf16.msra.mxu0 0
  %1147 = vmatprep.subr.bf16.mxu0 0
  %1148 = vmatpush1.bf16.msra.mxu0 0
  %1149 = vmatprep.subr.bf16.mxu0 0
  %1150 = vmatpush1.bf16.msra.mxu0 0
  %1151 = vmatprep.subr.bf16.mxu0 0
  %1152 = vmatpush1.bf16.msra.mxu0 0
  %1153 = vmatprep.subr.bf16.mxu0 0
  %1154 = vmatpush1.bf16.msra.mxu0 0
  %1155 = vmatprep.mubr.bf16.mxu0 0
  %1156 = vmatmul.mubr.bf16.gmra.mrb[0].mxu0 %v1057
  %v1157 = vpop.f32.mrb[0].mxu0
  %v1158 = vadd.f32 0.0, %v1157
  %v1159 = vpop.f32.mrb[0].mxu0
  %v1160 = vpop.f32.mrb[0].mxu0
  %v1161 = vpop.f32.mrb[0].mxu0
  %1162 = vdwg.mxu0
  %v1163 = vadd.f32 %v878, %v1158
  %s1164 = scalar_lea.vmem %s0, 15
  %v1165 = vld [vmem:[%s1164] sm:$0x1f]
  %v1167 = vcombine.high %v1165, %v1165
  %v1169 = vunpack.c.l.s4 1966171168
  %v1170 = vunpack.c.0.s8 %v1169
  %v1171 = vlaneseq
  %v1172 = vshrl.u32 %v1171, 7
  %v1173 = vsub.s32 %v1170, %v1172
  %v1174 = vrot.slane %v1165, %v1173
  %v1176 = vunpack.c.l.s4 1966171168
  %v1177 = vunpack.c.0.s8 %v1176
  %v1178 = vlaneseq
  %v1179 = vshrl.u32 %v1178, 7
  %v1180 = vsub.s32 %v1177, %v1179
  %v1181 = vrot.slane %v1167, %v1180
  %v1182 = vcombine.high %v1174, %v1174
  %v1184 = vunpack.c.l.s4 1966171168
  %v1185 = vunpack.c.0.s8 %v1184
  %v1186 = vlaneseq
  %v1187 = vshrl.u32 %v1186, 7
  %v1188 = vsub.s32 %v1185, %v1187
  %v1189 = vrot.slane %v1174, %v1188
  %v1191 = vunpack.c.l.s4 1966171168
  %v1192 = vunpack.c.0.s8 %v1191
  %v1193 = vlaneseq
  %v1194 = vshrl.u32 %v1193, 7
  %v1195 = vsub.s32 %v1192, %v1194
  %v1196 = vrot.slane %v1181, %v1195
  %v1198 = vunpack.c.l.s4 1966171168
  %v1199 = vunpack.c.0.s8 %v1198
  %v1200 = vlaneseq
  %v1201 = vshrl.u32 %v1200, 7
  %v1202 = vsub.s32 %v1199, %v1201
  %v1203 = vrot.slane %v1182, %v1202
  %v1204 = vcombine.high %v1189, %v1189
  %v1205 = vcombine.high %v1203, %v1203
  %v1211 = vsel %vm361, %v1196, 0
  %1213 = vmatprep.subr.bf16.mxu0 0
  %1214 = vmatpush1.bf16.msra.mxu0 %v289
  %1215 = vmatprep.subr.bf16.mxu0 0
  %1216 = vmatpush1.bf16.msra.mxu0 %v290
  %1217 = vmatprep.subr.bf16.mxu0 0
  %1218 = vmatpush1.bf16.msra.mxu0 %v291
  %1219 = vmatprep.subr.bf16.mxu0 0
  %1220 = vmatpush1.bf16.msra.mxu0 %v292
  %1221 = vmatprep.subr.bf16.mxu0 0
  %1222 = vmatpush1.bf16.msra.mxu0 %v293
  %1223 = vmatprep.subr.bf16.mxu0 0
  %1224 = vmatpush1.bf16.msra.mxu0 %v294
  %1225 = vmatprep.subr.bf16.mxu0 0
  %1226 = vmatpush1.bf16.msra.mxu0 %v295
  %1227 = vmatprep.subr.bf16.mxu0 0
  %1228 = vmatpush1.bf16.msra.mxu0 %v296
  %1229 = vmatprep.subr.bf16.mxu0 0
  %1230 = vmatpush1.bf16.msra.mxu0 %v297
  %1231 = vmatprep.subr.bf16.mxu0 0
  %1232 = vmatpush1.bf16.msra.mxu0 %v298
  %1233 = vmatprep.subr.bf16.mxu0 0
  %1234 = vmatpush1.bf16.msra.mxu0 %v299
  %1235 = vmatprep.subr.bf16.mxu0 0
  %1236 = vmatpush1.bf16.msra.mxu0 %v300
  %1237 = vmatprep.subr.bf16.mxu0 0
  %1238 = vmatpush1.bf16.msra.mxu0 %v301
  %1239 = vmatprep.subr.bf16.mxu0 0
  %1240 = vmatpush1.bf16.msra.mxu0 %v302
  %1241 = vmatprep.subr.bf16.mxu0 0
  %1242 = vmatpush1.bf16.msra.mxu0 %v303
  %1243 = vmatprep.subr.bf16.mxu0 0
  %1244 = vmatpush1.bf16.msra.mxu0 %v304
  %1245 = vmatprep.mubr.bf16.mxu0 %v1203
  %1246 = vmatmul.mubr.bf16.gmra.mrb[0].mxu0 %v1189
  %v1247 = vpop.f32.mrb[0].mxu0
  %v1248 = vadd.f32 %v100, %v1247
  %v1249 = vpop.f32.mrb[0].mxu0
  %v1250 = vpop.f32.mrb[0].mxu0
  %v1251 = vpop.f32.mrb[0].mxu0
  %1252 = vdwg.mxu0
  %1253 = vmatprep.subr.bf16.mxu0 0
  %1254 = vmatpush1.bf16.msra.mxu0 %v305
  %1255 = vmatprep.subr.bf16.mxu0 0
  %1256 = vmatpush1.bf16.msra.mxu0 %v306
  %1257 = vmatprep.subr.bf16.mxu0 0
  %1258 = vmatpush1.bf16.msra.mxu0 %v307
  %1259 = vmatprep.subr.bf16.mxu0 0
  %1260 = vmatpush1.bf16.msra.mxu0 %v308
  %1261 = vmatprep.subr.bf16.mxu0 0
  %1262 = vmatpush1.bf16.msra.mxu0 %v309
  %1263 = vmatprep.subr.bf16.mxu0 0
  %1264 = vmatpush1.bf16.msra.mxu0 %v310
  %1265 = vmatprep.subr.bf16.mxu0 0
  %1266 = vmatpush1.bf16.msra.mxu0 %v311
  %1267 = vmatprep.subr.bf16.mxu0 0
  %1268 = vmatpush1.bf16.msra.mxu0 %v312
  %1269 = vmatprep.subr.bf16.mxu0 0
  %1270 = vmatpush1.bf16.msra.mxu0 %v313
  %1271 = vmatprep.subr.bf16.mxu0 0
  %1272 = vmatpush1.bf16.msra.mxu0 %v314
  %1273 = vmatprep.subr.bf16.mxu0 0
  %1274 = vmatpush1.bf16.msra.mxu0 %v315
  %1275 = vmatprep.subr.bf16.mxu0 0
  %1276 = vmatpush1.bf16.msra.mxu0 %v316
  %1277 = vmatprep.subr.bf16.mxu0 0
  %1278 = vmatpush1.bf16.msra.mxu0 %v317
  %1279 = vmatprep.subr.bf16.mxu0 0
  %1280 = vmatpush1.bf16.msra.mxu0 %v318
  %1281 = vmatprep.subr.bf16.mxu0 0
  %1282 = vmatpush1.bf16.msra.mxu0 %v319
  %1283 = vmatprep.subr.bf16.mxu0 0
  %1284 = vmatpush1.bf16.msra.mxu0 %v320
  %1285 = vmatprep.mubr.bf16.mxu0 %v1205
  %1286 = vmatmul.mubr.bf16.gmra.mrb[0].mxu0 %v1204
  %v1287 = vpop.f32.mrb[0].mxu0
  %v1288 = vadd.f32 %v1248, %v1287
  %v1289 = vpop.f32.mrb[0].mxu0
  %v1290 = vpop.f32.mrb[0].mxu0
  %v1291 = vpop.f32.mrb[0].mxu0
  %1292 = vdwg.mxu0
  %1293 = vmatprep.subr.bf16.mxu0 0
  %1294 = vmatpush1.bf16.msra.mxu0 %v321
  %1295 = vmatprep.subr.bf16.mxu0 0
  %1296 = vmatpush1.bf16.msra.mxu0 %v322
  %1297 = vmatprep.subr.bf16.mxu0 0
  %1298 = vmatpush1.bf16.msra.mxu0 %v323
  %1299 = vmatprep.subr.bf16.mxu0 0
  %1300 = vmatpush1.bf16.msra.mxu0 %v324
  %1301 = vmatprep.subr.bf16.mxu0 0
  %1302 = vmatpush1.bf16.msra.mxu0 0
  %1303 = vmatprep.subr.bf16.mxu0 0
  %1304 = vmatpush1.bf16.msra.mxu0 0
  %1305 = vmatprep.subr.bf16.mxu0 0
  %1306 = vmatpush1.bf16.msra.mxu0 0
  %1307 = vmatprep.subr.bf16.mxu0 0
  %1308 = vmatpush1.bf16.msra.mxu0 0
  %1309 = vmatprep.subr.bf16.mxu0 0
  %1310 = vmatpush1.bf16.msra.mxu0 0
  %1311 = vmatprep.subr.bf16.mxu0 0
  %1312 = vmatpush1.bf16.msra.mxu0 0
  %1313 = vmatprep.subr.bf16.mxu0 0
  %1314 = vmatpush1.bf16.msra.mxu0 0
  %1315 = vmatprep.subr.bf16.mxu0 0
  %1316 = vmatpush1.bf16.msra.mxu0 0
  %1317 = vmatprep.subr.bf16.mxu0 0
  %1318 = vmatpush1.bf16.msra.mxu0 0
  %1319 = vmatprep.subr.bf16.mxu0 0
  %1320 = vmatpush1.bf16.msra.mxu0 0
  %1321 = vmatprep.subr.bf16.mxu0 0
  %1322 = vmatpush1.bf16.msra.mxu0 0
  %1323 = vmatprep.subr.bf16.mxu0 0
  %1324 = vmatpush1.bf16.msra.mxu0 0
  %1325 = vmatprep.mubr.bf16.mxu0 0
  %1326 = vmatmul.mubr.bf16.gmra.mrb[0].mxu0 %v1211
  %v1327 = vpop.f32.mrb[0].mxu0
  %v1328 = vadd.f32 %v1288, %v1327
  %v1329 = vpop.f32.mrb[0].mxu0
  %v1330 = vpop.f32.mrb[0].mxu0
  %v1331 = vpop.f32.mrb[0].mxu0
  %1332 = vdwg.mxu0
  %vm1333 = vcmp.gt.f32.partialorder %v1328, 0.0
  %v1334 = vmul.f32 %v1328, 0.2
  %v1335 = vsel %vm1333, %v1328, %v1334
  %v1336 = vmul.f32 %v1335, %v491
  %v1337 = vadd.f32 %v1336, %v496
  %v1338 = vpack.c.bf16 %v1337, %v1337
  %s1339 = scalar_lea.vmem %s3, 192
  %v1340 = vld [vmem:[%s1339] sm:$0xf]
  %v1341 = vld [vmem:[%s1339 + $0x4] sm:$0xf]
  %v1342 = vld [vmem:[%s1339 + $0x8] sm:$0xf]
  %v1343 = vld [vmem:[%s1339 + $0xc] sm:$0xf]
  %v1344 = vld [vmem:[%s1339 + $0x10] sm:$0xf]
  %v1345 = vld [vmem:[%s1339 + $0x14] sm:$0xf]
  %v1346 = vld [vmem:[%s1339 + $0x18] sm:$0xf]
  %v1347 = vld [vmem:[%s1339 + $0x1c] sm:$0xf]
  %v1348 = vld [vmem:[%s1339 + $0x20] sm:$0xf]
  %v1349 = vld [vmem:[%s1339 + $0x24] sm:$0xf]
  %v1350 = vld [vmem:[%s1339 + $0x28] sm:$0xf]
  %v1351 = vld [vmem:[%s1339 + $0x2c] sm:$0xf]
  %v1352 = vld [vmem:[%s1339 + $0x30] sm:$0xf]
  %v1353 = vld [vmem:[%s1339 + $0x34] sm:$0xf]
  %v1354 = vld [vmem:[%s1339 + $0x38] sm:$0xf]
  %v1355 = vld [vmem:[%s1339 + $0x3c] sm:$0xf]
  %v1372 = vunpack.c.l.b16 %v1340
  %v1373 = vunpack.c.l.b16 %v1341
  %v1374 = vunpack.c.l.b16 %v1342
  %v1375 = vunpack.c.l.b16 %v1343
  %v1376 = vunpack.c.l.b16 %v1344
  %v1377 = vunpack.c.l.b16 %v1345
  %v1378 = vunpack.c.l.b16 %v1346
  %v1379 = vunpack.c.l.b16 %v1347
  %v1380 = vunpack.c.l.b16 %v1348
  %v1381 = vunpack.c.l.b16 %v1349
  %v1382 = vunpack.c.l.b16 %v1350
  %v1383 = vunpack.c.l.b16 %v1351
  %v1384 = vunpack.c.l.b16 %v1352
  %v1385 = vunpack.c.l.b16 %v1353
  %v1386 = vunpack.c.l.b16 %v1354
  %v1387 = vunpack.c.l.b16 %v1355
  %v1388 = vpack.c.b16 %v1373, %v1372
  %v1389 = vpack.c.b16 %v1375, %v1374
  %v1390 = vpack.c.b16 %v1377, %v1376
  %v1391 = vpack.c.b16 %v1379, %v1378
  %v1392 = vpack.c.b16 %v1381, %v1380
  %v1393 = vpack.c.b16 %v1383, %v1382
  %v1394 = vpack.c.b16 %v1385, %v1384
  %v1395 = vpack.c.b16 %v1387, %v1386
  %1404 = vmatprep.subr.bf16.mxu0 0
  %1405 = vmatpush1.bf16.msra.mxu0 %v1388
  %1406 = vmatprep.subr.bf16.mxu0 0
  %1407 = vmatpush1.bf16.msra.mxu0 %v1389
  %1408 = vmatprep.subr.bf16.mxu0 0
  %1409 = vmatpush1.bf16.msra.mxu0 %v1390
  %1410 = vmatprep.subr.bf16.mxu0 0
  %1411 = vmatpush1.bf16.msra.mxu0 %v1391
  %1412 = vmatprep.subr.bf16.mxu0 0
  %1413 = vmatpush1.bf16.msra.mxu0 %v1392
  %1414 = vmatprep.subr.bf16.mxu0 0
  %1415 = vmatpush1.bf16.msra.mxu0 %v1393
  %1416 = vmatprep.subr.bf16.mxu0 0
  %1417 = vmatpush1.bf16.msra.mxu0 %v1394
  %1418 = vmatprep.subr.bf16.mxu0 0
  %1419 = vmatpush1.bf16.msra.mxu0 %v1395
  %1420 = vmatprep.subr.bf16.mxu0 0
  %1421 = vmatpush1.bf16.msra.mxu0 0
  %1422 = vmatprep.subr.bf16.mxu0 0
  %1423 = vmatpush1.bf16.msra.mxu0 0
  %1424 = vmatprep.subr.bf16.mxu0 0
  %1425 = vmatpush1.bf16.msra.mxu0 0
  %1426 = vmatprep.subr.bf16.mxu0 0
  %1427 = vmatpush1.bf16.msra.mxu0 0
  %1428 = vmatprep.subr.bf16.mxu0 0
  %1429 = vmatpush1.bf16.msra.mxu0 0
  %1430 = vmatprep.subr.bf16.mxu0 0
  %1431 = vmatpush1.bf16.msra.mxu0 0
  %1432 = vmatprep.subr.bf16.mxu0 0
  %1433 = vmatpush1.bf16.msra.mxu0 0
  %1434 = vmatprep.subr.bf16.mxu0 0
  %1435 = vmatpush1.bf16.msra.mxu0 0
  %1436 = vmatprep.mubr.bf16.mxu0 0
  %1437 = vmatmul.mubr.bf16.gmra.mrb[0].mxu0 %v1338
  %v1438 = vpop.f32.mrb[0].mxu0
  %v1439 = vadd.f32 0.0, %v1438
  %v1440 = vpop.f32.mrb[0].mxu0
  %v1441 = vpop.f32.mrb[0].mxu0
  %v1442 = vpop.f32.mrb[0].mxu0
  %1443 = vdwg.mxu0
  %v1444 = vadd.f32 %v1163, %v1439
  %v1445 = vld [vmem:[%s4] sm:$0x1]
  %v1447 = vlaneseq
  %v1448 = vshrl.u32 %v1447, 7
  %v1449 = vsub.s32 0, %v1448
  %v1450 = vrot.slane %v1445, %v1449
  %v1452 = vadd.f32 %v1444, %v1450
  %1453 = vst [vmem:[%s5] sm:$0x3] %v1452
  // Predicated region
  $region22: #{discriminator_forward.7} parent=0 // pred_check
    _
  $region23: #{discriminator_forward.7} parent=0 // pred_check_branch
    %1455 = sbr.rel (0) target = $region25
  $region24: #{discriminator_forward.7} parent=0 // pred_region
    _
  $region25: #{discriminator_forward.7} parent=0 // pred_fallthru
    _
  // Predicated region
  $region26: #{discriminator_forward.7} parent=0 // pred_check
    _
  $region27: #{discriminator_forward.7} parent=0 // pred_check_branch
    %1457 = sbr.rel (0) target = $region29
  $region28: #{discriminator_forward.7} parent=0 // pred_region
    _
  $region29: #{discriminator_forward.7} parent=0 // pred_fallthru
    _

</llo_original>
